<compile_context>
chip_gen: v7x
topology: tpu7x:2x2x1
jax: 0.10.0
libtpu: 0.0.40
codegen_flags: <defaults>
</compile_context>

<pallas_src>
import numpy as np

import jax
import jax.numpy as jnp
from jax.experimental import pallas as pl
from jax.experimental.pallas import tpu as pltpu


# ----------------------------- static architecture -------------------------
H_IN = W_IN = 32   # input spatial
C_IN = 3           # input channels
H1 = W1 = 16       # after stem (stride 2)
C1 = 8             # stem / block channels
HD = WD = 8        # after downsample (stride 2)
C2 = 16            # downsample channels
N_CLS = 4          # segmentation classes
OUT_HW = 224       # F.interpolate target size


# --------------------- bilinear matrices (module-level constants) ----------
def _interp_matrix(out_size, in_size):
    """Row-stochastic bilinear matrix, PyTorch align_corners=False semantics."""
    scale = in_size / out_size
    dst = np.arange(out_size, dtype=np.float32)
    src = np.maximum((dst + 0.5) * scale - 0.5, 0.0)
    x0 = np.minimum(np.floor(src).astype(np.int32), in_size - 1)
    x1 = np.minimum(x0 + 1, in_size - 1)
    frac = (src - x0.astype(np.float32)).astype(np.float32)
    m = np.zeros((out_size, in_size), np.float32)
    m[np.arange(out_size), x0] += 1.0 - frac
    m[np.arange(out_size), x1] += frac
    return m


_MY = jnp.asarray(_interp_matrix(OUT_HW, HD))        # (224, 8)
_MXT = jnp.asarray(_interp_matrix(OUT_HW, WD).T)     # (8, 224)


# -------------- structured conv operands (tiny XLA-side constructions) -----
def _shift_rows(h_out, h_in, stride):
    """A_di[yo, y'] = [y' == stride*yo + di], di in (-1, 0, +1). Shape (3, h_out, h_in)."""
    yo = jnp.arange(h_out)[:, None]
    y = jnp.arange(h_in)[None, :]
    return jnp.stack(
        [(y == stride * yo + di).astype(jnp.float32) for di in (-1, 0, 1)])


def _weight_cols(w_hwio, w_in, w_out, stride):
    """B_ki[x'*Cin+ci, xo*Cout+co] = sum_dj [x' == stride*xo + dj] * w[ki, dj+1, ci, co].

    Shape (3, w_in*Cin, w_out*Cout). Out-of-range source columns simply never
    match, which implements the zero padding.
    """
    cin, cout = w_hwio.shape[2], w_hwio.shape[3]
    xs = jnp.arange(w_in)[:, None]
    xo = jnp.arange(w_out)[None, :]
    mats = []
    for ki in range(3):
        m = jnp.zeros((w_in, cin, w_out, cout), jnp.float32)
        for kj, dj in enumerate((-1, 0, 1)):
            sel = (xs == stride * xo + dj).astype(jnp.float32)          # (w_in, w_out)
            m = m + sel[:, None, :, None] * w_hwio[ki, kj][None, :, None, :]
        mats.append(m.reshape(w_in * cin, w_out * cout))
    return jnp.stack(mats)


def _head_mats(w_head, w_sp):
    """Per-class 1x1-conv matrices: H_c[x'*Cin+ci, x] = [x'==x] * w_head[ci, c]."""
    cin, ncls = w_head.shape
    eye = jnp.eye(w_sp, dtype=jnp.float32)                               # (x', x)
    m = eye[:, None, None, :] * w_head[None, :, :, None]                 # (x', ci, c, x)
    return jnp.transpose(m, (2, 0, 1, 3)).reshape(ncls, w_sp * cin, w_sp)


def _bias_row(b, w_out):
    """Bias laid out to match the (H, W*C) activation layout: [0, x*C + c] = b[c]."""
    return jnp.tile(b, (w_out,)).reshape(1, -1)


def _full_spec(arr):
    nd = arr.ndim
    return pl.BlockSpec(arr.shape, lambda *_: (0,) * nd)


# ------------------------------ the fused kernel ---------------------------
def _fused_forward_kernel(x0_ref,
                          a_stem_ref, b_stem_ref, bias_stem_ref,
                          a_s1_ref, b_b1a_ref, bias_b1a_ref,
                          b_b1b_ref, bias_b1b_ref,
                          a_down_ref, b_down_ref, bias_down_ref,
                          head_ref, bias_head_ref,
                          mxt_ref, my_ref,
                          o_ref):
    f32 = jnp.float32

    def conv3(x, a_ref, b_ref, bias_ref):
        # 3x3 conv (pad=1, stride folded into A/B) as three sandwich GEMMs.
        acc = None
        for k in range(3):
            t = jnp.dot(a_ref[k], x, preferred_element_type=f32)
            t = jnp.dot(t, b_ref[k], preferred_element_type=f32)
            acc = t if acc is None else acc + t
        return acc + bias_ref[...]

    x0 = x0_ref[...]                                                   # (32, 96)

    # backbone (self.features) — all intermediates live in vregs/VMEM
    h = jnp.maximum(conv3(x0, a_stem_ref, b_stem_ref, bias_stem_ref), 0.0)   # (16,128)
    idn = h
    h = jnp.maximum(conv3(h, a_s1_ref, b_b1a_ref, bias_b1a_ref), 0.0)        # (16,128)
    h = jnp.maximum(conv3(h, a_s1_ref, b_b1b_ref, bias_b1b_ref) + idn, 0.0)  # (16,128)
    h = jnp.maximum(conv3(h, a_down_ref, b_down_ref, bias_down_ref), 0.0)    # (8,128)

    # segmentation head (1x1 conv) + fused bilinear resize, per class
    mxt = mxt_ref[...]                                                 # (8, 224)
    my = my_ref[...]                                                   # (224, 8)
    for c in range(N_CLS):
        feat_c = jnp.dot(h, head_ref[c], preferred_element_type=f32)   # (8, 8)
        feat_c = feat_c + bias_head_ref[c]
        u = jnp.dot(feat_c, mxt, preferred_element_type=f32)           # (8, 224) lane-dense
        o_ref[c, :, :] = jnp.dot(my, u, preferred_element_type=f32)    # (224, 224)


# ------------------------------ forward wrapper ----------------------------
def resnet_seghead_forward(x_nchw, p):
    x = x_nchw.astype(jnp.float32)
    B = x.shape[0]
    # NCHW -> per-batch (H, W*Cin) image matrix (tiny XLA relayout of ~24 KB).
    x0 = jnp.transpose(x, (0, 2, 3, 1)).reshape(B, H_IN, W_IN * C_IN)

    ops = dict(
        a_stem=_shift_rows(H1, H_IN, 2),
        b_stem=_weight_cols(p["w_stem"], W_IN, W1, 2),
        bias_stem=_bias_row(p["b_stem"], W1),
        a_s1=_shift_rows(H1, H1, 1),
        b_b1a=_weight_cols(p["w_b1a"], W1, W1, 1),
        bias_b1a=_bias_row(p["b_b1a"], W1),
        b_b1b=_weight_cols(p["w_b1b"], W1, W1, 1),
        bias_b1b=_bias_row(p["b_b1b"], W1),
        a_down=_shift_rows(HD, H1, 2),
        b_down=_weight_cols(p["w_down"], W1, WD, 2),
        bias_down=_bias_row(p["b_down"], WD),
        head=_head_mats(p["w_head"], WD),
        bias_head=jnp.tile(p["b_head"].reshape(N_CLS, 1, 1), (1, 1, WD)),
        mxt=_MXT,
        my=_MY,
    )
    op_list = list(ops.values())

    in_specs = [pl.BlockSpec((None, H_IN, W_IN * C_IN), lambda b: (b, 0, 0))]
    in_specs += [_full_spec(a) for a in op_list]

    return pl.pallas_call(
        _fused_forward_kernel,
        out_shape=jax.ShapeDtypeStruct((B, N_CLS, OUT_HW, OUT_HW), jnp.float32),
        grid=(B,),
        in_specs=in_specs,
        out_specs=pl.BlockSpec((None, N_CLS, OUT_HW, OUT_HW),
                               lambda b: (b, 0, 0, 0)),
        compiler_params=pltpu.CompilerParams(
            dimension_semantics=("parallel",)),
    )(x0, *op_list)


# ------------------------------ params & main ------------------------------
def init_params(key):
    ks = jax.random.split(key, 10)
    n = lambda k, shape, s=0.1: s * jax.random.normal(k, shape, jnp.float32)
    return dict(
        w_stem=n(ks[0], (3, 3, C_IN, C1)),  b_stem=n(ks[1], (C1,)),
        w_b1a=n(ks[2], (3, 3, C1, C1)),     b_b1a=n(ks[3], (C1,)),
        w_b1b=n(ks[4], (3, 3, C1, C1)),     b_b1b=n(ks[5], (C1,)),
        w_down=n(ks[6], (3, 3, C1, C2)),    b_down=n(ks[7], (C2,)),
        w_head=n(ks[8], (C2, N_CLS)),       b_head=n(ks[9], (N_CLS,)),
    )


if __name__ == "__main__":
    key = jax.random.PRNGKey(0)
    k_param, k_x = jax.random.split(key)
    params = init_params(k_param)
    x = jax.random.normal(k_x, (2, C_IN, H_IN, W_IN), jnp.float32)   # NCHW

    fwd = jax.jit(resnet_seghead_forward)
    out = jax.block_until_ready(fwd(x, params))
    assert out.shape == (2, N_CLS, OUT_HW, OUT_HW), out.shape
    assert bool(jnp.isfinite(out).all())
    print("KERNEL_OK")
</pallas_src>

<mosaic_0001>
module attributes {stable_mosaic.version = 11 : i64} {
  func.func @_fused_forward_kernel(%arg0: i32, %arg1: memref<1x32x96xf32, #tpu.memory_space<vmem>>, %arg2: memref<3x16x32xf32, #tpu.memory_space<vmem>>, %arg3: memref<3x96x128xf32, #tpu.memory_space<vmem>>, %arg4: memref<1x128xf32, #tpu.memory_space<vmem>>, %arg5: memref<3x16x16xf32, #tpu.memory_space<vmem>>, %arg6: memref<3x128x128xf32, #tpu.memory_space<vmem>>, %arg7: memref<1x128xf32, #tpu.memory_space<vmem>>, %arg8: memref<3x128x128xf32, #tpu.memory_space<vmem>>, %arg9: memref<1x128xf32, #tpu.memory_space<vmem>>, %arg10: memref<3x8x16xf32, #tpu.memory_space<vmem>>, %arg11: memref<3x128x128xf32, #tpu.memory_space<vmem>>, %arg12: memref<1x128xf32, #tpu.memory_space<vmem>>, %arg13: memref<4x128x8xf32, #tpu.memory_space<vmem>>, %arg14: memref<4x1x8xf32, #tpu.memory_space<vmem>>, %arg15: memref<8x224xf32, #tpu.memory_space<vmem>>, %arg16: memref<224x8xf32, #tpu.memory_space<vmem>>, %arg17: memref<1x4x224x224xf32, #tpu.memory_space<vmem>>) attributes {dimension_semantics = [#tpu.dimension_semantics<parallel>], iteration_bounds = array<i64: 2>, scalar_prefetch = 0 : i64, scratch_operands = 0 : i64, tpu.core_type = #tpu.core_type<tc>, window_params = [{transform_indices = @transform_0, window_bounds = array<i64: 1, 32, 96>}, {pipeline_mode = #tpu.pipeline_mode<synchronous>, transform_indices = @transform_1, window_bounds = array<i64: 3, 16, 32>}, {pipeline_mode = #tpu.pipeline_mode<synchronous>, transform_indices = @transform_2, window_bounds = array<i64: 3, 96, 128>}, {pipeline_mode = #tpu.pipeline_mode<synchronous>, transform_indices = @transform_3, window_bounds = array<i64: 1, 128>}, {pipeline_mode = #tpu.pipeline_mode<synchronous>, transform_indices = @transform_4, window_bounds = array<i64: 3, 16, 16>}, {pipeline_mode = #tpu.pipeline_mode<synchronous>, transform_indices = @transform_5, window_bounds = array<i64: 3, 128, 128>}, {pipeline_mode = #tpu.pipeline_mode<synchronous>, transform_indices = @transform_6, window_bounds = array<i64: 1, 128>}, {pipeline_mode = #tpu.pipeline_mode<synchronous>, transform_indices = @transform_7, window_bounds = array<i64: 3, 128, 128>}, {pipeline_mode = #tpu.pipeline_mode<synchronous>, transform_indices = @transform_8, window_bounds = array<i64: 1, 128>}, {pipeline_mode = #tpu.pipeline_mode<synchronous>, transform_indices = @transform_9, window_bounds = array<i64: 3, 8, 16>}, {pipeline_mode = #tpu.pipeline_mode<synchronous>, transform_indices = @transform_10, window_bounds = array<i64: 3, 128, 128>}, {pipeline_mode = #tpu.pipeline_mode<synchronous>, transform_indices = @transform_11, window_bounds = array<i64: 1, 128>}, {pipeline_mode = #tpu.pipeline_mode<synchronous>, transform_indices = @transform_12, window_bounds = array<i64: 4, 128, 8>}, {pipeline_mode = #tpu.pipeline_mode<synchronous>, transform_indices = @transform_13, window_bounds = array<i64: 4, 1, 8>}, {pipeline_mode = #tpu.pipeline_mode<synchronous>, transform_indices = @transform_14, window_bounds = array<i64: 8, 224>}, {pipeline_mode = #tpu.pipeline_mode<synchronous>, transform_indices = @transform_15, window_bounds = array<i64: 224, 8>}, {transform_indices = @transform_16, window_bounds = array<i64: 1, 4, 224, 224>}]} {
    %c0 = arith.constant 0 : index
    %c0_0 = arith.constant 0 : index
    %c0_1 = arith.constant 0 : index
    %0 = vector.load %arg1[%c0, %c0_0, %c0_1] : memref<1x32x96xf32, #tpu.memory_space<vmem>>, vector<1x32x96xf32>
    %1 = vector.shape_cast %0 : vector<1x32x96xf32> to vector<32x96xf32>
    %c0_2 = arith.constant 0 : index
    %c0_3 = arith.constant 0 : index
    %c0_4 = arith.constant 0 : index
    %2 = vector.load %arg2[%c0_2, %c0_3, %c0_4] : memref<3x16x32xf32, #tpu.memory_space<vmem>>, vector<1x16x32xf32>
    %3 = vector.shape_cast %2 : vector<1x16x32xf32> to vector<16x32xf32>
    %cst = arith.constant dense<0.000000e+00> : vector<16x96xf32>
    %4 = tpu.matmul %3, %1, %cst {dimension_numbers = #tpu.dot_dimension_numbers<[1], [0], [0], [1], [0, 0, 1, 1], [], []>} : vector<16x32xf32>, vector<32x96xf32>, vector<16x96xf32> -> vector<16x96xf32>
    %c0_5 = arith.constant 0 : index
    %c0_6 = arith.constant 0 : index
    %c0_7 = arith.constant 0 : index
    %5 = vector.load %arg3[%c0_5, %c0_6, %c0_7] : memref<3x96x128xf32, #tpu.memory_space<vmem>>, vector<1x96x128xf32>
    %6 = vector.shape_cast %5 : vector<1x96x128xf32> to vector<96x128xf32>
    %cst_8 = arith.constant dense<0.000000e+00> : vector<16x128xf32>
    %7 = tpu.matmul %4, %6, %cst_8 {dimension_numbers = #tpu.dot_dimension_numbers<[1], [0], [0], [1], [0, 0, 1, 1], [], []>} : vector<16x96xf32>, vector<96x128xf32>, vector<16x128xf32> -> vector<16x128xf32>
    %c1 = arith.constant 1 : index
    %c0_9 = arith.constant 0 : index
    %c0_10 = arith.constant 0 : index
    %8 = vector.load %arg2[%c1, %c0_9, %c0_10] : memref<3x16x32xf32, #tpu.memory_space<vmem>>, vector<1x16x32xf32>
    %9 = vector.shape_cast %8 : vector<1x16x32xf32> to vector<16x32xf32>
    %cst_11 = arith.constant dense<0.000000e+00> : vector<16x96xf32>
    %10 = tpu.matmul %9, %1, %cst_11 {dimension_numbers = #tpu.dot_dimension_numbers<[1], [0], [0], [1], [0, 0, 1, 1], [], []>} : vector<16x32xf32>, vector<32x96xf32>, vector<16x96xf32> -> vector<16x96xf32>
    %c1_12 = arith.constant 1 : index
    %c0_13 = arith.constant 0 : index
    %c0_14 = arith.constant 0 : index
    %11 = vector.load %arg3[%c1_12, %c0_13, %c0_14] : memref<3x96x128xf32, #tpu.memory_space<vmem>>, vector<1x96x128xf32>
    %12 = vector.shape_cast %11 : vector<1x96x128xf32> to vector<96x128xf32>
    %cst_15 = arith.constant dense<0.000000e+00> : vector<16x128xf32>
    %13 = tpu.matmul %10, %12, %cst_15 {dimension_numbers = #tpu.dot_dimension_numbers<[1], [0], [0], [1], [0, 0, 1, 1], [], []>} : vector<16x96xf32>, vector<96x128xf32>, vector<16x128xf32> -> vector<16x128xf32>
    %14 = arith.addf %7, %13 : vector<16x128xf32>
    %c2 = arith.constant 2 : index
    %c0_16 = arith.constant 0 : index
    %c0_17 = arith.constant 0 : index
    %15 = vector.load %arg2[%c2, %c0_16, %c0_17] : memref<3x16x32xf32, #tpu.memory_space<vmem>>, vector<1x16x32xf32>
    %16 = vector.shape_cast %15 : vector<1x16x32xf32> to vector<16x32xf32>
    %cst_18 = arith.constant dense<0.000000e+00> : vector<16x96xf32>
    %17 = tpu.matmul %16, %1, %cst_18 {dimension_numbers = #tpu.dot_dimension_numbers<[1], [0], [0], [1], [0, 0, 1, 1], [], []>} : vector<16x32xf32>, vector<32x96xf32>, vector<16x96xf32> -> vector<16x96xf32>
    %c2_19 = arith.constant 2 : index
    %c0_20 = arith.constant 0 : index
    %c0_21 = arith.constant 0 : index
    %18 = vector.load %arg3[%c2_19, %c0_20, %c0_21] : memref<3x96x128xf32, #tpu.memory_space<vmem>>, vector<1x96x128xf32>
    %19 = vector.shape_cast %18 : vector<1x96x128xf32> to vector<96x128xf32>
    %cst_22 = arith.constant dense<0.000000e+00> : vector<16x128xf32>
    %20 = tpu.matmul %17, %19, %cst_22 {dimension_numbers = #tpu.dot_dimension_numbers<[1], [0], [0], [1], [0, 0, 1, 1], [], []>} : vector<16x96xf32>, vector<96x128xf32>, vector<16x128xf32> -> vector<16x128xf32>
    %21 = arith.addf %14, %20 : vector<16x128xf32>
    %c0_23 = arith.constant 0 : index
    %c0_24 = arith.constant 0 : index
    %22 = vector.load %arg4[%c0_23, %c0_24] : memref<1x128xf32, #tpu.memory_space<vmem>>, vector<1x128xf32>
    %23 = vector.broadcast %22 : vector<1x128xf32> to vector<16x128xf32>
    %24 = arith.addf %21, %23 : vector<16x128xf32>
    %cst_25 = arith.constant 0.000000e+00 : f32
    %25 = vector.broadcast %cst_25 : f32 to vector<16x128xf32>
    %26 = arith.maximumf %24, %25 : vector<16x128xf32>
    %c0_26 = arith.constant 0 : index
    %c0_27 = arith.constant 0 : index
    %c0_28 = arith.constant 0 : index
    %27 = vector.load %arg5[%c0_26, %c0_27, %c0_28] : memref<3x16x16xf32, #tpu.memory_space<vmem>>, vector<1x16x16xf32>
    %28 = vector.shape_cast %27 : vector<1x16x16xf32> to vector<16x16xf32>
    %cst_29 = arith.constant dense<0.000000e+00> : vector<16x128xf32>
    %29 = tpu.matmul %28, %26, %cst_29 {dimension_numbers = #tpu.dot_dimension_numbers<[1], [0], [0], [1], [0, 0, 1, 1], [], []>} : vector<16x16xf32>, vector<16x128xf32>, vector<16x128xf32> -> vector<16x128xf32>
    %c0_30 = arith.constant 0 : index
    %c0_31 = arith.constant 0 : index
    %c0_32 = arith.constant 0 : index
    %30 = vector.load %arg6[%c0_30, %c0_31, %c0_32] : memref<3x128x128xf32, #tpu.memory_space<vmem>>, vector<1x128x128xf32>
    %31 = vector.shape_cast %30 : vector<1x128x128xf32> to vector<128x128xf32>
    %cst_33 = arith.constant dense<0.000000e+00> : vector<16x128xf32>
    %32 = tpu.matmul %29, %31, %cst_33 {dimension_numbers = #tpu.dot_dimension_numbers<[1], [0], [0], [1], [0, 0, 1, 1], [], []>} : vector<16x128xf32>, vector<128x128xf32>, vector<16x128xf32> -> vector<16x128xf32>
    %c1_34 = arith.constant 1 : index
    %c0_35 = arith.constant 0 : index
    %c0_36 = arith.constant 0 : index
    %33 = vector.load %arg5[%c1_34, %c0_35, %c0_36] : memref<3x16x16xf32, #tpu.memory_space<vmem>>, vector<1x16x16xf32>
    %34 = vector.shape_cast %33 : vector<1x16x16xf32> to vector<16x16xf32>
    %cst_37 = arith.constant dense<0.000000e+00> : vector<16x128xf32>
    %35 = tpu.matmul %34, %26, %cst_37 {dimension_numbers = #tpu.dot_dimension_numbers<[1], [0], [0], [1], [0, 0, 1, 1], [], []>} : vector<16x16xf32>, vector<16x128xf32>, vector<16x128xf32> -> vector<16x128xf32>
    %c1_38 = arith.constant 1 : index
    %c0_39 = arith.constant 0 : index
    %c0_40 = arith.constant 0 : index
    %36 = vector.load %arg6[%c1_38, %c0_39, %c0_40] : memref<3x128x128xf32, #tpu.memory_space<vmem>>, vector<1x128x128xf32>
    %37 = vector.shape_cast %36 : vector<1x128x128xf32> to vector<128x128xf32>
    %cst_41 = arith.constant dense<0.000000e+00> : vector<16x128xf32>
    %38 = tpu.matmul %35, %37, %cst_41 {dimension_numbers = #tpu.dot_dimension_numbers<[1], [0], [0], [1], [0, 0, 1, 1], [], []>} : vector<16x128xf32>, vector<128x128xf32>, vector<16x128xf32> -> vector<16x128xf32>
    %39 = arith.addf %32, %38 : vector<16x128xf32>
    %c2_42 = arith.constant 2 : index
    %c0_43 = arith.constant 0 : index
    %c0_44 = arith.constant 0 : index
    %40 = vector.load %arg5[%c2_42, %c0_43, %c0_44] : memref<3x16x16xf32, #tpu.memory_space<vmem>>, vector<1x16x16xf32>
    %41 = vector.shape_cast %40 : vector<1x16x16xf32> to vector<16x16xf32>
    %cst_45 = arith.constant dense<0.000000e+00> : vector<16x128xf32>
    %42 = tpu.matmul %41, %26, %cst_45 {dimension_numbers = #tpu.dot_dimension_numbers<[1], [0], [0], [1], [0, 0, 1, 1], [], []>} : vector<16x16xf32>, vector<16x128xf32>, vector<16x128xf32> -> vector<16x128xf32>
    %c2_46 = arith.constant 2 : index
    %c0_47 = arith.constant 0 : index
    %c0_48 = arith.constant 0 : index
    %43 = vector.load %arg6[%c2_46, %c0_47, %c0_48] : memref<3x128x128xf32, #tpu.memory_space<vmem>>, vector<1x128x128xf32>
    %44 = vector.shape_cast %43 : vector<1x128x128xf32> to vector<128x128xf32>
    %cst_49 = arith.constant dense<0.000000e+00> : vector<16x128xf32>
    %45 = tpu.matmul %42, %44, %cst_49 {dimension_numbers = #tpu.dot_dimension_numbers<[1], [0], [0], [1], [0, 0, 1, 1], [], []>} : vector<16x128xf32>, vector<128x128xf32>, vector<16x128xf32> -> vector<16x128xf32>
    %46 = arith.addf %39, %45 : vector<16x128xf32>
    %c0_50 = arith.constant 0 : index
    %c0_51 = arith.constant 0 : index
    %47 = vector.load %arg7[%c0_50, %c0_51] : memref<1x128xf32, #tpu.memory_space<vmem>>, vector<1x128xf32>
    %48 = vector.broadcast %47 : vector<1x128xf32> to vector<16x128xf32>
    %49 = arith.addf %46, %48 : vector<16x128xf32>
    %cst_52 = arith.constant 0.000000e+00 : f32
    %50 = vector.broadcast %cst_52 : f32 to vector<16x128xf32>
    %51 = arith.maximumf %49, %50 : vector<16x128xf32>
    %c0_53 = arith.constant 0 : index
    %c0_54 = arith.constant 0 : index
    %c0_55 = arith.constant 0 : index
    %52 = vector.load %arg5[%c0_53, %c0_54, %c0_55] : memref<3x16x16xf32, #tpu.memory_space<vmem>>, vector<1x16x16xf32>
    %53 = vector.shape_cast %52 : vector<1x16x16xf32> to vector<16x16xf32>
    %cst_56 = arith.constant dense<0.000000e+00> : vector<16x128xf32>
    %54 = tpu.matmul %53, %51, %cst_56 {dimension_numbers = #tpu.dot_dimension_numbers<[1], [0], [0], [1], [0, 0, 1, 1], [], []>} : vector<16x16xf32>, vector<16x128xf32>, vector<16x128xf32> -> vector<16x128xf32>
    %c0_57 = arith.constant 0 : index
    %c0_58 = arith.constant 0 : index
    %c0_59 = arith.constant 0 : index
    %55 = vector.load %arg8[%c0_57, %c0_58, %c0_59] : memref<3x128x128xf32, #tpu.memory_space<vmem>>, vector<1x128x128xf32>
    %56 = vector.shape_cast %55 : vector<1x128x128xf32> to vector<128x128xf32>
    %cst_60 = arith.constant dense<0.000000e+00> : vector<16x128xf32>
    %57 = tpu.matmul %54, %56, %cst_60 {dimension_numbers = #tpu.dot_dimension_numbers<[1], [0], [0], [1], [0, 0, 1, 1], [], []>} : vector<16x128xf32>, vector<128x128xf32>, vector<16x128xf32> -> vector<16x128xf32>
    %c1_61 = arith.constant 1 : index
    %c0_62 = arith.constant 0 : index
    %c0_63 = arith.constant 0 : index
    %58 = vector.load %arg5[%c1_61, %c0_62, %c0_63] : memref<3x16x16xf32, #tpu.memory_space<vmem>>, vector<1x16x16xf32>
    %59 = vector.shape_cast %58 : vector<1x16x16xf32> to vector<16x16xf32>
    %cst_64 = arith.constant dense<0.000000e+00> : vector<16x128xf32>
    %60 = tpu.matmul %59, %51, %cst_64 {dimension_numbers = #tpu.dot_dimension_numbers<[1], [0], [0], [1], [0, 0, 1, 1], [], []>} : vector<16x16xf32>, vector<16x128xf32>, vector<16x128xf32> -> vector<16x128xf32>
    %c1_65 = arith.constant 1 : index
    %c0_66 = arith.constant 0 : index
    %c0_67 = arith.constant 0 : index
    %61 = vector.load %arg8[%c1_65, %c0_66, %c0_67] : memref<3x128x128xf32, #tpu.memory_space<vmem>>, vector<1x128x128xf32>
    %62 = vector.shape_cast %61 : vector<1x128x128xf32> to vector<128x128xf32>
    %cst_68 = arith.constant dense<0.000000e+00> : vector<16x128xf32>
    %63 = tpu.matmul %60, %62, %cst_68 {dimension_numbers = #tpu.dot_dimension_numbers<[1], [0], [0], [1], [0, 0, 1, 1], [], []>} : vector<16x128xf32>, vector<128x128xf32>, vector<16x128xf32> -> vector<16x128xf32>
    %64 = arith.addf %57, %63 : vector<16x128xf32>
    %c2_69 = arith.constant 2 : index
    %c0_70 = arith.constant 0 : index
    %c0_71 = arith.constant 0 : index
    %65 = vector.load %arg5[%c2_69, %c0_70, %c0_71] : memref<3x16x16xf32, #tpu.memory_space<vmem>>, vector<1x16x16xf32>
    %66 = vector.shape_cast %65 : vector<1x16x16xf32> to vector<16x16xf32>
    %cst_72 = arith.constant dense<0.000000e+00> : vector<16x128xf32>
    %67 = tpu.matmul %66, %51, %cst_72 {dimension_numbers = #tpu.dot_dimension_numbers<[1], [0], [0], [1], [0, 0, 1, 1], [], []>} : vector<16x16xf32>, vector<16x128xf32>, vector<16x128xf32> -> vector<16x128xf32>
    %c2_73 = arith.constant 2 : index
    %c0_74 = arith.constant 0 : index
    %c0_75 = arith.constant 0 : index
    %68 = vector.load %arg8[%c2_73, %c0_74, %c0_75] : memref<3x128x128xf32, #tpu.memory_space<vmem>>, vector<1x128x128xf32>
    %69 = vector.shape_cast %68 : vector<1x128x128xf32> to vector<128x128xf32>
    %cst_76 = arith.constant dense<0.000000e+00> : vector<16x128xf32>
    %70 = tpu.matmul %67, %69, %cst_76 {dimension_numbers = #tpu.dot_dimension_numbers<[1], [0], [0], [1], [0, 0, 1, 1], [], []>} : vector<16x128xf32>, vector<128x128xf32>, vector<16x128xf32> -> vector<16x128xf32>
    %71 = arith.addf %64, %70 : vector<16x128xf32>
    %c0_77 = arith.constant 0 : index
    %c0_78 = arith.constant 0 : index
    %72 = vector.load %arg9[%c0_77, %c0_78] : memref<1x128xf32, #tpu.memory_space<vmem>>, vector<1x128xf32>
    %73 = vector.broadcast %72 : vector<1x128xf32> to vector<16x128xf32>
    %74 = arith.addf %71, %73 : vector<16x128xf32>
    %75 = arith.addf %74, %26 : vector<16x128xf32>
    %cst_79 = arith.constant 0.000000e+00 : f32
    %76 = vector.broadcast %cst_79 : f32 to vector<16x128xf32>
    %77 = arith.maximumf %75, %76 : vector<16x128xf32>
    %c0_80 = arith.constant 0 : index
    %c0_81 = arith.constant 0 : index
    %c0_82 = arith.constant 0 : index
    %78 = vector.load %arg10[%c0_80, %c0_81, %c0_82] : memref<3x8x16xf32, #tpu.memory_space<vmem>>, vector<1x8x16xf32>
    %79 = vector.shape_cast %78 : vector<1x8x16xf32> to vector<8x16xf32>
    %cst_83 = arith.constant dense<0.000000e+00> : vector<8x128xf32>
    %80 = tpu.matmul %79, %77, %cst_83 {dimension_numbers = #tpu.dot_dimension_numbers<[1], [0], [0], [1], [0, 0, 1, 1], [], []>} : vector<8x16xf32>, vector<16x128xf32>, vector<8x128xf32> -> vector<8x128xf32>
    %c0_84 = arith.constant 0 : index
    %c0_85 = arith.constant 0 : index
    %c0_86 = arith.constant 0 : index
    %81 = vector.load %arg11[%c0_84, %c0_85, %c0_86] : memref<3x128x128xf32, #tpu.memory_space<vmem>>, vector<1x128x128xf32>
    %82 = vector.shape_cast %81 : vector<1x128x128xf32> to vector<128x128xf32>
    %cst_87 = arith.constant dense<0.000000e+00> : vector<8x128xf32>
    %83 = tpu.matmul %80, %82, %cst_87 {dimension_numbers = #tpu.dot_dimension_numbers<[1], [0], [0], [1], [0, 0, 1, 1], [], []>} : vector<8x128xf32>, vector<128x128xf32>, vector<8x128xf32> -> vector<8x128xf32>
    %c1_88 = arith.constant 1 : index
    %c0_89 = arith.constant 0 : index
    %c0_90 = arith.constant 0 : index
    %84 = vector.load %arg10[%c1_88, %c0_89, %c0_90] : memref<3x8x16xf32, #tpu.memory_space<vmem>>, vector<1x8x16xf32>
    %85 = vector.shape_cast %84 : vector<1x8x16xf32> to vector<8x16xf32>
    %cst_91 = arith.constant dense<0.000000e+00> : vector<8x128xf32>
    %86 = tpu.matmul %85, %77, %cst_91 {dimension_numbers = #tpu.dot_dimension_numbers<[1], [0], [0], [1], [0, 0, 1, 1], [], []>} : vector<8x16xf32>, vector<16x128xf32>, vector<8x128xf32> -> vector<8x128xf32>
    %c1_92 = arith.constant 1 : index
    %c0_93 = arith.constant 0 : index
    %c0_94 = arith.constant 0 : index
    %87 = vector.load %arg11[%c1_92, %c0_93, %c0_94] : memref<3x128x128xf32, #tpu.memory_space<vmem>>, vector<1x128x128xf32>
    %88 = vector.shape_cast %87 : vector<1x128x128xf32> to vector<128x128xf32>
    %cst_95 = arith.constant dense<0.000000e+00> : vector<8x128xf32>
    %89 = tpu.matmul %86, %88, %cst_95 {dimension_numbers = #tpu.dot_dimension_numbers<[1], [0], [0], [1], [0, 0, 1, 1], [], []>} : vector<8x128xf32>, vector<128x128xf32>, vector<8x128xf32> -> vector<8x128xf32>
    %90 = arith.addf %83, %89 : vector<8x128xf32>
    %c2_96 = arith.constant 2 : index
    %c0_97 = arith.constant 0 : index
    %c0_98 = arith.constant 0 : index
    %91 = vector.load %arg10[%c2_96, %c0_97, %c0_98] : memref<3x8x16xf32, #tpu.memory_space<vmem>>, vector<1x8x16xf32>
    %92 = vector.shape_cast %91 : vector<1x8x16xf32> to vector<8x16xf32>
    %cst_99 = arith.constant dense<0.000000e+00> : vector<8x128xf32>
    %93 = tpu.matmul %92, %77, %cst_99 {dimension_numbers = #tpu.dot_dimension_numbers<[1], [0], [0], [1], [0, 0, 1, 1], [], []>} : vector<8x16xf32>, vector<16x128xf32>, vector<8x128xf32> -> vector<8x128xf32>
    %c2_100 = arith.constant 2 : index
    %c0_101 = arith.constant 0 : index
    %c0_102 = arith.constant 0 : index
    %94 = vector.load %arg11[%c2_100, %c0_101, %c0_102] : memref<3x128x128xf32, #tpu.memory_space<vmem>>, vector<1x128x128xf32>
    %95 = vector.shape_cast %94 : vector<1x128x128xf32> to vector<128x128xf32>
    %cst_103 = arith.constant dense<0.000000e+00> : vector<8x128xf32>
    %96 = tpu.matmul %93, %95, %cst_103 {dimension_numbers = #tpu.dot_dimension_numbers<[1], [0], [0], [1], [0, 0, 1, 1], [], []>} : vector<8x128xf32>, vector<128x128xf32>, vector<8x128xf32> -> vector<8x128xf32>
    %97 = arith.addf %90, %96 : vector<8x128xf32>
    %c0_104 = arith.constant 0 : index
    %c0_105 = arith.constant 0 : index
    %98 = vector.load %arg12[%c0_104, %c0_105] : memref<1x128xf32, #tpu.memory_space<vmem>>, vector<1x128xf32>
    %99 = vector.broadcast %98 : vector<1x128xf32> to vector<8x128xf32>
    %100 = arith.addf %97, %99 : vector<8x128xf32>
    %cst_106 = arith.constant 0.000000e+00 : f32
    %101 = vector.broadcast %cst_106 : f32 to vector<8x128xf32>
    %102 = arith.maximumf %100, %101 : vector<8x128xf32>
    %c0_107 = arith.constant 0 : index
    %c0_108 = arith.constant 0 : index
    %103 = vector.load %arg15[%c0_107, %c0_108] : memref<8x224xf32, #tpu.memory_space<vmem>>, vector<8x224xf32>
    %c0_109 = arith.constant 0 : index
    %c0_110 = arith.constant 0 : index
    %104 = vector.load %arg16[%c0_109, %c0_110] : memref<224x8xf32, #tpu.memory_space<vmem>>, vector<224x8xf32>
    %c0_111 = arith.constant 0 : index
    %c0_112 = arith.constant 0 : index
    %c0_113 = arith.constant 0 : index
    %105 = vector.load %arg13[%c0_111, %c0_112, %c0_113] : memref<4x128x8xf32, #tpu.memory_space<vmem>>, vector<1x128x8xf32>
    %106 = vector.shape_cast %105 : vector<1x128x8xf32> to vector<128x8xf32>
    %cst_114 = arith.constant dense<0.000000e+00> : vector<8x8xf32>
    %107 = tpu.matmul %102, %106, %cst_114 {dimension_numbers = #tpu.dot_dimension_numbers<[1], [0], [0], [1], [0, 0, 1, 1], [], []>} : vector<8x128xf32>, vector<128x8xf32>, vector<8x8xf32> -> vector<8x8xf32>
    %c0_115 = arith.constant 0 : index
    %c0_116 = arith.constant 0 : index
    %c0_117 = arith.constant 0 : index
    %108 = vector.load %arg14[%c0_115, %c0_116, %c0_117] : memref<4x1x8xf32, #tpu.memory_space<vmem>>, vector<1x1x8xf32>
    %109 = vector.shape_cast %108 : vector<1x1x8xf32> to vector<1x8xf32>
    %110 = vector.broadcast %109 : vector<1x8xf32> to vector<8x8xf32>
    %111 = arith.addf %107, %110 : vector<8x8xf32>
    %cst_118 = arith.constant dense<0.000000e+00> : vector<8x224xf32>
    %112 = tpu.matmul %111, %103, %cst_118 {dimension_numbers = #tpu.dot_dimension_numbers<[1], [0], [0], [1], [0, 0, 1, 1], [], []>} : vector<8x8xf32>, vector<8x224xf32>, vector<8x224xf32> -> vector<8x224xf32>
    %cst_119 = arith.constant dense<0.000000e+00> : vector<224x224xf32>
    %113 = tpu.matmul %104, %112, %cst_119 {dimension_numbers = #tpu.dot_dimension_numbers<[1], [0], [0], [1], [0, 0, 1, 1], [], []>} : vector<224x8xf32>, vector<8x224xf32>, vector<224x224xf32> -> vector<224x224xf32>
    %c0_120 = arith.constant 0 : index
    %c0_121 = arith.constant 0 : index
    %c0_122 = arith.constant 0 : index
    %c0_123 = arith.constant 0 : index
    %114 = vector.load %arg17[%c0_120, %c0_121, %c0_122, %c0_123] : memref<1x4x224x224xf32, #tpu.memory_space<vmem>>, vector<1x1x224x224xf32>
    %115 = vector.shape_cast %114 : vector<1x1x224x224xf32> to vector<224x224xf32>
    %116 = vector.shape_cast %113 : vector<224x224xf32> to vector<1x1x224x224xf32>
    tpu.vector_store %arg17[%c0_120, %c0_121, %c0_122, %c0_123], %116 {strides = array<i32>} : memref<1x4x224x224xf32, #tpu.memory_space<vmem>>, vector<1x1x224x224xf32>,
    %c1_124 = arith.constant 1 : index
    %c0_125 = arith.constant 0 : index
    %c0_126 = arith.constant 0 : index
    %117 = vector.load %arg13[%c1_124, %c0_125, %c0_126] : memref<4x128x8xf32, #tpu.memory_space<vmem>>, vector<1x128x8xf32>
    %118 = vector.shape_cast %117 : vector<1x128x8xf32> to vector<128x8xf32>
    %cst_127 = arith.constant dense<0.000000e+00> : vector<8x8xf32>
    %119 = tpu.matmul %102, %118, %cst_127 {dimension_numbers = #tpu.dot_dimension_numbers<[1], [0], [0], [1], [0, 0, 1, 1], [], []>} : vector<8x128xf32>, vector<128x8xf32>, vector<8x8xf32> -> vector<8x8xf32>
    %c1_128 = arith.constant 1 : index
    %c0_129 = arith.constant 0 : index
    %c0_130 = arith.constant 0 : index
    %120 = vector.load %arg14[%c1_128, %c0_129, %c0_130] : memref<4x1x8xf32, #tpu.memory_space<vmem>>, vector<1x1x8xf32>
    %121 = vector.shape_cast %120 : vector<1x1x8xf32> to vector<1x8xf32>
    %122 = vector.broadcast %121 : vector<1x8xf32> to vector<8x8xf32>
    %123 = arith.addf %119, %122 : vector<8x8xf32>
    %cst_131 = arith.constant dense<0.000000e+00> : vector<8x224xf32>
    %124 = tpu.matmul %123, %103, %cst_131 {dimension_numbers = #tpu.dot_dimension_numbers<[1], [0], [0], [1], [0, 0, 1, 1], [], []>} : vector<8x8xf32>, vector<8x224xf32>, vector<8x224xf32> -> vector<8x224xf32>
    %cst_132 = arith.constant dense<0.000000e+00> : vector<224x224xf32>
    %125 = tpu.matmul %104, %124, %cst_132 {dimension_numbers = #tpu.dot_dimension_numbers<[1], [0], [0], [1], [0, 0, 1, 1], [], []>} : vector<224x8xf32>, vector<8x224xf32>, vector<224x224xf32> -> vector<224x224xf32>
    %c0_133 = arith.constant 0 : index
    %c1_134 = arith.constant 1 : index
    %c0_135 = arith.constant 0 : index
    %c0_136 = arith.constant 0 : index
    %126 = vector.load %arg17[%c0_133, %c1_134, %c0_135, %c0_136] : memref<1x4x224x224xf32, #tpu.memory_space<vmem>>, vector<1x1x224x224xf32>
    %127 = vector.shape_cast %126 : vector<1x1x224x224xf32> to vector<224x224xf32>
    %128 = vector.shape_cast %125 : vector<224x224xf32> to vector<1x1x224x224xf32>
    tpu.vector_store %arg17[%c0_133, %c1_134, %c0_135, %c0_136], %128 {strides = array<i32>} : memref<1x4x224x224xf32, #tpu.memory_space<vmem>>, vector<1x1x224x224xf32>,
    %c2_137 = arith.constant 2 : index
    %c0_138 = arith.constant 0 : index
    %c0_139 = arith.constant 0 : index
    %129 = vector.load %arg13[%c2_137, %c0_138, %c0_139] : memref<4x128x8xf32, #tpu.memory_space<vmem>>, vector<1x128x8xf32>
    %130 = vector.shape_cast %129 : vector<1x128x8xf32> to vector<128x8xf32>
    %cst_140 = arith.constant dense<0.000000e+00> : vector<8x8xf32>
    %131 = tpu.matmul %102, %130, %cst_140 {dimension_numbers = #tpu.dot_dimension_numbers<[1], [0], [0], [1], [0, 0, 1, 1], [], []>} : vector<8x128xf32>, vector<128x8xf32>, vector<8x8xf32> -> vector<8x8xf32>
    %c2_141 = arith.constant 2 : index
    %c0_142 = arith.constant 0 : index
    %c0_143 = arith.constant 0 : index
    %132 = vector.load %arg14[%c2_141, %c0_142, %c0_143] : memref<4x1x8xf32, #tpu.memory_space<vmem>>, vector<1x1x8xf32>
    %133 = vector.shape_cast %132 : vector<1x1x8xf32> to vector<1x8xf32>
    %134 = vector.broadcast %133 : vector<1x8xf32> to vector<8x8xf32>
    %135 = arith.addf %131, %134 : vector<8x8xf32>
    %cst_144 = arith.constant dense<0.000000e+00> : vector<8x224xf32>
    %136 = tpu.matmul %135, %103, %cst_144 {dimension_numbers = #tpu.dot_dimension_numbers<[1], [0], [0], [1], [0, 0, 1, 1], [], []>} : vector<8x8xf32>, vector<8x224xf32>, vector<8x224xf32> -> vector<8x224xf32>
    %cst_145 = arith.constant dense<0.000000e+00> : vector<224x224xf32>
    %137 = tpu.matmul %104, %136, %cst_145 {dimension_numbers = #tpu.dot_dimension_numbers<[1], [0], [0], [1], [0, 0, 1, 1], [], []>} : vector<224x8xf32>, vector<8x224xf32>, vector<224x224xf32> -> vector<224x224xf32>
    %c0_146 = arith.constant 0 : index
    %c2_147 = arith.constant 2 : index
    %c0_148 = arith.constant 0 : index
    %c0_149 = arith.constant 0 : index
    %138 = vector.load %arg17[%c0_146, %c2_147, %c0_148, %c0_149] : memref<1x4x224x224xf32, #tpu.memory_space<vmem>>, vector<1x1x224x224xf32>
    %139 = vector.shape_cast %138 : vector<1x1x224x224xf32> to vector<224x224xf32>
    %140 = vector.shape_cast %137 : vector<224x224xf32> to vector<1x1x224x224xf32>
    tpu.vector_store %arg17[%c0_146, %c2_147, %c0_148, %c0_149], %140 {strides = array<i32>} : memref<1x4x224x224xf32, #tpu.memory_space<vmem>>, vector<1x1x224x224xf32>,
    %c3 = arith.constant 3 : index
    %c0_150 = arith.constant 0 : index
    %c0_151 = arith.constant 0 : index
    %141 = vector.load %arg13[%c3, %c0_150, %c0_151] : memref<4x128x8xf32, #tpu.memory_space<vmem>>, vector<1x128x8xf32>
    %142 = vector.shape_cast %141 : vector<1x128x8xf32> to vector<128x8xf32>
    %cst_152 = arith.constant dense<0.000000e+00> : vector<8x8xf32>
    %143 = tpu.matmul %102, %142, %cst_152 {dimension_numbers = #tpu.dot_dimension_numbers<[1], [0], [0], [1], [0, 0, 1, 1], [], []>} : vector<8x128xf32>, vector<128x8xf32>, vector<8x8xf32> -> vector<8x8xf32>
    %c3_153 = arith.constant 3 : index
    %c0_154 = arith.constant 0 : index
    %c0_155 = arith.constant 0 : index
    %144 = vector.load %arg14[%c3_153, %c0_154, %c0_155] : memref<4x1x8xf32, #tpu.memory_space<vmem>>, vector<1x1x8xf32>
    %145 = vector.shape_cast %144 : vector<1x1x8xf32> to vector<1x8xf32>
    %146 = vector.broadcast %145 : vector<1x8xf32> to vector<8x8xf32>
    %147 = arith.addf %143, %146 : vector<8x8xf32>
    %cst_156 = arith.constant dense<0.000000e+00> : vector<8x224xf32>
    %148 = tpu.matmul %147, %103, %cst_156 {dimension_numbers = #tpu.dot_dimension_numbers<[1], [0], [0], [1], [0, 0, 1, 1], [], []>} : vector<8x8xf32>, vector<8x224xf32>, vector<8x224xf32> -> vector<8x224xf32>
    %cst_157 = arith.constant dense<0.000000e+00> : vector<224x224xf32>
    %149 = tpu.matmul %104, %148, %cst_157 {dimension_numbers = #tpu.dot_dimension_numbers<[1], [0], [0], [1], [0, 0, 1, 1], [], []>} : vector<224x8xf32>, vector<8x224xf32>, vector<224x224xf32> -> vector<224x224xf32>
    %c0_158 = arith.constant 0 : index
    %c3_159 = arith.constant 3 : index
    %c0_160 = arith.constant 0 : index
    %c0_161 = arith.constant 0 : index
    %150 = vector.load %arg17[%c0_158, %c3_159, %c0_160, %c0_161] : memref<1x4x224x224xf32, #tpu.memory_space<vmem>>, vector<1x1x224x224xf32>
    %151 = vector.shape_cast %150 : vector<1x1x224x224xf32> to vector<224x224xf32>
    %152 = vector.shape_cast %149 : vector<224x224xf32> to vector<1x1x224x224xf32>
    tpu.vector_store %arg17[%c0_158, %c3_159, %c0_160, %c0_161], %152 {strides = array<i32>} : memref<1x4x224x224xf32, #tpu.memory_space<vmem>>, vector<1x1x224x224xf32>,
    return
  }
  func.func @transform_0(%arg0: i32) -> (i32, i32, i32) {
    %c0_i32 = arith.constant 0 : i32
    %c0_i32_0 = arith.constant 0 : i32
    %c0_i32_1 = arith.constant 0 : i32
    return %arg0, %c0_i32, %c0_i32_0 : i32, i32, i32
  }
  func.func @transform_1(%arg0: i32) -> (i32, i32, i32) {
    %c0_i32 = arith.constant 0 : i32
    %c0_i32_0 = arith.constant 0 : i32
    %c0_i32_1 = arith.constant 0 : i32
    %c0_i32_2 = arith.constant 0 : i32
    return %c0_i32, %c0_i32_0, %c0_i32_1 : i32, i32, i32
  }
  func.func @transform_2(%arg0: i32) -> (i32, i32, i32) {
    %c0_i32 = arith.constant 0 : i32
    %c0_i32_0 = arith.constant 0 : i32
    %c0_i32_1 = arith.constant 0 : i32
    %c0_i32_2 = arith.constant 0 : i32
    return %c0_i32, %c0_i32_0, %c0_i32_1 : i32, i32, i32
  }
  func.func @transform_3(%arg0: i32) -> (i32, i32) {
    %c0_i32 = arith.constant 0 : i32
    %c0_i32_0 = arith.constant 0 : i32
    %c0_i32_1 = arith.constant 0 : i32
    return %c0_i32, %c0_i32_0 : i32, i32
  }
  func.func @transform_4(%arg0: i32) -> (i32, i32, i32) {
    %c0_i32 = arith.constant 0 : i32
    %c0_i32_0 = arith.constant 0 : i32
    %c0_i32_1 = arith.constant 0 : i32
    %c0_i32_2 = arith.constant 0 : i32
    return %c0_i32, %c0_i32_0, %c0_i32_1 : i32, i32, i32
  }
  func.func @transform_5(%arg0: i32) -> (i32, i32, i32) {
    %c0_i32 = arith.constant 0 : i32
    %c0_i32_0 = arith.constant 0 : i32
    %c0_i32_1 = arith.constant 0 : i32
    %c0_i32_2 = arith.constant 0 : i32
    return %c0_i32, %c0_i32_0, %c0_i32_1 : i32, i32, i32
  }
  func.func @transform_6(%arg0: i32) -> (i32, i32) {
    %c0_i32 = arith.constant 0 : i32
    %c0_i32_0 = arith.constant 0 : i32
    %c0_i32_1 = arith.constant 0 : i32
    return %c0_i32, %c0_i32_0 : i32, i32
  }
  func.func @transform_7(%arg0: i32) -> (i32, i32, i32) {
    %c0_i32 = arith.constant 0 : i32
    %c0_i32_0 = arith.constant 0 : i32
    %c0_i32_1 = arith.constant 0 : i32
    %c0_i32_2 = arith.constant 0 : i32
    return %c0_i32, %c0_i32_0, %c0_i32_1 : i32, i32, i32
  }
  func.func @transform_8(%arg0: i32) -> (i32, i32) {
    %c0_i32 = arith.constant 0 : i32
    %c0_i32_0 = arith.constant 0 : i32
    %c0_i32_1 = arith.constant 0 : i32
    return %c0_i32, %c0_i32_0 : i32, i32
  }
  func.func @transform_9(%arg0: i32) -> (i32, i32, i32) {
    %c0_i32 = arith.constant 0 : i32
    %c0_i32_0 = arith.constant 0 : i32
    %c0_i32_1 = arith.constant 0 : i32
    %c0_i32_2 = arith.constant 0 : i32
    return %c0_i32, %c0_i32_0, %c0_i32_1 : i32, i32, i32
  }
  func.func @transform_10(%arg0: i32) -> (i32, i32, i32) {
    %c0_i32 = arith.constant 0 : i32
    %c0_i32_0 = arith.constant 0 : i32
    %c0_i32_1 = arith.constant 0 : i32
    %c0_i32_2 = arith.constant 0 : i32
    return %c0_i32, %c0_i32_0, %c0_i32_1 : i32, i32, i32
  }
  func.func @transform_11(%arg0: i32) -> (i32, i32) {
    %c0_i32 = arith.constant 0 : i32
    %c0_i32_0 = arith.constant 0 : i32
    %c0_i32_1 = arith.constant 0 : i32
    return %c0_i32, %c0_i32_0 : i32, i32
  }
  func.func @transform_12(%arg0: i32) -> (i32, i32, i32) {
    %c0_i32 = arith.constant 0 : i32
    %c0_i32_0 = arith.constant 0 : i32
    %c0_i32_1 = arith.constant 0 : i32
    %c0_i32_2 = arith.constant 0 : i32
    return %c0_i32, %c0_i32_0, %c0_i32_1 : i32, i32, i32
  }
  func.func @transform_13(%arg0: i32) -> (i32, i32, i32) {
    %c0_i32 = arith.constant 0 : i32
    %c0_i32_0 = arith.constant 0 : i32
    %c0_i32_1 = arith.constant 0 : i32
    %c0_i32_2 = arith.constant 0 : i32
    return %c0_i32, %c0_i32_0, %c0_i32_1 : i32, i32, i32
  }
  func.func @transform_14(%arg0: i32) -> (i32, i32) {
    %c0_i32 = arith.constant 0 : i32
    %c0_i32_0 = arith.constant 0 : i32
    %c0_i32_1 = arith.constant 0 : i32
    return %c0_i32, %c0_i32_0 : i32, i32
  }
  func.func @transform_15(%arg0: i32) -> (i32, i32) {
    %c0_i32 = arith.constant 0 : i32
    %c0_i32_0 = arith.constant 0 : i32
    %c0_i32_1 = arith.constant 0 : i32
    return %c0_i32, %c0_i32_0 : i32, i32
  }
  func.func @transform_16(%arg0: i32) -> (i32, i32, i32, i32) {
    %c0_i32 = arith.constant 0 : i32
    %c0_i32_0 = arith.constant 0 : i32
    %c0_i32_1 = arith.constant 0 : i32
    %c0_i32_2 = arith.constant 0 : i32
    return %arg0, %c0_i32, %c0_i32_0, %c0_i32_1 : i32, i32, i32, i32
  }
}

</mosaic_0001>

<llo_original>
// kernel: tile.27
$region0: #{tile.27}
  #allocation0 [shape = 's32[1]{0}', space=sflag, size = 0x4, scoped, tag = 'scoped memory for tile.27']
  %s0 = inlined_call_operand.vmem [shape: f32[8], index: 0, kind: input, shape index: {}]
  %s1 = inlined_call_operand.vmem [shape: f32[16,8], index: 1, kind: output, shape index: {}]
  // Predicated region
  $region2: #{tile.27} parent=0 // pred_check
    _
  $region3: #{tile.27} parent=0 // pred_check_branch
    %3 = sbr.rel (0) target = $region5
  $region4: #{tile.27} parent=0 // pred_region
    _
  $region5: #{tile.27} parent=0 // pred_fallthru
    _
  %v4 = vld [vmem:[%s0] ss:$0 sm:$0xff]
  %5 = vst [vmem:[%s1] sm:$0xff] %v4
  %s6 = scalar_lea.vmem %s1, 8
  %7 = vst [vmem:[%s6] sm:$0xff] %v4

// kernel: tile.28
$region0: #{tile.28}
  %s0 = inlined_call_operand.vmem [shape: f32[16,8], index: 0, kind: input, shape index: {}]
  %s1 = inlined_call_operand.vmem [shape: f32[1,128], index: 1, kind: output, shape index: {}]
  $region1: #{tile.28} parent=0
    #allocation0 [shape = 'u8[4096]{0}', space=vmem, size = 0x1000, scoped, tag = 'scoped mem for output reshape']
    %v2 = vld [vmem:[%s0] sm:$0x1]
    %vm3 = vcmask 64512
    %4 = vst.msk [vmem:[#allocation0] sm:$0x1] %vm3, %v2
    %s5 = scalar_lea.vmem %s0, 15
    %v6 = vld [vmem:[%s5] sm:$0x1]
    %7 = vrot.lane.b32.xlu0 %v6, 120
    %v8 = vpop.permute.xlu0 %7
    %vm9 = vcmask 1048512
    %10 = vst.msk [vmem:[#allocation0] sm:$0x1] %vm9, %v8
    %s11 = scalar_lea.vmem %s0, 14
    %v12 = vld [vmem:[%s11] sm:$0x1]
    %13 = vrot.lane.b32.xlu0 %v12, 112
    %v14 = vpop.permute.xlu0 %13
    %vm15 = vcmask 982912
    %16 = vst.msk [vmem:[#allocation0] sm:$0x1] %vm15, %v14
    %s17 = scalar_lea.vmem %s0, 13
    %v18 = vld [vmem:[%s17] sm:$0x1]
    %19 = vrot.lane.b32.xlu0 %v18, 104
    %v20 = vpop.permute.xlu0 %19
    %vm21 = vcmask 917312
    %22 = vst.msk [vmem:[#allocation0] sm:$0x1] %vm21, %v20
    %s23 = scalar_lea.vmem %s0, 12
    %v24 = vld [vmem:[%s23] sm:$0x1]
    %25 = vrot.lane.b32.xlu0 %v24, 96
    %v26 = vpop.permute.xlu0 %25
    %vm27 = vcmask 851712
    %28 = vst.msk [vmem:[#allocation0] sm:$0x1] %vm27, %v26
    %s29 = scalar_lea.vmem %s0, 11
    %v30 = vld [vmem:[%s29] sm:$0x1]
    %31 = vrot.lane.b32.xlu0 %v30, 88
    %v32 = vpop.permute.xlu0 %31
    %vm33 = vcmask 786112
    %34 = vst.msk [vmem:[#allocation0] sm:$0x1] %vm33, %v32
    %s35 = scalar_lea.vmem %s0, 10
    %v36 = vld [vmem:[%s35] sm:$0x1]
    %37 = vrot.lane.b32.xlu0 %v36, 80
    %v38 = vpop.permute.xlu0 %37
    %vm39 = vcmask 720512
    %40 = vst.msk [vmem:[#allocation0] sm:$0x1] %vm39, %v38
    %s41 = scalar_lea.vmem %s0, 9
    %v42 = vld [vmem:[%s41] sm:$0x1]
    %43 = vrot.lane.b32.xlu0 %v42, 72
    %v44 = vpop.permute.xlu0 %43
    %vm45 = vcmask 654912
    %46 = vst.msk [vmem:[#allocation0] sm:$0x1] %vm45, %v44
    %s47 = scalar_lea.vmem %s0, 8
    %v48 = vld [vmem:[%s47] sm:$0x1]
    %49 = vrot.lane.b32.xlu0 %v48, 64
    %v50 = vpop.permute.xlu0 %49
    %vm51 = vcmask 589312
    %52 = vst.msk [vmem:[#allocation0] sm:$0x1] %vm51, %v50
    %s53 = scalar_lea.vmem %s0, 7
    %v54 = vld [vmem:[%s53] sm:$0x1]
    %55 = vrot.lane.b32.xlu0 %v54, 56
    %v56 = vpop.permute.xlu0 %55
    %vm57 = vcmask 523712
    %58 = vst.msk [vmem:[#allocation0] sm:$0x1] %vm57, %v56
    %s59 = scalar_lea.vmem %s0, 6
    %v60 = vld [vmem:[%s59] sm:$0x1]
    %61 = vrot.lane.b32.xlu0 %v60, 48
    %v62 = vpop.permute.xlu0 %61
    %vm63 = vcmask 458112
    %64 = vst.msk [vmem:[#allocation0] sm:$0x1] %vm63, %v62
    %s65 = scalar_lea.vmem %s0, 5
    %v66 = vld [vmem:[%s65] sm:$0x1]
    %67 = vrot.lane.b32.xlu0 %v66, 40
    %v68 = vpop.permute.xlu0 %67
    %vm69 = vcmask 392512
    %70 = vst.msk [vmem:[#allocation0] sm:$0x1] %vm69, %v68
    %s71 = scalar_lea.vmem %s0, 4
    %v72 = vld [vmem:[%s71] sm:$0x1]
    %73 = vrot.lane.b32.xlu0 %v72, 32
    %v74 = vpop.permute.xlu0 %73
    %vm75 = vcmask 326912
    %76 = vst.msk [vmem:[#allocation0] sm:$0x1] %vm75, %v74
    %s77 = scalar_lea.vmem %s0, 3
    %v78 = vld [vmem:[%s77] sm:$0x1]
    %79 = vrot.lane.b32.xlu0 %v78, 24
    %v80 = vpop.permute.xlu0 %79
    %vm81 = vcmask 261312
    %82 = vst.msk [vmem:[#allocation0] sm:$0x1] %vm81, %v80
    %s83 = scalar_lea.vmem %s0, 2
    %v84 = vld [vmem:[%s83] sm:$0x1]
    %85 = vrot.lane.b32.xlu0 %v84, 16
    %v86 = vpop.permute.xlu0 %85
    %vm87 = vcmask 195712
    %88 = vst.msk [vmem:[#allocation0] sm:$0x1] %vm87, %v86
    %s89 = scalar_lea.vmem %s0, 1
    %v90 = vld [vmem:[%s89] sm:$0x1]
    %91 = vrot.lane.b32.xlu0 %v90, 8
    %v92 = vpop.permute.xlu0 %91
    %vm93 = vcmask 130112
    %94 = vst.msk [vmem:[#allocation0] sm:$0x1] %vm93, %v92
    %s96 = sshllo.u32 0, 1
    %v98 = vld [vmem:[#allocation0] sm:%s96]
    %s99 = sshllo.u32 0, 1
    %100 = vst [vmem:[%s1] sm:%s99] %v98

// kernel: tile.42
$region0: #{tile.42}
  #allocation0 [shape = 's32[1]{0}', space=sflag, size = 0x4, scoped, tag = 'scoped memory for tile.42']
  %s0 = inlined_call_operand.vmem [shape: f32[16], index: 0, kind: input, shape index: {}]
  %s1 = inlined_call_operand.vmem [shape: f32[8,16], index: 1, kind: output, shape index: {}]
  // Predicated region
  $region2: #{tile.42} parent=0 // pred_check
    _
  $region3: #{tile.42} parent=0 // pred_check_branch
    %3 = sbr.rel (0) target = $region5
  $region4: #{tile.42} parent=0 // pred_region
    _
  $region5: #{tile.42} parent=0 // pred_fallthru
    _
  %v4 = vld [vmem:[%s0] ss:$0 sm:$0xff]
  %5 = vst [vmem:[%s1] sm:$0xff] %v4

// kernel: tile.43
$region0: #{tile.43}
  %s0 = inlined_call_operand.vmem [shape: f32[8,16], index: 0, kind: input, shape index: {}]
  %s1 = inlined_call_operand.vmem [shape: f32[1,128], index: 1, kind: output, shape index: {}]
  $region1: #{tile.43} parent=0
    #allocation0 [shape = 'u8[4096]{0}', space=vmem, size = 0x1000, scoped, tag = 'scoped mem for output reshape']
    %v2 = vld [vmem:[%s0] sm:$0x1]
    %vm3 = vcmask 130048
    %4 = vst.msk [vmem:[#allocation0] sm:$0x1] %vm3, %v2
    %s5 = scalar_lea.vmem %s0, 7
    %v6 = vld [vmem:[%s5] sm:$0x1]
    %7 = vrot.lane.b32.xlu0 %v6, 112
    %v8 = vpop.permute.xlu0 %7
    %vm9 = vcmask 1048448
    %10 = vst.msk [vmem:[#allocation0] sm:$0x1] %vm9, %v8
    %s11 = scalar_lea.vmem %s0, 6
    %v12 = vld [vmem:[%s11] sm:$0x1]
    %13 = vrot.lane.b32.xlu0 %v12, 96
    %v14 = vpop.permute.xlu0 %13
    %vm15 = vcmask 917248
    %16 = vst.msk [vmem:[#allocation0] sm:$0x1] %vm15, %v14
    %s17 = scalar_lea.vmem %s0, 5
    %v18 = vld [vmem:[%s17] sm:$0x1]
    %19 = vrot.lane.b32.xlu0 %v18, 80
    %v20 = vpop.permute.xlu0 %19
    %vm21 = vcmask 786048
    %22 = vst.msk [vmem:[#allocation0] sm:$0x1] %vm21, %v20
    %s23 = scalar_lea.vmem %s0, 4
    %v24 = vld [vmem:[%s23] sm:$0x1]
    %25 = vrot.lane.b32.xlu0 %v24, 64
    %v26 = vpop.permute.xlu0 %25
    %vm27 = vcmask 654848
    %28 = vst.msk [vmem:[#allocation0] sm:$0x1] %vm27, %v26
    %s29 = scalar_lea.vmem %s0, 3
    %v30 = vld [vmem:[%s29] sm:$0x1]
    %31 = vrot.lane.b32.xlu0 %v30, 48
    %v32 = vpop.permute.xlu0 %31
    %vm33 = vcmask 523648
    %34 = vst.msk [vmem:[#allocation0] sm:$0x1] %vm33, %v32
    %s35 = scalar_lea.vmem %s0, 2
    %v36 = vld [vmem:[%s35] sm:$0x1]
    %37 = vrot.lane.b32.xlu0 %v36, 32
    %v38 = vpop.permute.xlu0 %37
    %vm39 = vcmask 392448
    %40 = vst.msk [vmem:[#allocation0] sm:$0x1] %vm39, %v38
    %s41 = scalar_lea.vmem %s0, 1
    %v42 = vld [vmem:[%s41] sm:$0x1]
    %43 = vrot.lane.b32.xlu0 %v42, 16
    %v44 = vpop.permute.xlu0 %43
    %vm45 = vcmask 261248
    %46 = vst.msk [vmem:[#allocation0] sm:$0x1] %vm45, %v44
    %s48 = sshllo.u32 0, 1
    %v50 = vld [vmem:[#allocation0] sm:%s48]
    %s51 = sshllo.u32 0, 1
    %52 = vst [vmem:[%s1] sm:%s51] %v50

// kernel: resnet_seghead_forward.1
$region0: #{resnet_seghead_forward.1}
  #allocation0 [shape = 'u32[]', space=smem, size = 0x4, offset = 0x4, fixed_abs, tag = 'smem constant byte address 0x4 - core index']
  #allocation1 [shape = 'u32[144,128]{1,0:T(1,128)}', space=vmem, size = 0x12000, scoped, tag = 'internal scratch']
  %s0 = inlined_call_operand.vmem [shape: f32[2,32,96], index: 0, kind: input, shape index: {}]
  %s1 = inlined_call_operand.vmem [shape: f32[3,16,32], index: 1, kind: input, shape index: {}]
  %s2 = inlined_call_operand.vmem [shape: f32[3,96,128], index: 2, kind: input, shape index: {}]
  %s3 = inlined_call_operand.vmem [shape: f32[1,128], index: 3, kind: input, shape index: {}]
  %s4 = inlined_call_operand.vmem [shape: f32[3,16,16], index: 4, kind: input, shape index: {}]
  %s5 = inlined_call_operand.vmem [shape: f32[3,128,128], index: 5, kind: input, shape index: {}]
  %s6 = inlined_call_operand.vmem [shape: f32[1,128], index: 6, kind: input, shape index: {}]
  %s7 = inlined_call_operand.vmem [shape: f32[3,128,128], index: 7, kind: input, shape index: {}]
  %s8 = inlined_call_operand.vmem [shape: f32[1,128], index: 8, kind: input, shape index: {}]
  %s9 = inlined_call_operand.vmem [shape: f32[3,8,16], index: 9, kind: input, shape index: {}]
  %s10 = inlined_call_operand.vmem [shape: f32[3,128,128], index: 10, kind: input, shape index: {}]
  %s11 = inlined_call_operand.vmem [shape: f32[1,128], index: 11, kind: input, shape index: {}]
  %s12 = inlined_call_operand.vmem [shape: f32[4,128,8], index: 12, kind: input, shape index: {}]
  %s13 = inlined_call_operand.vmem [shape: f32[4,1,8], index: 13, kind: input, shape index: {}]
  %s14 = inlined_call_operand.vmem [shape: f32[8,224], index: 14, kind: input, shape index: {}]
  %s15 = inlined_call_operand.vmem [shape: f32[224,8], index: 15, kind: input, shape index: {}]
  %s16 = inlined_call_operand.hbm [shape: f32[2,4,224,224], index: 16, kind: output, shape index: {}]
  %s17 = sld [smem:[#allocation0]]
  $region97: #{resnet_seghead_forward.1} parent=0
    _
  %s19 = ssub.s32 1, %s17
  %s20 = scalar_select 0, %s19, %s17
  $region1: #{resnet_seghead_forward.1} parent=0
    #allocation2 [shape = 'u8[1835008]{0}', space=vmem, size = 0x1c0000, scoped, tag = 'output window, operand 0']
    #allocation3 [shape = 's32[2]{0}', space=sflag, size = 0x8, scoped, tag = 'scoped memory for resnet_seghead_forward.1']
    %21 = vsyncpa [#allocation3], 0
    %s22 = scalar_lea.sflag [#allocation3], 1
    %23 = vsyncpa %s22, 0
    loop: start=0, step=1, limit=4
    $region2: #{resnet_seghead_forward.1} parent=1 // loop_pre_header
      _
    $region3: #{resnet_seghead_forward.1} parent=1 // loop_header
      %s25 = sphi 0, %s29
      %p26 = scmp.ge.s32.totalorder %s25, 4
      %s35 = sphi 0, %s37
      %s38 = sphi 0, %s35
      %s39 = sphi 0, %s38
      %s55 = sphi 0, %s39
      %s59 = sphi 0, %s59
      %s61 = sphi 0, %s59
      %s62 = sphi 0, %s61
      %s76 = sphi 0, %s62
      %s80 = sphi 0, %s80
      %s82 = sphi 0, %s80
      %s83 = sphi 0, %s82
      %s97 = sphi 0, %s83
      %s101 = sphi 0, %s101
      %s103 = sphi 0, %s101
      %s104 = sphi 0, %s103
      %s118 = sphi 0, %s104
      %s122 = sphi 0, %s122
      %s124 = sphi 0, %s122
      %s125 = sphi 0, %s124
      %s139 = sphi 0, %s125
      %s143 = sphi 0, %s143
      %s145 = sphi 0, %s143
      %s146 = sphi 0, %s145
      %s160 = sphi 0, %s146
      %s164 = sphi 0, %s164
      %s166 = sphi 0, %s164
      %s167 = sphi 0, %s166
      %s181 = sphi 0, %s167
      %s185 = sphi 0, %s185
      %s187 = sphi 0, %s185
      %s188 = sphi 0, %s187
      %s202 = sphi 0, %s188
      %s206 = sphi 0, %s206
      %s208 = sphi 0, %s206
      %s209 = sphi 0, %s208
      %s223 = sphi 0, %s209
      %s227 = sphi 0, %s227
      %s229 = sphi 0, %s227
      %s230 = sphi 0, %s229
      %s244 = sphi 0, %s230
      %s248 = sphi 0, %s248
      %s250 = sphi 0, %s248
      %s251 = sphi 0, %s250
      %s265 = sphi 0, %s251
      %s269 = sphi 0, %s269
      %s271 = sphi 0, %s269
      %s272 = sphi 0, %s271
      %s286 = sphi 0, %s272
      %s290 = sphi 0, %s290
      %s292 = sphi 0, %s290
      %s293 = sphi 0, %s292
      %s307 = sphi 0, %s293
      %s311 = sphi 0, %s311
      %s313 = sphi 0, %s311
      %s314 = sphi 0, %s313
      %s328 = sphi 0, %s314
      %s332 = sphi 0, %s332
      %s334 = sphi 0, %s332
      %s335 = sphi 0, %s334
      %s349 = sphi 0, %s335
      %s353 = sphi 0, %s353
      %s355 = sphi 0, %s353
      %s356 = sphi 0, %s355
      %s370 = sphi 0, %s356
      %s376 = sphi 0, %s378
      %s379 = sphi 0, %s376
      %s380 = sphi 0, %s379
      %s396 = sphi 0, %s380
    $region4: #{resnet_seghead_forward.1} parent=1 // loop_header_branch
      %28 = sbr.rel (%p26) target = $region8
    $region5: #{resnet_seghead_forward.1} parent=1 // loop_body
      %s30 = ssub.s32 %s25, 1
      %s31 = ssub.s32 %s25, 2
      %s32 = sadd.s32 %s25, 1
      %s33 = ssub.s32 %s25, %s32
      %p34 = scmp.eq.s32.totalorder %s33, 0
      %s36 = sadd.s32 %s35, 1
      %s37 = scalar_select %p34, %s35, %s36
      %p40 = pneg %p34
      %p41 = scmp.eq.s32.totalorder %s25, 1
      %p42 = por %p40, %p41
      %p43 = scmp.ne.s32.totalorder %s35, %s38
      %p44 = scmp.eq.s32.totalorder %s25, 0
      %p45 = por %p43, %p44
      %p46 = scmp.ne.s32.totalorder %s35, %s38
      %p47 = scmp.eq.s32.totalorder %s30, 1
      %p48 = por %p46, %p47
      %p49 = scmp.ne.s32.totalorder %s38, %s39
      %p50 = scmp.eq.s32.totalorder %s30, 0
      %p51 = por %p49, %p50
      %p52 = scmp.ne.s32.totalorder %s38, %s39
      %p53 = scmp.eq.s32.totalorder %s31, 1
      %p54 = por %p52, %p53
      %p56 = scmp.ne.s32.totalorder %s39, %s55
      %p57 = scmp.eq.s32.totalorder %s31, 0
      %p58 = por %p56, %p57
      %s60 = sadd.s32 %s59, 1
      %p63 = scmp.eq.s32.totalorder %s25, 1
      %p64 = scmp.ne.s32.totalorder %s59, %s61
      %p65 = scmp.eq.s32.totalorder %s25, 0
      %p66 = por %p64, %p65
      %p67 = scmp.ne.s32.totalorder %s59, %s61
      %p68 = scmp.eq.s32.totalorder %s30, 1
      %p69 = por %p67, %p68
      %p70 = scmp.ne.s32.totalorder %s61, %s62
      %p71 = scmp.eq.s32.totalorder %s30, 0
      %p72 = por %p70, %p71
      %p73 = scmp.ne.s32.totalorder %s61, %s62
      %p74 = scmp.eq.s32.totalorder %s31, 1
      %p75 = por %p73, %p74
      %p77 = scmp.ne.s32.totalorder %s62, %s76
      %p78 = scmp.eq.s32.totalorder %s31, 0
      %p79 = por %p77, %p78
      %s81 = sadd.s32 %s80, 1
      %p84 = scmp.eq.s32.totalorder %s25, 1
      %p85 = scmp.ne.s32.totalorder %s80, %s82
      %p86 = scmp.eq.s32.totalorder %s25, 0
      %p87 = por %p85, %p86
      %p88 = scmp.ne.s32.totalorder %s80, %s82
      %p89 = scmp.eq.s32.totalorder %s30, 1
      %p90 = por %p88, %p89
      %p91 = scmp.ne.s32.totalorder %s82, %s83
      %p92 = scmp.eq.s32.totalorder %s30, 0
      %p93 = por %p91, %p92
      %p94 = scmp.ne.s32.totalorder %s82, %s83
      %p95 = scmp.eq.s32.totalorder %s31, 1
      %p96 = por %p94, %p95
      %p98 = scmp.ne.s32.totalorder %s83, %s97
      %p99 = scmp.eq.s32.totalorder %s31, 0
      %p100 = por %p98, %p99
      %s102 = sadd.s32 %s101, 1
      %p105 = scmp.eq.s32.totalorder %s25, 1
      %p106 = scmp.ne.s32.totalorder %s101, %s103
      %p107 = scmp.eq.s32.totalorder %s25, 0
      %p108 = por %p106, %p107
      %p109 = scmp.ne.s32.totalorder %s101, %s103
      %p110 = scmp.eq.s32.totalorder %s30, 1
      %p111 = por %p109, %p110
      %p112 = scmp.ne.s32.totalorder %s103, %s104
      %p113 = scmp.eq.s32.totalorder %s30, 0
      %p114 = por %p112, %p113
      %p115 = scmp.ne.s32.totalorder %s103, %s104
      %p116 = scmp.eq.s32.totalorder %s31, 1
      %p117 = por %p115, %p116
      %p119 = scmp.ne.s32.totalorder %s104, %s118
      %p120 = scmp.eq.s32.totalorder %s31, 0
      %p121 = por %p119, %p120
      %s123 = sadd.s32 %s122, 1
      %p126 = scmp.eq.s32.totalorder %s25, 1
      %p127 = scmp.ne.s32.totalorder %s122, %s124
      %p128 = scmp.eq.s32.totalorder %s25, 0
      %p129 = por %p127, %p128
      %p130 = scmp.ne.s32.totalorder %s122, %s124
      %p131 = scmp.eq.s32.totalorder %s30, 1
      %p132 = por %p130, %p131
      %p133 = scmp.ne.s32.totalorder %s124, %s125
      %p134 = scmp.eq.s32.totalorder %s30, 0
      %p135 = por %p133, %p134
      %p136 = scmp.ne.s32.totalorder %s124, %s125
      %p137 = scmp.eq.s32.totalorder %s31, 1
      %p138 = por %p136, %p137
      %p140 = scmp.ne.s32.totalorder %s125, %s139
      %p141 = scmp.eq.s32.totalorder %s31, 0
      %p142 = por %p140, %p141
      %s144 = sadd.s32 %s143, 1
      %p147 = scmp.eq.s32.totalorder %s25, 1
      %p148 = scmp.ne.s32.totalorder %s143, %s145
      %p149 = scmp.eq.s32.totalorder %s25, 0
      %p150 = por %p148, %p149
      %p151 = scmp.ne.s32.totalorder %s143, %s145
      %p152 = scmp.eq.s32.totalorder %s30, 1
      %p153 = por %p151, %p152
      %p154 = scmp.ne.s32.totalorder %s145, %s146
      %p155 = scmp.eq.s32.totalorder %s30, 0
      %p156 = por %p154, %p155
      %p157 = scmp.ne.s32.totalorder %s145, %s146
      %p158 = scmp.eq.s32.totalorder %s31, 1
      %p159 = por %p157, %p158
      %p161 = scmp.ne.s32.totalorder %s146, %s160
      %p162 = scmp.eq.s32.totalorder %s31, 0
      %p163 = por %p161, %p162
      %s165 = sadd.s32 %s164, 1
      %p168 = scmp.eq.s32.totalorder %s25, 1
      %p169 = scmp.ne.s32.totalorder %s164, %s166
      %p170 = scmp.eq.s32.totalorder %s25, 0
      %p171 = por %p169, %p170
      %p172 = scmp.ne.s32.totalorder %s164, %s166
      %p173 = scmp.eq.s32.totalorder %s30, 1
      %p174 = por %p172, %p173
      %p175 = scmp.ne.s32.totalorder %s166, %s167
      %p176 = scmp.eq.s32.totalorder %s30, 0
      %p177 = por %p175, %p176
      %p178 = scmp.ne.s32.totalorder %s166, %s167
      %p179 = scmp.eq.s32.totalorder %s31, 1
      %p180 = por %p178, %p179
      %p182 = scmp.ne.s32.totalorder %s167, %s181
      %p183 = scmp.eq.s32.totalorder %s31, 0
      %p184 = por %p182, %p183
      %s186 = sadd.s32 %s185, 1
      %p189 = scmp.eq.s32.totalorder %s25, 1
      %p190 = scmp.ne.s32.totalorder %s185, %s187
      %p191 = scmp.eq.s32.totalorder %s25, 0
      %p192 = por %p190, %p191
      %p193 = scmp.ne.s32.totalorder %s185, %s187
      %p194 = scmp.eq.s32.totalorder %s30, 1
      %p195 = por %p193, %p194
      %p196 = scmp.ne.s32.totalorder %s187, %s188
      %p197 = scmp.eq.s32.totalorder %s30, 0
      %p198 = por %p196, %p197
      %p199 = scmp.ne.s32.totalorder %s187, %s188
      %p200 = scmp.eq.s32.totalorder %s31, 1
      %p201 = por %p199, %p200
      %p203 = scmp.ne.s32.totalorder %s188, %s202
      %p204 = scmp.eq.s32.totalorder %s31, 0
      %p205 = por %p203, %p204
      %s207 = sadd.s32 %s206, 1
      %p210 = scmp.eq.s32.totalorder %s25, 1
      %p211 = scmp.ne.s32.totalorder %s206, %s208
      %p212 = scmp.eq.s32.totalorder %s25, 0
      %p213 = por %p211, %p212
      %p214 = scmp.ne.s32.totalorder %s206, %s208
      %p215 = scmp.eq.s32.totalorder %s30, 1
      %p216 = por %p214, %p215
      %p217 = scmp.ne.s32.totalorder %s208, %s209
      %p218 = scmp.eq.s32.totalorder %s30, 0
      %p219 = por %p217, %p218
      %p220 = scmp.ne.s32.totalorder %s208, %s209
      %p221 = scmp.eq.s32.totalorder %s31, 1
      %p222 = por %p220, %p221
      %p224 = scmp.ne.s32.totalorder %s209, %s223
      %p225 = scmp.eq.s32.totalorder %s31, 0
      %p226 = por %p224, %p225
      %s228 = sadd.s32 %s227, 1
      %p231 = scmp.eq.s32.totalorder %s25, 1
      %p232 = scmp.ne.s32.totalorder %s227, %s229
      %p233 = scmp.eq.s32.totalorder %s25, 0
      %p234 = por %p232, %p233
      %p235 = scmp.ne.s32.totalorder %s227, %s229
      %p236 = scmp.eq.s32.totalorder %s30, 1
      %p237 = por %p235, %p236
      %p238 = scmp.ne.s32.totalorder %s229, %s230
      %p239 = scmp.eq.s32.totalorder %s30, 0
      %p240 = por %p238, %p239
      %p241 = scmp.ne.s32.totalorder %s229, %s230
      %p242 = scmp.eq.s32.totalorder %s31, 1
      %p243 = por %p241, %p242
      %p245 = scmp.ne.s32.totalorder %s230, %s244
      %p246 = scmp.eq.s32.totalorder %s31, 0
      %p247 = por %p245, %p246
      %s249 = sadd.s32 %s248, 1
      %p252 = scmp.eq.s32.totalorder %s25, 1
      %p253 = scmp.ne.s32.totalorder %s248, %s250
      %p254 = scmp.eq.s32.totalorder %s25, 0
      %p255 = por %p253, %p254
      %p256 = scmp.ne.s32.totalorder %s248, %s250
      %p257 = scmp.eq.s32.totalorder %s30, 1
      %p258 = por %p256, %p257
      %p259 = scmp.ne.s32.totalorder %s250, %s251
      %p260 = scmp.eq.s32.totalorder %s30, 0
      %p261 = por %p259, %p260
      %p262 = scmp.ne.s32.totalorder %s250, %s251
      %p263 = scmp.eq.s32.totalorder %s31, 1
      %p264 = por %p262, %p263
      %p266 = scmp.ne.s32.totalorder %s251, %s265
      %p267 = scmp.eq.s32.totalorder %s31, 0
      %p268 = por %p266, %p267
      %s270 = sadd.s32 %s269, 1
      %p273 = scmp.eq.s32.totalorder %s25, 1
      %p274 = scmp.ne.s32.totalorder %s269, %s271
      %p275 = scmp.eq.s32.totalorder %s25, 0
      %p276 = por %p274, %p275
      %p277 = scmp.ne.s32.totalorder %s269, %s271
      %p278 = scmp.eq.s32.totalorder %s30, 1
      %p279 = por %p277, %p278
      %p280 = scmp.ne.s32.totalorder %s271, %s272
      %p281 = scmp.eq.s32.totalorder %s30, 0
      %p282 = por %p280, %p281
      %p283 = scmp.ne.s32.totalorder %s271, %s272
      %p284 = scmp.eq.s32.totalorder %s31, 1
      %p285 = por %p283, %p284
      %p287 = scmp.ne.s32.totalorder %s272, %s286
      %p288 = scmp.eq.s32.totalorder %s31, 0
      %p289 = por %p287, %p288
      %s291 = sadd.s32 %s290, 1
      %p294 = scmp.eq.s32.totalorder %s25, 1
      %p295 = scmp.ne.s32.totalorder %s290, %s292
      %p296 = scmp.eq.s32.totalorder %s25, 0
      %p297 = por %p295, %p296
      %p298 = scmp.ne.s32.totalorder %s290, %s292
      %p299 = scmp.eq.s32.totalorder %s30, 1
      %p300 = por %p298, %p299
      %p301 = scmp.ne.s32.totalorder %s292, %s293
      %p302 = scmp.eq.s32.totalorder %s30, 0
      %p303 = por %p301, %p302
      %p304 = scmp.ne.s32.totalorder %s292, %s293
      %p305 = scmp.eq.s32.totalorder %s31, 1
      %p306 = por %p304, %p305
      %p308 = scmp.ne.s32.totalorder %s293, %s307
      %p309 = scmp.eq.s32.totalorder %s31, 0
      %p310 = por %p308, %p309
      %s312 = sadd.s32 %s311, 1
      %p315 = scmp.eq.s32.totalorder %s25, 1
      %p316 = scmp.ne.s32.totalorder %s311, %s313
      %p317 = scmp.eq.s32.totalorder %s25, 0
      %p318 = por %p316, %p317
      %p319 = scmp.ne.s32.totalorder %s311, %s313
      %p320 = scmp.eq.s32.totalorder %s30, 1
      %p321 = por %p319, %p320
      %p322 = scmp.ne.s32.totalorder %s313, %s314
      %p323 = scmp.eq.s32.totalorder %s30, 0
      %p324 = por %p322, %p323
      %p325 = scmp.ne.s32.totalorder %s313, %s314
      %p326 = scmp.eq.s32.totalorder %s31, 1
      %p327 = por %p325, %p326
      %p329 = scmp.ne.s32.totalorder %s314, %s328
      %p330 = scmp.eq.s32.totalorder %s31, 0
      %p331 = por %p329, %p330
      %s333 = sadd.s32 %s332, 1
      %p336 = scmp.eq.s32.totalorder %s25, 1
      %p337 = scmp.ne.s32.totalorder %s332, %s334
      %p338 = scmp.eq.s32.totalorder %s25, 0
      %p339 = por %p337, %p338
      %p340 = scmp.ne.s32.totalorder %s332, %s334
      %p341 = scmp.eq.s32.totalorder %s30, 1
      %p342 = por %p340, %p341
      %p343 = scmp.ne.s32.totalorder %s334, %s335
      %p344 = scmp.eq.s32.totalorder %s30, 0
      %p345 = por %p343, %p344
      %p346 = scmp.ne.s32.totalorder %s334, %s335
      %p347 = scmp.eq.s32.totalorder %s31, 1
      %p348 = por %p346, %p347
      %p350 = scmp.ne.s32.totalorder %s335, %s349
      %p351 = scmp.eq.s32.totalorder %s31, 0
      %p352 = por %p350, %p351
      %s354 = sadd.s32 %s353, 1
      %p357 = scmp.eq.s32.totalorder %s25, 1
      %p358 = scmp.ne.s32.totalorder %s353, %s355
      %p359 = scmp.eq.s32.totalorder %s25, 0
      %p360 = por %p358, %p359
      %p361 = scmp.ne.s32.totalorder %s353, %s355
      %p362 = scmp.eq.s32.totalorder %s30, 1
      %p363 = por %p361, %p362
      %p364 = scmp.ne.s32.totalorder %s355, %s356
      %p365 = scmp.eq.s32.totalorder %s30, 0
      %p366 = por %p364, %p365
      %p367 = scmp.ne.s32.totalorder %s355, %s356
      %p368 = scmp.eq.s32.totalorder %s31, 1
      %p369 = por %p367, %p368
      %p371 = scmp.ne.s32.totalorder %s356, %s370
      %p372 = scmp.eq.s32.totalorder %s31, 0
      %p373 = por %p371, %p372
      %s374 = ssub.s32 %s25, %s32
      %p375 = scmp.eq.s32.totalorder %s374, 0
      %s377 = sadd.s32 %s376, 1
      %s378 = scalar_select %p375, %s376, %s377
      %p381 = pneg %p375
      %p382 = scmp.eq.s32.totalorder %s25, 1
      %p383 = por %p381, %p382
      %p384 = scmp.ne.s32.totalorder %s376, %s379
      %p385 = scmp.eq.s32.totalorder %s25, 0
      %p386 = por %p384, %p385
      %p387 = scmp.ne.s32.totalorder %s376, %s379
      %p388 = scmp.eq.s32.totalorder %s30, 1
      %p389 = por %p387, %p388
      %p390 = scmp.ne.s32.totalorder %s379, %s380
      %p391 = scmp.eq.s32.totalorder %s30, 0
      %p392 = por %p390, %p391
      %p393 = scmp.ne.s32.totalorder %s379, %s380
      %p394 = scmp.eq.s32.totalorder %s31, 1
      %p395 = por %p393, %p394
      %p397 = scmp.ne.s32.totalorder %s380, %s396
      %p398 = scmp.eq.s32.totalorder %s31, 0
      %p399 = por %p397, %p398
      %p400 = scmp.le.s32.totalorder 1, %s25
      %p401 = scmp.lt.s32.totalorder %s25, 3
      %p402 = pnand %p400, %p401
      %p403 = pneg %p402
      // Predicated region
      $region9: #{resnet_seghead_forward.1} parent=5 // pred_check
        _
      $region10: #{resnet_seghead_forward.1} parent=5 // pred_check_branch
        %405 = sbr.rel (%p402) target = $region12
      $region11: #{resnet_seghead_forward.1} parent=5 // pred_region
        %s406 = ssub.s32 %s25, 1
        // Predicated region
        $region13: #{resnet_seghead_forward.1} parent=11 // pred_check
          %p407 = pneg %p72
        $region14: #{resnet_seghead_forward.1} parent=11 // pred_check_branch
          %409 = sbr.rel (%p407) target = $region16
        $region15: #{resnet_seghead_forward.1} parent=11 // pred_region
          _
        $region16: #{resnet_seghead_forward.1} parent=11 // pred_fallthru
          _
        // Predicated region
        $region17: #{resnet_seghead_forward.1} parent=11 // pred_check
          %p410 = pneg %p93
        $region18: #{resnet_seghead_forward.1} parent=11 // pred_check_branch
          %412 = sbr.rel (%p410) target = $region20
        $region19: #{resnet_seghead_forward.1} parent=11 // pred_region
          _
        $region20: #{resnet_seghead_forward.1} parent=11 // pred_fallthru
          _
        // Predicated region
        $region21: #{resnet_seghead_forward.1} parent=11 // pred_check
          %p413 = pneg %p114
        $region22: #{resnet_seghead_forward.1} parent=11 // pred_check_branch
          %415 = sbr.rel (%p413) target = $region24
        $region23: #{resnet_seghead_forward.1} parent=11 // pred_region
          _
        $region24: #{resnet_seghead_forward.1} parent=11 // pred_fallthru
          _
        // Predicated region
        $region25: #{resnet_seghead_forward.1} parent=11 // pred_check
          %p416 = pneg %p135
        $region26: #{resnet_seghead_forward.1} parent=11 // pred_check_branch
          %418 = sbr.rel (%p416) target = $region28
        $region27: #{resnet_seghead_forward.1} parent=11 // pred_region
          _
        $region28: #{resnet_seghead_forward.1} parent=11 // pred_fallthru
          _
        // Predicated region
        $region29: #{resnet_seghead_forward.1} parent=11 // pred_check
          %p419 = pneg %p156
        $region30: #{resnet_seghead_forward.1} parent=11 // pred_check_branch
          %421 = sbr.rel (%p419) target = $region32
        $region31: #{resnet_seghead_forward.1} parent=11 // pred_region
          _
        $region32: #{resnet_seghead_forward.1} parent=11 // pred_fallthru
          _
        // Predicated region
        $region33: #{resnet_seghead_forward.1} parent=11 // pred_check
          %p422 = pneg %p177
        $region34: #{resnet_seghead_forward.1} parent=11 // pred_check_branch
          %424 = sbr.rel (%p422) target = $region36
        $region35: #{resnet_seghead_forward.1} parent=11 // pred_region
          _
        $region36: #{resnet_seghead_forward.1} parent=11 // pred_fallthru
          _
        // Predicated region
        $region37: #{resnet_seghead_forward.1} parent=11 // pred_check
          %p425 = pneg %p198
        $region38: #{resnet_seghead_forward.1} parent=11 // pred_check_branch
          %427 = sbr.rel (%p425) target = $region40
        $region39: #{resnet_seghead_forward.1} parent=11 // pred_region
          _
        $region40: #{resnet_seghead_forward.1} parent=11 // pred_fallthru
          _
        // Predicated region
        $region41: #{resnet_seghead_forward.1} parent=11 // pred_check
          %p428 = pneg %p219
        $region42: #{resnet_seghead_forward.1} parent=11 // pred_check_branch
          %430 = sbr.rel (%p428) target = $region44
        $region43: #{resnet_seghead_forward.1} parent=11 // pred_region
          _
        $region44: #{resnet_seghead_forward.1} parent=11 // pred_fallthru
          _
        // Predicated region
        $region45: #{resnet_seghead_forward.1} parent=11 // pred_check
          %p431 = pneg %p240
        $region46: #{resnet_seghead_forward.1} parent=11 // pred_check_branch
          %433 = sbr.rel (%p431) target = $region48
        $region47: #{resnet_seghead_forward.1} parent=11 // pred_region
          _
        $region48: #{resnet_seghead_forward.1} parent=11 // pred_fallthru
          _
        // Predicated region
        $region49: #{resnet_seghead_forward.1} parent=11 // pred_check
          %p434 = pneg %p261
        $region50: #{resnet_seghead_forward.1} parent=11 // pred_check_branch
          %436 = sbr.rel (%p434) target = $region52
        $region51: #{resnet_seghead_forward.1} parent=11 // pred_region
          _
        $region52: #{resnet_seghead_forward.1} parent=11 // pred_fallthru
          _
        // Predicated region
        $region53: #{resnet_seghead_forward.1} parent=11 // pred_check
          %p437 = pneg %p282
        $region54: #{resnet_seghead_forward.1} parent=11 // pred_check_branch
          %439 = sbr.rel (%p437) target = $region56
        $region55: #{resnet_seghead_forward.1} parent=11 // pred_region
          _
        $region56: #{resnet_seghead_forward.1} parent=11 // pred_fallthru
          _
        // Predicated region
        $region57: #{resnet_seghead_forward.1} parent=11 // pred_check
          %p440 = pneg %p303
        $region58: #{resnet_seghead_forward.1} parent=11 // pred_check_branch
          %442 = sbr.rel (%p440) target = $region60
        $region59: #{resnet_seghead_forward.1} parent=11 // pred_region
          _
        $region60: #{resnet_seghead_forward.1} parent=11 // pred_fallthru
          _
        // Predicated region
        $region61: #{resnet_seghead_forward.1} parent=11 // pred_check
          %p443 = pneg %p324
        $region62: #{resnet_seghead_forward.1} parent=11 // pred_check_branch
          %445 = sbr.rel (%p443) target = $region64
        $region63: #{resnet_seghead_forward.1} parent=11 // pred_region
          _
        $region64: #{resnet_seghead_forward.1} parent=11 // pred_fallthru
          _
        // Predicated region
        $region65: #{resnet_seghead_forward.1} parent=11 // pred_check
          %p446 = pneg %p345
        $region66: #{resnet_seghead_forward.1} parent=11 // pred_check_branch
          %448 = sbr.rel (%p446) target = $region68
        $region67: #{resnet_seghead_forward.1} parent=11 // pred_region
          _
        $region68: #{resnet_seghead_forward.1} parent=11 // pred_fallthru
          _
        // Predicated region
        $region69: #{resnet_seghead_forward.1} parent=11 // pred_check
          %p449 = pneg %p366
        $region70: #{resnet_seghead_forward.1} parent=11 // pred_check_branch
          %451 = sbr.rel (%p449) target = $region72
        $region71: #{resnet_seghead_forward.1} parent=11 // pred_region
          _
        $region72: #{resnet_seghead_forward.1} parent=11 // pred_fallthru
          _
      $region12: #{resnet_seghead_forward.1} parent=5 // pred_fallthru
        _
      %p452 = scmp.lt.s32.totalorder %s25, 2
      // Predicated region
      $region73: #{resnet_seghead_forward.1} parent=5 // pred_check
        %p453 = pneg %p452
      $region74: #{resnet_seghead_forward.1} parent=5 // pred_check_branch
        %455 = sbr.rel (%p453) target = $region76
      $region75: #{resnet_seghead_forward.1} parent=5 // pred_region
        // Predicated region
        $region77: #{resnet_seghead_forward.1} parent=75 // pred_check
          %p456 = pneg %p45
        $region78: #{resnet_seghead_forward.1} parent=75 // pred_check_branch
          %458 = sbr.rel (%p456) target = $region80
        $region79: #{resnet_seghead_forward.1} parent=75 // pred_region
          %p459 = scmp.lt.s32.totalorder %s25, 1
          %s460 = scalar_select %p459, %s25, 1
          %s461 = smul.addr %s460, 4
          %s462 = smul.addr %s461, 8
          %s463 = scalar_lea.vmem %s0, %s462
        $region80: #{resnet_seghead_forward.1} parent=75 // pred_fallthru
          _
      $region76: #{resnet_seghead_forward.1} parent=5 // pred_fallthru
        _
      %p464 = scmp.le.s32.totalorder 1, %s25
      %p465 = scmp.lt.s32.totalorder %s25, 3
      %p466 = pnand %p464, %p465
      %p467 = pneg %p466
      // Predicated region
      $region81: #{resnet_seghead_forward.1} parent=5 // pred_check
        _
      $region82: #{resnet_seghead_forward.1} parent=5 // pred_check_branch
        %469 = sbr.rel (%p466) target = $region84
      $region83: #{resnet_seghead_forward.1} parent=5 // pred_region
        %s470 = ssub.s32 %s25, 1
        %p471 = scmp.lt.s32.totalorder %s30, 1
        %s472 = scalar_select %p471, %s30, 1
        %s473 = smul.addr %s472, 4
        %s474 = smul.addr %s473, 8
        %s475 = scalar_lea.vmem %s0, %s474
        %p476 = pneg %p51
        %p477 = pneg %p48
        %p478 = pneg %p72
        %p479 = pneg %p69
        %p480 = pneg %p93
        %p481 = pneg %p90
        %p482 = pneg %p114
        %p483 = pneg %p111
        %p484 = pneg %p135
        %p485 = pneg %p132
        %p486 = pneg %p156
        %p487 = pneg %p153
        %p488 = pneg %p177
        %p489 = pneg %p174
        %p490 = pneg %p198
        %p491 = pneg %p195
        %p492 = pneg %p219
        %p493 = pneg %p216
        %p494 = pneg %p240
        %p495 = pneg %p237
        %p496 = pneg %p261
        %p497 = pneg %p258
        %p498 = pneg %p282
        %p499 = pneg %p279
        %p500 = pneg %p303
        %p501 = pneg %p300
        %p502 = pneg %p324
        %p503 = pneg %p321
        %p504 = pneg %p345
        %p505 = pneg %p342
        %p506 = pneg %p366
        %p507 = pneg %p363
        %p508 = pneg %p392
        %p509 = pneg %p389
        %s510 = sand.u32 %s379, 1
        %s511 = scalar_lea.sflag [#allocation3], %s510
        %s512 = sand.u32 %s379, 1
        %s513 = smul.addr %s512, 1792
        %s514 = scalar_lea.vmem [#allocation2], %s513
        %p515 = scmp.lt.s32.totalorder %s30, 1
        %s516 = scalar_select %p515, %s30, 1
        %s517 = smul.addr %s516, 4
        %s518 = smul.addr %s517, 8
        %s519 = scalar_lea.vmem %s0, %s518
        %v520 = vld [vmem:[%s519] sm:$0xff]
        %v521 = vld [vmem:[%s519 + $0x8] sm:$0xff]
        %v522 = vld [vmem:[%s519 + $0x10] sm:$0xff]
        %v523 = vld [vmem:[%s519 + $0x18] sm:$0xff]
        %v524 = vld [vmem:[%s1] sm:$0xff]
        %v525 = vld [vmem:[%s1 + $0x8] sm:$0xff]
        %vm526 = vcmask 261120
        %v528 = vsel %vm526, %v524, 0
        %v531 = vsel %vm526, %v525, 0
        %533 = vmatprep.subr.mxu0 0.0
        %534 = vmatpush1.msra.mxu0 %v520
        %535 = vmatprep.subr.mxu0 0.0
        %536 = vmatpush1.msra.mxu0 %v521
        %537 = vmatprep.subr.mxu0 0.0
        %538 = vmatpush1.msra.mxu0 %v522
        %539 = vmatprep.subr.mxu0 0.0
        %540 = vmatpush1.msra.mxu0 %v523
        %541 = vmatprep.subr.mxu0 0.0
        %542 = vmatpush1.msra.mxu0 0.0
        %543 = vmatprep.subr.mxu0 0.0
        %544 = vmatpush1.msra.mxu0 0.0
        %545 = vmatprep.subr.mxu0 0.0
        %546 = vmatpush1.msra.mxu0 0.0
        %547 = vmatprep.subr.mxu0 0.0
        %548 = vmatpush1.msra.mxu0 0.0
        %549 = vmatprep.subr.mxu0 0.0
        %550 = vmatpush1.msra.mxu0 0.0
        %551 = vmatprep.subr.mxu0 0.0
        %552 = vmatpush1.msra.mxu0 0.0
        %553 = vmatprep.subr.mxu0 0.0
        %554 = vmatpush1.msra.mxu0 0.0
        %555 = vmatprep.subr.mxu0 0.0
        %556 = vmatpush1.msra.mxu0 0.0
        %557 = vmatprep.subr.mxu0 0.0
        %558 = vmatpush1.msra.mxu0 0.0
        %559 = vmatprep.subr.mxu0 0.0
        %560 = vmatpush1.msra.mxu0 0.0
        %561 = vmatprep.subr.mxu0 0.0
        %562 = vmatpush1.msra.mxu0 0.0
        %563 = vmatprep.subr.mxu0 0.0
        %564 = vmatpush1.msra.mxu0 0.0
        %565 = vmatprep.subr.mxu0 0.0
        %566 = vmatpush1.msra.mxu0 0.0
        %567 = vmatprep.subr.mxu0 0.0
        %568 = vmatpush1.msra.mxu0 0.0
        %569 = vmatprep.subr.mxu0 0.0
        %570 = vmatpush1.msra.mxu0 0.0
        %571 = vmatprep.subr.mxu0 0.0
        %572 = vmatpush1.msra.mxu0 0.0
        %573 = vmatprep.subr.mxu0 0.0
        %574 = vmatpush1.msra.mxu0 0.0
        %575 = vmatprep.subr.mxu0 0.0
        %576 = vmatpush1.msra.mxu0 0.0
        %577 = vmatprep.subr.mxu0 0.0
        %578 = vmatpush1.msra.mxu0 0.0
        %579 = vmatprep.subr.mxu0 0.0
        %580 = vmatpush1.msra.mxu0 0.0
        %581 = vmatprep.subr.mxu0 0.0
        %582 = vmatpush1.msra.mxu0 0.0
        %583 = vmatprep.subr.mxu0 0.0
        %584 = vmatpush1.msra.mxu0 0.0
        %585 = vmatprep.subr.mxu0 0.0
        %586 = vmatpush1.msra.mxu0 0.0
        %587 = vmatprep.subr.mxu0 0.0
        %588 = vmatpush1.msra.mxu0 0.0
        %589 = vmatprep.subr.mxu0 0.0
        %590 = vmatpush1.msra.mxu0 0.0
        %591 = vmatprep.subr.mxu0 0.0
        %592 = vmatpush1.msra.mxu0 0.0
        %593 = vmatprep.subr.mxu0 0.0
        %594 = vmatpush1.msra.mxu0 0.0
        %595 = vmatprep.subr.mxu0 0.0
        %596 = vmatpush1.msra.mxu0 0.0
        %597 = vmatprep.mubr.f32.mxu0 0.0
        %598 = vmatmul.mubr.f32.gmra.mrb[0].mxu0 %v528
        %v599 = vpop.f32.mrb[0].mxu0
        %v600 = vadd.f32 0.0, %v599
        %v601 = vpop.f32.mrb[0].mxu0
        %602 = vmatprep.mubr.f32.mxu0 0.0
        %603 = vmatmul.mubr.f32.gmra.mrb[0].mxu0 %v531
        %v604 = vpop.f32.mrb[0].mxu0
        %v605 = vadd.f32 0.0, %v604
        %v606 = vpop.f32.mrb[0].mxu0
        %607 = vdwg.mxu0
        %v608 = vld [vmem:[%s2] sm:$0xff]
        %v609 = vld [vmem:[%s2 + $0x8] sm:$0xff]
        %v610 = vld [vmem:[%s2 + $0x10] sm:$0xff]
        %v611 = vld [vmem:[%s2 + $0x18] sm:$0xff]
        %v612 = vld [vmem:[%s2 + $0x20] sm:$0xff]
        %v613 = vld [vmem:[%s2 + $0x28] sm:$0xff]
        %v614 = vld [vmem:[%s2 + $0x30] sm:$0xff]
        %v615 = vld [vmem:[%s2 + $0x38] sm:$0xff]
        %v616 = vld [vmem:[%s2 + $0x40] sm:$0xff]
        %v617 = vld [vmem:[%s2 + $0x48] sm:$0xff]
        %v618 = vld [vmem:[%s2 + $0x50] sm:$0xff]
        %v619 = vld [vmem:[%s2 + $0x58] sm:$0xff]
        %s620 = scalar_lea.vmem %s1, 16
        %v621 = vld [vmem:[%s620] sm:$0xff]
        %v622 = vld [vmem:[%s620 + $0x8] sm:$0xff]
        %v624 = vsel %vm526, %v621, 0
        %v627 = vsel %vm526, %v622, 0
        %629 = vmatprep.subr.mxu0 0.0
        %630 = vmatpush1.msra.mxu0 %v520
        %631 = vmatprep.subr.mxu0 0.0
        %632 = vmatpush1.msra.mxu0 %v521
        %633 = vmatprep.subr.mxu0 0.0
        %634 = vmatpush1.msra.mxu0 %v522
        %635 = vmatprep.subr.mxu0 0.0
        %636 = vmatpush1.msra.mxu0 %v523
        %637 = vmatprep.subr.mxu0 0.0
        %638 = vmatpush1.msra.mxu0 0.0
        %639 = vmatprep.subr.mxu0 0.0
        %640 = vmatpush1.msra.mxu0 0.0
        %641 = vmatprep.subr.mxu0 0.0
        %642 = vmatpush1.msra.mxu0 0.0
        %643 = vmatprep.subr.mxu0 0.0
        %644 = vmatpush1.msra.mxu0 0.0
        %645 = vmatprep.subr.mxu0 0.0
        %646 = vmatpush1.msra.mxu0 0.0
        %647 = vmatprep.subr.mxu0 0.0
        %648 = vmatpush1.msra.mxu0 0.0
        %649 = vmatprep.subr.mxu0 0.0
        %650 = vmatpush1.msra.mxu0 0.0
        %651 = vmatprep.subr.mxu0 0.0
        %652 = vmatpush1.msra.mxu0 0.0
        %653 = vmatprep.subr.mxu0 0.0
        %654 = vmatpush1.msra.mxu0 0.0
        %655 = vmatprep.subr.mxu0 0.0
        %656 = vmatpush1.msra.mxu0 0.0
        %657 = vmatprep.subr.mxu0 0.0
        %658 = vmatpush1.msra.mxu0 0.0
        %659 = vmatprep.subr.mxu0 0.0
        %660 = vmatpush1.msra.mxu0 0.0
        %661 = vmatprep.subr.mxu0 0.0
        %662 = vmatpush1.msra.mxu0 0.0
        %663 = vmatprep.subr.mxu0 0.0
        %664 = vmatpush1.msra.mxu0 0.0
        %665 = vmatprep.subr.mxu0 0.0
        %666 = vmatpush1.msra.mxu0 0.0
        %667 = vmatprep.subr.mxu0 0.0
        %668 = vmatpush1.msra.mxu0 0.0
        %669 = vmatprep.subr.mxu0 0.0
        %670 = vmatpush1.msra.mxu0 0.0
        %671 = vmatprep.subr.mxu0 0.0
        %672 = vmatpush1.msra.mxu0 0.0
        %673 = vmatprep.subr.mxu0 0.0
        %674 = vmatpush1.msra.mxu0 0.0
        %675 = vmatprep.subr.mxu0 0.0
        %676 = vmatpush1.msra.mxu0 0.0
        %677 = vmatprep.subr.mxu0 0.0
        %678 = vmatpush1.msra.mxu0 0.0
        %679 = vmatprep.subr.mxu0 0.0
        %680 = vmatpush1.msra.mxu0 0.0
        %681 = vmatprep.subr.mxu0 0.0
        %682 = vmatpush1.msra.mxu0 0.0
        %683 = vmatprep.subr.mxu0 0.0
        %684 = vmatpush1.msra.mxu0 0.0
        %685 = vmatprep.subr.mxu0 0.0
        %686 = vmatpush1.msra.mxu0 0.0
        %687 = vmatprep.subr.mxu0 0.0
        %688 = vmatpush1.msra.mxu0 0.0
        %689 = vmatprep.subr.mxu0 0.0
        %690 = vmatpush1.msra.mxu0 0.0
        %691 = vmatprep.subr.mxu0 0.0
        %692 = vmatpush1.msra.mxu0 0.0
        %693 = vmatprep.mubr.f32.mxu0 0.0
        %694 = vmatmul.mubr.f32.gmra.mrb[0].mxu0 %v624
        %v695 = vpop.f32.mrb[0].mxu0
        %v696 = vadd.f32 0.0, %v695
        %v697 = vpop.f32.mrb[0].mxu0
        %698 = vmatprep.mubr.f32.mxu0 0.0
        %699 = vmatmul.mubr.f32.gmra.mrb[0].mxu0 %v627
        %v700 = vpop.f32.mrb[0].mxu0
        %v701 = vadd.f32 0.0, %v700
        %v702 = vpop.f32.mrb[0].mxu0
        %703 = vdwg.mxu0
        %s704 = scalar_lea.vmem %s2, 96
        %v705 = vld [vmem:[%s704] sm:$0xff]
        %v706 = vld [vmem:[%s704 + $0x8] sm:$0xff]
        %v707 = vld [vmem:[%s704 + $0x10] sm:$0xff]
        %v708 = vld [vmem:[%s704 + $0x18] sm:$0xff]
        %v709 = vld [vmem:[%s704 + $0x20] sm:$0xff]
        %v710 = vld [vmem:[%s704 + $0x28] sm:$0xff]
        %v711 = vld [vmem:[%s704 + $0x30] sm:$0xff]
        %v712 = vld [vmem:[%s704 + $0x38] sm:$0xff]
        %v713 = vld [vmem:[%s704 + $0x40] sm:$0xff]
        %v714 = vld [vmem:[%s704 + $0x48] sm:$0xff]
        %v715 = vld [vmem:[%s704 + $0x50] sm:$0xff]
        %v716 = vld [vmem:[%s704 + $0x58] sm:$0xff]
        %vm717 = vcmask 785408
        %v719 = vsel %vm717, %v696, 0
        %v722 = vsel %vm717, %v701, 0
        %724 = vmatprep.subr.mxu0 0.0
        %725 = vmatpush1.msra.mxu0 %v705
        %726 = vmatprep.subr.mxu0 0.0
        %727 = vmatpush1.msra.mxu0 %v706
        %728 = vmatprep.subr.mxu0 0.0
        %729 = vmatpush1.msra.mxu0 %v707
        %730 = vmatprep.subr.mxu0 0.0
        %731 = vmatpush1.msra.mxu0 %v708
        %732 = vmatprep.subr.mxu0 0.0
        %733 = vmatpush1.msra.mxu0 %v709
        %734 = vmatprep.subr.mxu0 0.0
        %735 = vmatpush1.msra.mxu0 %v710
        %736 = vmatprep.subr.mxu0 0.0
        %737 = vmatpush1.msra.mxu0 %v711
        %738 = vmatprep.subr.mxu0 0.0
        %739 = vmatpush1.msra.mxu0 %v712
        %740 = vmatprep.subr.mxu0 0.0
        %741 = vmatpush1.msra.mxu0 %v713
        %742 = vmatprep.subr.mxu0 0.0
        %743 = vmatpush1.msra.mxu0 %v714
        %744 = vmatprep.subr.mxu0 0.0
        %745 = vmatpush1.msra.mxu0 %v715
        %746 = vmatprep.subr.mxu0 0.0
        %747 = vmatpush1.msra.mxu0 %v716
        %748 = vmatprep.subr.mxu0 0.0
        %749 = vmatpush1.msra.mxu0 0.0
        %750 = vmatprep.subr.mxu0 0.0
        %751 = vmatpush1.msra.mxu0 0.0
        %752 = vmatprep.subr.mxu0 0.0
        %753 = vmatpush1.msra.mxu0 0.0
        %754 = vmatprep.subr.mxu0 0.0
        %755 = vmatpush1.msra.mxu0 0.0
        %756 = vmatprep.subr.mxu0 0.0
        %757 = vmatpush1.msra.mxu0 0.0
        %758 = vmatprep.subr.mxu0 0.0
        %759 = vmatpush1.msra.mxu0 0.0
        %760 = vmatprep.subr.mxu0 0.0
        %761 = vmatpush1.msra.mxu0 0.0
        %762 = vmatprep.subr.mxu0 0.0
        %763 = vmatpush1.msra.mxu0 0.0
        %764 = vmatprep.subr.mxu0 0.0
        %765 = vmatpush1.msra.mxu0 0.0
        %766 = vmatprep.subr.mxu0 0.0
        %767 = vmatpush1.msra.mxu0 0.0
        %768 = vmatprep.subr.mxu0 0.0
        %769 = vmatpush1.msra.mxu0 0.0
        %770 = vmatprep.subr.mxu0 0.0
        %771 = vmatpush1.msra.mxu0 0.0
        %772 = vmatprep.subr.mxu0 0.0
        %773 = vmatpush1.msra.mxu0 0.0
        %774 = vmatprep.subr.mxu0 0.0
        %775 = vmatpush1.msra.mxu0 0.0
        %776 = vmatprep.subr.mxu0 0.0
        %777 = vmatpush1.msra.mxu0 0.0
        %778 = vmatprep.subr.mxu0 0.0
        %779 = vmatpush1.msra.mxu0 0.0
        %780 = vmatprep.subr.mxu0 0.0
        %781 = vmatpush1.msra.mxu0 0.0
        %782 = vmatprep.subr.mxu0 0.0
        %783 = vmatpush1.msra.mxu0 0.0
        %784 = vmatprep.subr.mxu0 0.0
        %785 = vmatpush1.msra.mxu0 0.0
        %786 = vmatprep.subr.mxu0 0.0
        %787 = vmatpush1.msra.mxu0 0.0
        %788 = vmatprep.mubr.f32.mxu0 0.0
        %789 = vmatmul.mubr.f32.gmra.mrb[0].mxu0 %v719
        %v790 = vpop.f32.mrb[0].mxu0
        %v791 = vadd.f32 0.0, %v790
        %v792 = vpop.f32.mrb[0].mxu0
        %793 = vmatprep.mubr.f32.mxu0 0.0
        %794 = vmatmul.mubr.f32.gmra.mrb[0].mxu0 %v722
        %v795 = vpop.f32.mrb[0].mxu0
        %v796 = vadd.f32 0.0, %v795
        %v797 = vpop.f32.mrb[0].mxu0
        %798 = vdwg.mxu0
        %v800 = vsel %vm717, %v600, 0
        %v803 = vsel %vm717, %v605, 0
        %805 = vmatprep.subr.mxu0 0.0
        %806 = vmatpush1.msra.mxu0 %v608
        %807 = vmatprep.subr.mxu0 0.0
        %808 = vmatpush1.msra.mxu0 %v609
        %809 = vmatprep.subr.mxu0 0.0
        %810 = vmatpush1.msra.mxu0 %v610
        %811 = vmatprep.subr.mxu0 0.0
        %812 = vmatpush1.msra.mxu0 %v611
        %813 = vmatprep.subr.mxu0 0.0
        %814 = vmatpush1.msra.mxu0 %v612
        %815 = vmatprep.subr.mxu0 0.0
        %816 = vmatpush1.msra.mxu0 %v613
        %817 = vmatprep.subr.mxu0 0.0
        %818 = vmatpush1.msra.mxu0 %v614
        %819 = vmatprep.subr.mxu0 0.0
        %820 = vmatpush1.msra.mxu0 %v615
        %821 = vmatprep.subr.mxu0 0.0
        %822 = vmatpush1.msra.mxu0 %v616
        %823 = vmatprep.subr.mxu0 0.0
        %824 = vmatpush1.msra.mxu0 %v617
        %825 = vmatprep.subr.mxu0 0.0
        %826 = vmatpush1.msra.mxu0 %v618
        %827 = vmatprep.subr.mxu0 0.0
        %828 = vmatpush1.msra.mxu0 %v619
        %829 = vmatprep.subr.mxu0 0.0
        %830 = vmatpush1.msra.mxu0 0.0
        %831 = vmatprep.subr.mxu0 0.0
        %832 = vmatpush1.msra.mxu0 0.0
        %833 = vmatprep.subr.mxu0 0.0
        %834 = vmatpush1.msra.mxu0 0.0
        %835 = vmatprep.subr.mxu0 0.0
        %836 = vmatpush1.msra.mxu0 0.0
        %837 = vmatprep.subr.mxu0 0.0
        %838 = vmatpush1.msra.mxu0 0.0
        %839 = vmatprep.subr.mxu0 0.0
        %840 = vmatpush1.msra.mxu0 0.0
        %841 = vmatprep.subr.mxu0 0.0
        %842 = vmatpush1.msra.mxu0 0.0
        %843 = vmatprep.subr.mxu0 0.0
        %844 = vmatpush1.msra.mxu0 0.0
        %845 = vmatprep.subr.mxu0 0.0
        %846 = vmatpush1.msra.mxu0 0.0
        %847 = vmatprep.subr.mxu0 0.0
        %848 = vmatpush1.msra.mxu0 0.0
        %849 = vmatprep.subr.mxu0 0.0
        %850 = vmatpush1.msra.mxu0 0.0
        %851 = vmatprep.subr.mxu0 0.0
        %852 = vmatpush1.msra.mxu0 0.0
        %853 = vmatprep.subr.mxu0 0.0
        %854 = vmatpush1.msra.mxu0 0.0
        %855 = vmatprep.subr.mxu0 0.0
        %856 = vmatpush1.msra.mxu0 0.0
        %857 = vmatprep.subr.mxu0 0.0
        %858 = vmatpush1.msra.mxu0 0.0
        %859 = vmatprep.subr.mxu0 0.0
        %860 = vmatpush1.msra.mxu0 0.0
        %861 = vmatprep.subr.mxu0 0.0
        %862 = vmatpush1.msra.mxu0 0.0
        %863 = vmatprep.subr.mxu0 0.0
        %864 = vmatpush1.msra.mxu0 0.0
        %865 = vmatprep.subr.mxu0 0.0
        %866 = vmatpush1.msra.mxu0 0.0
        %867 = vmatprep.subr.mxu0 0.0
        %868 = vmatpush1.msra.mxu0 0.0
        %869 = vmatprep.mubr.f32.mxu0 0.0
        %870 = vmatmul.mubr.f32.gmra.mrb[0].mxu0 %v800
        %v871 = vpop.f32.mrb[0].mxu0
        %v872 = vadd.f32 %v791, %v871
        %v873 = vpop.f32.mrb[0].mxu0
        %874 = vmatprep.mubr.f32.mxu0 0.0
        %875 = vmatmul.mubr.f32.gmra.mrb[0].mxu0 %v803
        %v876 = vpop.f32.mrb[0].mxu0
        %v877 = vadd.f32 %v796, %v876
        %v878 = vpop.f32.mrb[0].mxu0
        %879 = vdwg.mxu0
        %s880 = scalar_lea.vmem %s1, 32
        %v881 = vld [vmem:[%s880] sm:$0xff]
        %v882 = vld [vmem:[%s880 + $0x8] sm:$0xff]
        %v884 = vsel %vm526, %v881, 0
        %v887 = vsel %vm526, %v882, 0
        %889 = vmatprep.subr.mxu0 0.0
        %890 = vmatpush1.msra.mxu0 %v520
        %891 = vmatprep.subr.mxu0 0.0
        %892 = vmatpush1.msra.mxu0 %v521
        %893 = vmatprep.subr.mxu0 0.0
        %894 = vmatpush1.msra.mxu0 %v522
        %895 = vmatprep.subr.mxu0 0.0
        %896 = vmatpush1.msra.mxu0 %v523
        %897 = vmatprep.subr.mxu0 0.0
        %898 = vmatpush1.msra.mxu0 0.0
        %899 = vmatprep.subr.mxu0 0.0
        %900 = vmatpush1.msra.mxu0 0.0
        %901 = vmatprep.subr.mxu0 0.0
        %902 = vmatpush1.msra.mxu0 0.0
        %903 = vmatprep.subr.mxu0 0.0
        %904 = vmatpush1.msra.mxu0 0.0
        %905 = vmatprep.subr.mxu0 0.0
        %906 = vmatpush1.msra.mxu0 0.0
        %907 = vmatprep.subr.mxu0 0.0
        %908 = vmatpush1.msra.mxu0 0.0
        %909 = vmatprep.subr.mxu0 0.0
        %910 = vmatpush1.msra.mxu0 0.0
        %911 = vmatprep.subr.mxu0 0.0
        %912 = vmatpush1.msra.mxu0 0.0
        %913 = vmatprep.subr.mxu0 0.0
        %914 = vmatpush1.msra.mxu0 0.0
        %915 = vmatprep.subr.mxu0 0.0
        %916 = vmatpush1.msra.mxu0 0.0
        %917 = vmatprep.subr.mxu0 0.0
        %918 = vmatpush1.msra.mxu0 0.0
        %919 = vmatprep.subr.mxu0 0.0
        %920 = vmatpush1.msra.mxu0 0.0
        %921 = vmatprep.subr.mxu0 0.0
        %922 = vmatpush1.msra.mxu0 0.0
        %923 = vmatprep.subr.mxu0 0.0
        %924 = vmatpush1.msra.mxu0 0.0
        %925 = vmatprep.subr.mxu0 0.0
        %926 = vmatpush1.msra.mxu0 0.0
        %927 = vmatprep.subr.mxu0 0.0
        %928 = vmatpush1.msra.mxu0 0.0
        %929 = vmatprep.subr.mxu0 0.0
        %930 = vmatpush1.msra.mxu0 0.0
        %931 = vmatprep.subr.mxu0 0.0
        %932 = vmatpush1.msra.mxu0 0.0
        %933 = vmatprep.subr.mxu0 0.0
        %934 = vmatpush1.msra.mxu0 0.0
        %935 = vmatprep.subr.mxu0 0.0
        %936 = vmatpush1.msra.mxu0 0.0
        %937 = vmatprep.subr.mxu0 0.0
        %938 = vmatpush1.msra.mxu0 0.0
        %939 = vmatprep.subr.mxu0 0.0
        %940 = vmatpush1.msra.mxu0 0.0
        %941 = vmatprep.subr.mxu0 0.0
        %942 = vmatpush1.msra.mxu0 0.0
        %943 = vmatprep.subr.mxu0 0.0
        %944 = vmatpush1.msra.mxu0 0.0
        %945 = vmatprep.subr.mxu0 0.0
        %946 = vmatpush1.msra.mxu0 0.0
        %947 = vmatprep.subr.mxu0 0.0
        %948 = vmatpush1.msra.mxu0 0.0
        %949 = vmatprep.subr.mxu0 0.0
        %950 = vmatpush1.msra.mxu0 0.0
        %951 = vmatprep.subr.mxu0 0.0
        %952 = vmatpush1.msra.mxu0 0.0
        %953 = vmatprep.mubr.f32.mxu0 0.0
        %954 = vmatmul.mubr.f32.gmra.mrb[0].mxu0 %v884
        %v955 = vpop.f32.mrb[0].mxu0
        %v956 = vadd.f32 0.0, %v955
        %v957 = vpop.f32.mrb[0].mxu0
        %958 = vmatprep.mubr.f32.mxu0 0.0
        %959 = vmatmul.mubr.f32.gmra.mrb[0].mxu0 %v887
        %v960 = vpop.f32.mrb[0].mxu0
        %v961 = vadd.f32 0.0, %v960
        %v962 = vpop.f32.mrb[0].mxu0
        %963 = vdwg.mxu0
        %s964 = scalar_lea.vmem %s2, 192
        %v965 = vld [vmem:[%s964] sm:$0xff]
        %v966 = vld [vmem:[%s964 + $0x8] sm:$0xff]
        %v967 = vld [vmem:[%s964 + $0x10] sm:$0xff]
        %v968 = vld [vmem:[%s964 + $0x18] sm:$0xff]
        %v969 = vld [vmem:[%s964 + $0x20] sm:$0xff]
        %v970 = vld [vmem:[%s964 + $0x28] sm:$0xff]
        %v971 = vld [vmem:[%s964 + $0x30] sm:$0xff]
        %v972 = vld [vmem:[%s964 + $0x38] sm:$0xff]
        %v973 = vld [vmem:[%s964 + $0x40] sm:$0xff]
        %v974 = vld [vmem:[%s964 + $0x48] sm:$0xff]
        %v975 = vld [vmem:[%s964 + $0x50] sm:$0xff]
        %v976 = vld [vmem:[%s964 + $0x58] sm:$0xff]
        %v978 = vsel %vm717, %v956, 0
        %v981 = vsel %vm717, %v961, 0
        %983 = vmatprep.subr.mxu0 0.0
        %984 = vmatpush1.msra.mxu0 %v965
        %985 = vmatprep.subr.mxu0 0.0
        %986 = vmatpush1.msra.mxu0 %v966
        %987 = vmatprep.subr.mxu0 0.0
        %988 = vmatpush1.msra.mxu0 %v967
        %989 = vmatprep.subr.mxu0 0.0
        %990 = vmatpush1.msra.mxu0 %v968
        %991 = vmatprep.subr.mxu0 0.0
        %992 = vmatpush1.msra.mxu0 %v969
        %993 = vmatprep.subr.mxu0 0.0
        %994 = vmatpush1.msra.mxu0 %v970
        %995 = vmatprep.subr.mxu0 0.0
        %996 = vmatpush1.msra.mxu0 %v971
        %997 = vmatprep.subr.mxu0 0.0
        %998 = vmatpush1.msra.mxu0 %v972
        %999 = vmatprep.subr.mxu0 0.0
        %1000 = vmatpush1.msra.mxu0 %v973
        %1001 = vmatprep.subr.mxu0 0.0
        %1002 = vmatpush1.msra.mxu0 %v974
        %1003 = vmatprep.subr.mxu0 0.0
        %1004 = vmatpush1.msra.mxu0 %v975
        %1005 = vmatprep.subr.mxu0 0.0
        %1006 = vmatpush1.msra.mxu0 %v976
        %1007 = vmatprep.subr.mxu0 0.0
        %1008 = vmatpush1.msra.mxu0 0.0
        %1009 = vmatprep.subr.mxu0 0.0
        %1010 = vmatpush1.msra.mxu0 0.0
        %1011 = vmatprep.subr.mxu0 0.0
        %1012 = vmatpush1.msra.mxu0 0.0
        %1013 = vmatprep.subr.mxu0 0.0
        %1014 = vmatpush1.msra.mxu0 0.0
        %1015 = vmatprep.subr.mxu0 0.0
        %1016 = vmatpush1.msra.mxu0 0.0
        %1017 = vmatprep.subr.mxu0 0.0
        %1018 = vmatpush1.msra.mxu0 0.0
        %1019 = vmatprep.subr.mxu0 0.0
        %1020 = vmatpush1.msra.mxu0 0.0
        %1021 = vmatprep.subr.mxu0 0.0
        %1022 = vmatpush1.msra.mxu0 0.0
        %1023 = vmatprep.subr.mxu0 0.0
        %1024 = vmatpush1.msra.mxu0 0.0
        %1025 = vmatprep.subr.mxu0 0.0
        %1026 = vmatpush1.msra.mxu0 0.0
        %1027 = vmatprep.subr.mxu0 0.0
        %1028 = vmatpush1.msra.mxu0 0.0
        %1029 = vmatprep.subr.mxu0 0.0
        %1030 = vmatpush1.msra.mxu0 0.0
        %1031 = vmatprep.subr.mxu0 0.0
        %1032 = vmatpush1.msra.mxu0 0.0
        %1033 = vmatprep.subr.mxu0 0.0
        %1034 = vmatpush1.msra.mxu0 0.0
        %1035 = vmatprep.subr.mxu0 0.0
        %1036 = vmatpush1.msra.mxu0 0.0
        %1037 = vmatprep.subr.mxu0 0.0
        %1038 = vmatpush1.msra.mxu0 0.0
        %1039 = vmatprep.subr.mxu0 0.0
        %1040 = vmatpush1.msra.mxu0 0.0
        %1041 = vmatprep.subr.mxu0 0.0
        %1042 = vmatpush1.msra.mxu0 0.0
        %1043 = vmatprep.subr.mxu0 0.0
        %1044 = vmatpush1.msra.mxu0 0.0
        %1045 = vmatprep.subr.mxu0 0.0
        %1046 = vmatpush1.msra.mxu0 0.0
        %1047 = vmatprep.mubr.f32.mxu0 0.0
        %1048 = vmatmul.mubr.f32.gmra.mrb[0].mxu0 %v978
        %v1049 = vpop.f32.mrb[0].mxu0
        %v1050 = vadd.f32 0.0, %v1049
        %v1051 = vpop.f32.mrb[0].mxu0
        %1052 = vmatprep.mubr.f32.mxu0 0.0
        %1053 = vmatmul.mubr.f32.gmra.mrb[0].mxu0 %v981
        %v1054 = vpop.f32.mrb[0].mxu0
        %v1055 = vadd.f32 0.0, %v1054
        %v1056 = vpop.f32.mrb[0].mxu0
        %1057 = vdwg.mxu0
        %v1058 = vadd.f32 %v872, %v1050
        %v1059 = vadd.f32 %v877, %v1055
        %v1060 = vld [vmem:[%s3] sm:$0x1]
        %v1062 = vlaneseq
        %v1063 = vshrl.u32 %v1062, 7
        %v1064 = vsub.s32 0, %v1063
        %v1065 = vrot.slane %v1060, %v1064
        %v1067 = vadd.f32 %v1058, %v1065
        %v1068 = vadd.f32 %v1059, %v1065
        %v1069 = vmax.f32 %v1067, 0.0
        %v1070 = vmax.f32 %v1068, 0.0
        %v1071 = vld [vmem:[%s4] sm:$0xff]
        %v1072 = vld [vmem:[%s4 + $0x8] sm:$0xff]
        %vm1073 = vcmask 130048
        %v1075 = vsel %vm1073, %v1071, 0
        %v1078 = vsel %vm1073, %v1072, 0
        %1080 = vmatprep.subr.mxu0 0.0
        %1081 = vmatpush1.msra.mxu0 %v1069
        %1082 = vmatprep.subr.mxu0 0.0
        %1083 = vmatpush1.msra.mxu0 %v1070
        %1084 = vmatprep.subr.mxu0 0.0
        %1085 = vmatpush1.msra.mxu0 0.0
        %1086 = vmatprep.subr.mxu0 0.0
        %1087 = vmatpush1.msra.mxu0 0.0
        %1088 = vmatprep.subr.mxu0 0.0
        %1089 = vmatpush1.msra.mxu0 0.0
        %1090 = vmatprep.subr.mxu0 0.0
        %1091 = vmatpush1.msra.mxu0 0.0
        %1092 = vmatprep.subr.mxu0 0.0
        %1093 = vmatpush1.msra.mxu0 0.0
        %1094 = vmatprep.subr.mxu0 0.0
        %1095 = vmatpush1.msra.mxu0 0.0
        %1096 = vmatprep.subr.mxu0 0.0
        %1097 = vmatpush1.msra.mxu0 0.0
        %1098 = vmatprep.subr.mxu0 0.0
        %1099 = vmatpush1.msra.mxu0 0.0
        %1100 = vmatprep.subr.mxu0 0.0
        %1101 = vmatpush1.msra.mxu0 0.0
        %1102 = vmatprep.subr.mxu0 0.0
        %1103 = vmatpush1.msra.mxu0 0.0
        %1104 = vmatprep.subr.mxu0 0.0
        %1105 = vmatpush1.msra.mxu0 0.0
        %1106 = vmatprep.subr.mxu0 0.0
        %1107 = vmatpush1.msra.mxu0 0.0
        %1108 = vmatprep.subr.mxu0 0.0
        %1109 = vmatpush1.msra.mxu0 0.0
        %1110 = vmatprep.subr.mxu0 0.0
        %1111 = vmatpush1.msra.mxu0 0.0
        %1112 = vmatprep.subr.mxu0 0.0
        %1113 = vmatpush1.msra.mxu0 0.0
        %1114 = vmatprep.subr.mxu0 0.0
        %1115 = vmatpush1.msra.mxu0 0.0
        %1116 = vmatprep.subr.mxu0 0.0
        %1117 = vmatpush1.msra.mxu0 0.0
        %1118 = vmatprep.subr.mxu0 0.0
        %1119 = vmatpush1.msra.mxu0 0.0
        %1120 = vmatprep.subr.mxu0 0.0
        %1121 = vmatpush1.msra.mxu0 0.0
        %1122 = vmatprep.subr.mxu0 0.0
        %1123 = vmatpush1.msra.mxu0 0.0
        %1124 = vmatprep.subr.mxu0 0.0
        %1125 = vmatpush1.msra.mxu0 0.0
        %1126 = vmatprep.subr.mxu0 0.0
        %1127 = vmatpush1.msra.mxu0 0.0
        %1128 = vmatprep.subr.mxu0 0.0
        %1129 = vmatpush1.msra.mxu0 0.0
        %1130 = vmatprep.subr.mxu0 0.0
        %1131 = vmatpush1.msra.mxu0 0.0
        %1132 = vmatprep.subr.mxu0 0.0
        %1133 = vmatpush1.msra.mxu0 0.0
        %1134 = vmatprep.subr.mxu0 0.0
        %1135 = vmatpush1.msra.mxu0 0.0
        %1136 = vmatprep.subr.mxu0 0.0
        %1137 = vmatpush1.msra.mxu0 0.0
        %1138 = vmatprep.subr.mxu0 0.0
        %1139 = vmatpush1.msra.mxu0 0.0
        %1140 = vmatprep.subr.mxu0 0.0
        %1141 = vmatpush1.msra.mxu0 0.0
        %1142 = vmatprep.subr.mxu0 0.0
        %1143 = vmatpush1.msra.mxu0 0.0
        %1144 = vmatprep.mubr.f32.mxu0 0.0
        %1145 = vmatmul.mubr.f32.gmra.mrb[0].mxu0 %v1075
        %v1146 = vpop.f32.mrb[0].mxu0
        %v1147 = vadd.f32 0.0, %v1146
        %v1148 = vpop.f32.mrb[0].mxu0
        %1149 = vmatprep.mubr.f32.mxu0 0.0
        %1150 = vmatmul.mubr.f32.gmra.mrb[0].mxu0 %v1078
        %v1151 = vpop.f32.mrb[0].mxu0
        %v1152 = vadd.f32 0.0, %v1151
        %v1153 = vpop.f32.mrb[0].mxu0
        %1154 = vdwg.mxu0
        %v1155 = vld [vmem:[%s5] sm:$0xff]
        %v1156 = vld [vmem:[%s5 + $0x8] sm:$0xff]
        %v1157 = vld [vmem:[%s5 + $0x10] sm:$0xff]
        %v1158 = vld [vmem:[%s5 + $0x18] sm:$0xff]
        %v1159 = vld [vmem:[%s5 + $0x20] sm:$0xff]
        %v1160 = vld [vmem:[%s5 + $0x28] sm:$0xff]
        %v1161 = vld [vmem:[%s5 + $0x30] sm:$0xff]
        %v1162 = vld [vmem:[%s5 + $0x38] sm:$0xff]
        %v1163 = vld [vmem:[%s5 + $0x40] sm:$0xff]
        %v1164 = vld [vmem:[%s5 + $0x48] sm:$0xff]
        %v1165 = vld [vmem:[%s5 + $0x50] sm:$0xff]
        %v1166 = vld [vmem:[%s5 + $0x58] sm:$0xff]
        %v1167 = vld [vmem:[%s5 + $0x60] sm:$0xff]
        %v1168 = vld [vmem:[%s5 + $0x68] sm:$0xff]
        %v1169 = vld [vmem:[%s5 + $0x70] sm:$0xff]
        %v1170 = vld [vmem:[%s5 + $0x78] sm:$0xff]
        %s1171 = scalar_lea.vmem %s4, 16
        %v1172 = vld [vmem:[%s1171] sm:$0xff]
        %v1173 = vld [vmem:[%s1171 + $0x8] sm:$0xff]
        %v1175 = vsel %vm1073, %v1172, 0
        %v1178 = vsel %vm1073, %v1173, 0
        %1180 = vmatprep.subr.mxu0 0.0
        %1181 = vmatpush1.msra.mxu0 %v1069
        %1182 = vmatprep.subr.mxu0 0.0
        %1183 = vmatpush1.msra.mxu0 %v1070
        %1184 = vmatprep.subr.mxu0 0.0
        %1185 = vmatpush1.msra.mxu0 0.0
        %1186 = vmatprep.subr.mxu0 0.0
        %1187 = vmatpush1.msra.mxu0 0.0
        %1188 = vmatprep.subr.mxu0 0.0
        %1189 = vmatpush1.msra.mxu0 0.0
        %1190 = vmatprep.subr.mxu0 0.0
        %1191 = vmatpush1.msra.mxu0 0.0
        %1192 = vmatprep.subr.mxu0 0.0
        %1193 = vmatpush1.msra.mxu0 0.0
        %1194 = vmatprep.subr.mxu0 0.0
        %1195 = vmatpush1.msra.mxu0 0.0
        %1196 = vmatprep.subr.mxu0 0.0
        %1197 = vmatpush1.msra.mxu0 0.0
        %1198 = vmatprep.subr.mxu0 0.0
        %1199 = vmatpush1.msra.mxu0 0.0
        %1200 = vmatprep.subr.mxu0 0.0
        %1201 = vmatpush1.msra.mxu0 0.0
        %1202 = vmatprep.subr.mxu0 0.0
        %1203 = vmatpush1.msra.mxu0 0.0
        %1204 = vmatprep.subr.mxu0 0.0
        %1205 = vmatpush1.msra.mxu0 0.0
        %1206 = vmatprep.subr.mxu0 0.0
        %1207 = vmatpush1.msra.mxu0 0.0
        %1208 = vmatprep.subr.mxu0 0.0
        %1209 = vmatpush1.msra.mxu0 0.0
        %1210 = vmatprep.subr.mxu0 0.0
        %1211 = vmatpush1.msra.mxu0 0.0
        %1212 = vmatprep.subr.mxu0 0.0
        %1213 = vmatpush1.msra.mxu0 0.0
        %1214 = vmatprep.subr.mxu0 0.0
        %1215 = vmatpush1.msra.mxu0 0.0
        %1216 = vmatprep.subr.mxu0 0.0
        %1217 = vmatpush1.msra.mxu0 0.0
        %1218 = vmatprep.subr.mxu0 0.0
        %1219 = vmatpush1.msra.mxu0 0.0
        %1220 = vmatprep.subr.mxu0 0.0
        %1221 = vmatpush1.msra.mxu0 0.0
        %1222 = vmatprep.subr.mxu0 0.0
        %1223 = vmatpush1.msra.mxu0 0.0
        %1224 = vmatprep.subr.mxu0 0.0
        %1225 = vmatpush1.msra.mxu0 0.0
        %1226 = vmatprep.subr.mxu0 0.0
        %1227 = vmatpush1.msra.mxu0 0.0
        %1228 = vmatprep.subr.mxu0 0.0
        %1229 = vmatpush1.msra.mxu0 0.0
        %1230 = vmatprep.subr.mxu0 0.0
        %1231 = vmatpush1.msra.mxu0 0.0
        %1232 = vmatprep.subr.mxu0 0.0
        %1233 = vmatpush1.msra.mxu0 0.0
        %1234 = vmatprep.subr.mxu0 0.0
        %1235 = vmatpush1.msra.mxu0 0.0
        %1236 = vmatprep.subr.mxu0 0.0
        %1237 = vmatpush1.msra.mxu0 0.0
        %1238 = vmatprep.subr.mxu0 0.0
        %1239 = vmatpush1.msra.mxu0 0.0
        %1240 = vmatprep.subr.mxu0 0.0
        %1241 = vmatpush1.msra.mxu0 0.0
        %1242 = vmatprep.subr.mxu0 0.0
        %1243 = vmatpush1.msra.mxu0 0.0
        %1244 = vmatprep.mubr.f32.mxu0 0.0
        %1245 = vmatmul.mubr.f32.gmra.mrb[0].mxu0 %v1175
        %v1246 = vpop.f32.mrb[0].mxu0
        %v1247 = vadd.f32 0.0, %v1246
        %v1248 = vpop.f32.mrb[0].mxu0
        %1249 = vmatprep.mubr.f32.mxu0 0.0
        %1250 = vmatmul.mubr.f32.gmra.mrb[0].mxu0 %v1178
        %v1251 = vpop.f32.mrb[0].mxu0
        %v1252 = vadd.f32 0.0, %v1251
        %v1253 = vpop.f32.mrb[0].mxu0
        %1254 = vdwg.mxu0
        %s1255 = scalar_lea.vmem %s5, 128
        %v1256 = vld [vmem:[%s1255] sm:$0xff]
        %v1257 = vld [vmem:[%s1255 + $0x8] sm:$0xff]
        %v1258 = vld [vmem:[%s1255 + $0x10] sm:$0xff]
        %v1259 = vld [vmem:[%s1255 + $0x18] sm:$0xff]
        %v1260 = vld [vmem:[%s1255 + $0x20] sm:$0xff]
        %v1261 = vld [vmem:[%s1255 + $0x28] sm:$0xff]
        %v1262 = vld [vmem:[%s1255 + $0x30] sm:$0xff]
        %v1263 = vld [vmem:[%s1255 + $0x38] sm:$0xff]
        %v1264 = vld [vmem:[%s1255 + $0x40] sm:$0xff]
        %v1265 = vld [vmem:[%s1255 + $0x48] sm:$0xff]
        %v1266 = vld [vmem:[%s1255 + $0x50] sm:$0xff]
        %v1267 = vld [vmem:[%s1255 + $0x58] sm:$0xff]
        %v1268 = vld [vmem:[%s1255 + $0x60] sm:$0xff]
        %v1269 = vld [vmem:[%s1255 + $0x68] sm:$0xff]
        %v1270 = vld [vmem:[%s1255 + $0x70] sm:$0xff]
        %v1271 = vld [vmem:[%s1255 + $0x78] sm:$0xff]
        %1272 = vmatprep.subr.mxu0 0.0
        %1273 = vmatpush1.msra.mxu0 %v1256
        %1274 = vmatprep.subr.mxu0 0.0
        %1275 = vmatpush1.msra.mxu0 %v1257
        %1276 = vmatprep.subr.mxu0 0.0
        %1277 = vmatpush1.msra.mxu0 %v1258
        %1278 = vmatprep.subr.mxu0 0.0
        %1279 = vmatpush1.msra.mxu0 %v1259
        %1280 = vmatprep.subr.mxu0 0.0
        %1281 = vmatpush1.msra.mxu0 %v1260
        %1282 = vmatprep.subr.mxu0 0.0
        %1283 = vmatpush1.msra.mxu0 %v1261
        %1284 = vmatprep.subr.mxu0 0.0
        %1285 = vmatpush1.msra.mxu0 %v1262
        %1286 = vmatprep.subr.mxu0 0.0
        %1287 = vmatpush1.msra.mxu0 %v1263
        %1288 = vmatprep.subr.mxu0 0.0
        %1289 = vmatpush1.msra.mxu0 %v1264
        %1290 = vmatprep.subr.mxu0 0.0
        %1291 = vmatpush1.msra.mxu0 %v1265
        %1292 = vmatprep.subr.mxu0 0.0
        %1293 = vmatpush1.msra.mxu0 %v1266
        %1294 = vmatprep.subr.mxu0 0.0
        %1295 = vmatpush1.msra.mxu0 %v1267
        %1296 = vmatprep.subr.mxu0 0.0
        %1297 = vmatpush1.msra.mxu0 %v1268
        %1298 = vmatprep.subr.mxu0 0.0
        %1299 = vmatpush1.msra.mxu0 %v1269
        %1300 = vmatprep.subr.mxu0 0.0
        %1301 = vmatpush1.msra.mxu0 %v1270
        %1302 = vmatprep.subr.mxu0 0.0
        %1303 = vmatpush1.msra.mxu0 %v1271
        %1304 = vmatprep.subr.mxu0 0.0
        %1305 = vmatpush1.msra.mxu0 0.0
        %1306 = vmatprep.subr.mxu0 0.0
        %1307 = vmatpush1.msra.mxu0 0.0
        %1308 = vmatprep.subr.mxu0 0.0
        %1309 = vmatpush1.msra.mxu0 0.0
        %1310 = vmatprep.subr.mxu0 0.0
        %1311 = vmatpush1.msra.mxu0 0.0
        %1312 = vmatprep.subr.mxu0 0.0
        %1313 = vmatpush1.msra.mxu0 0.0
        %1314 = vmatprep.subr.mxu0 0.0
        %1315 = vmatpush1.msra.mxu0 0.0
        %1316 = vmatprep.subr.mxu0 0.0
        %1317 = vmatpush1.msra.mxu0 0.0
        %1318 = vmatprep.subr.mxu0 0.0
        %1319 = vmatpush1.msra.mxu0 0.0
        %1320 = vmatprep.subr.mxu0 0.0
        %1321 = vmatpush1.msra.mxu0 0.0
        %1322 = vmatprep.subr.mxu0 0.0
        %1323 = vmatpush1.msra.mxu0 0.0
        %1324 = vmatprep.subr.mxu0 0.0
        %1325 = vmatpush1.msra.mxu0 0.0
        %1326 = vmatprep.subr.mxu0 0.0
        %1327 = vmatpush1.msra.mxu0 0.0
        %1328 = vmatprep.subr.mxu0 0.0
        %1329 = vmatpush1.msra.mxu0 0.0
        %1330 = vmatprep.subr.mxu0 0.0
        %1331 = vmatpush1.msra.mxu0 0.0
        %1332 = vmatprep.subr.mxu0 0.0
        %1333 = vmatpush1.msra.mxu0 0.0
        %1334 = vmatprep.subr.mxu0 0.0
        %1335 = vmatpush1.msra.mxu0 0.0
        %1336 = vmatprep.mubr.f32.mxu0 0.0
        %1337 = vmatmul.mubr.f32.gmra.mrb[0].mxu0 %v1247
        %v1338 = vpop.f32.mrb[0].mxu0
        %v1339 = vadd.f32 0.0, %v1338
        %v1340 = vpop.f32.mrb[0].mxu0
        %1341 = vmatprep.mubr.f32.mxu0 0.0
        %1342 = vmatmul.mubr.f32.gmra.mrb[0].mxu0 %v1252
        %v1343 = vpop.f32.mrb[0].mxu0
        %v1344 = vadd.f32 0.0, %v1343
        %v1345 = vpop.f32.mrb[0].mxu0
        %1346 = vdwg.mxu0
        %1347 = vmatprep.subr.mxu0 0.0
        %1348 = vmatpush1.msra.mxu0 %v1155
        %1349 = vmatprep.subr.mxu0 0.0
        %1350 = vmatpush1.msra.mxu0 %v1156
        %1351 = vmatprep.subr.mxu0 0.0
        %1352 = vmatpush1.msra.mxu0 %v1157
        %1353 = vmatprep.subr.mxu0 0.0
        %1354 = vmatpush1.msra.mxu0 %v1158
        %1355 = vmatprep.subr.mxu0 0.0
        %1356 = vmatpush1.msra.mxu0 %v1159
        %1357 = vmatprep.subr.mxu0 0.0
        %1358 = vmatpush1.msra.mxu0 %v1160
        %1359 = vmatprep.subr.mxu0 0.0
        %1360 = vmatpush1.msra.mxu0 %v1161
        %1361 = vmatprep.subr.mxu0 0.0
        %1362 = vmatpush1.msra.mxu0 %v1162
        %1363 = vmatprep.subr.mxu0 0.0
        %1364 = vmatpush1.msra.mxu0 %v1163
        %1365 = vmatprep.subr.mxu0 0.0
        %1366 = vmatpush1.msra.mxu0 %v1164
        %1367 = vmatprep.subr.mxu0 0.0
        %1368 = vmatpush1.msra.mxu0 %v1165
        %1369 = vmatprep.subr.mxu0 0.0
        %1370 = vmatpush1.msra.mxu0 %v1166
        %1371 = vmatprep.subr.mxu0 0.0
        %1372 = vmatpush1.msra.mxu0 %v1167
        %1373 = vmatprep.subr.mxu0 0.0
        %1374 = vmatpush1.msra.mxu0 %v1168
        %1375 = vmatprep.subr.mxu0 0.0
        %1376 = vmatpush1.msra.mxu0 %v1169
        %1377 = vmatprep.subr.mxu0 0.0
        %1378 = vmatpush1.msra.mxu0 %v1170
        %1379 = vmatprep.subr.mxu0 0.0
        %1380 = vmatpush1.msra.mxu0 0.0
        %1381 = vmatprep.subr.mxu0 0.0
        %1382 = vmatpush1.msra.mxu0 0.0
        %1383 = vmatprep.subr.mxu0 0.0
        %1384 = vmatpush1.msra.mxu0 0.0
        %1385 = vmatprep.subr.mxu0 0.0
        %1386 = vmatpush1.msra.mxu0 0.0
        %1387 = vmatprep.subr.mxu0 0.0
        %1388 = vmatpush1.msra.mxu0 0.0
        %1389 = vmatprep.subr.mxu0 0.0
        %1390 = vmatpush1.msra.mxu0 0.0
        %1391 = vmatprep.subr.mxu0 0.0
        %1392 = vmatpush1.msra.mxu0 0.0
        %1393 = vmatprep.subr.mxu0 0.0
        %1394 = vmatpush1.msra.mxu0 0.0
        %1395 = vmatprep.subr.mxu0 0.0
        %1396 = vmatpush1.msra.mxu0 0.0
        %1397 = vmatprep.subr.mxu0 0.0
        %1398 = vmatpush1.msra.mxu0 0.0
        %1399 = vmatprep.subr.mxu0 0.0
        %1400 = vmatpush1.msra.mxu0 0.0
        %1401 = vmatprep.subr.mxu0 0.0
        %1402 = vmatpush1.msra.mxu0 0.0
        %1403 = vmatprep.subr.mxu0 0.0
        %1404 = vmatpush1.msra.mxu0 0.0
        %1405 = vmatprep.subr.mxu0 0.0
        %1406 = vmatpush1.msra.mxu0 0.0
        %1407 = vmatprep.subr.mxu0 0.0
        %1408 = vmatpush1.msra.mxu0 0.0
        %1409 = vmatprep.subr.mxu0 0.0
        %1410 = vmatpush1.msra.mxu0 0.0
        %1411 = vmatprep.mubr.f32.mxu0 0.0
        %1412 = vmatmul.mubr.f32.gmra.mrb[0].mxu0 %v1147
        %v1413 = vpop.f32.mrb[0].mxu0
        %v1414 = vadd.f32 %v1339, %v1413
        %v1415 = vpop.f32.mrb[0].mxu0
        %1416 = vmatprep.mubr.f32.mxu0 0.0
        %1417 = vmatmul.mubr.f32.gmra.mrb[0].mxu0 %v1152
        %v1418 = vpop.f32.mrb[0].mxu0
        %v1419 = vadd.f32 %v1344, %v1418
        %v1420 = vpop.f32.mrb[0].mxu0
        %1421 = vdwg.mxu0
        %s1422 = scalar_lea.vmem %s4, 32
        %v1423 = vld [vmem:[%s1422] sm:$0xff]
        %v1424 = vld [vmem:[%s1422 + $0x8] sm:$0xff]
        %v1426 = vsel %vm1073, %v1423, 0
        %v1429 = vsel %vm1073, %v1424, 0
        %1431 = vmatprep.subr.mxu0 0.0
        %1432 = vmatpush1.msra.mxu0 %v1069
        %1433 = vmatprep.subr.mxu0 0.0
        %1434 = vmatpush1.msra.mxu0 %v1070
        %1435 = vmatprep.subr.mxu0 0.0
        %1436 = vmatpush1.msra.mxu0 0.0
        %1437 = vmatprep.subr.mxu0 0.0
        %1438 = vmatpush1.msra.mxu0 0.0
        %1439 = vmatprep.subr.mxu0 0.0
        %1440 = vmatpush1.msra.mxu0 0.0
        %1441 = vmatprep.subr.mxu0 0.0
        %1442 = vmatpush1.msra.mxu0 0.0
        %1443 = vmatprep.subr.mxu0 0.0
        %1444 = vmatpush1.msra.mxu0 0.0
        %1445 = vmatprep.subr.mxu0 0.0
        %1446 = vmatpush1.msra.mxu0 0.0
        %1447 = vmatprep.subr.mxu0 0.0
        %1448 = vmatpush1.msra.mxu0 0.0
        %1449 = vmatprep.subr.mxu0 0.0
        %1450 = vmatpush1.msra.mxu0 0.0
        %1451 = vmatprep.subr.mxu0 0.0
        %1452 = vmatpush1.msra.mxu0 0.0
        %1453 = vmatprep.subr.mxu0 0.0
        %1454 = vmatpush1.msra.mxu0 0.0
        %1455 = vmatprep.subr.mxu0 0.0
        %1456 = vmatpush1.msra.mxu0 0.0
        %1457 = vmatprep.subr.mxu0 0.0
        %1458 = vmatpush1.msra.mxu0 0.0
        %1459 = vmatprep.subr.mxu0 0.0
        %1460 = vmatpush1.msra.mxu0 0.0
        %1461 = vmatprep.subr.mxu0 0.0
        %1462 = vmatpush1.msra.mxu0 0.0
        %1463 = vmatprep.subr.mxu0 0.0
        %1464 = vmatpush1.msra.mxu0 0.0
        %1465 = vmatprep.subr.mxu0 0.0
        %1466 = vmatpush1.msra.mxu0 0.0
        %1467 = vmatprep.subr.mxu0 0.0
        %1468 = vmatpush1.msra.mxu0 0.0
        %1469 = vmatprep.subr.mxu0 0.0
        %1470 = vmatpush1.msra.mxu0 0.0
        %1471 = vmatprep.subr.mxu0 0.0
        %1472 = vmatpush1.msra.mxu0 0.0
        %1473 = vmatprep.subr.mxu0 0.0
        %1474 = vmatpush1.msra.mxu0 0.0
        %1475 = vmatprep.subr.mxu0 0.0
        %1476 = vmatpush1.msra.mxu0 0.0
        %1477 = vmatprep.subr.mxu0 0.0
        %1478 = vmatpush1.msra.mxu0 0.0
        %1479 = vmatprep.subr.mxu0 0.0
        %1480 = vmatpush1.msra.mxu0 0.0
        %1481 = vmatprep.subr.mxu0 0.0
        %1482 = vmatpush1.msra.mxu0 0.0
        %1483 = vmatprep.subr.mxu0 0.0
        %1484 = vmatpush1.msra.mxu0 0.0
        %1485 = vmatprep.subr.mxu0 0.0
        %1486 = vmatpush1.msra.mxu0 0.0
        %1487 = vmatprep.subr.mxu0 0.0
        %1488 = vmatpush1.msra.mxu0 0.0
        %1489 = vmatprep.subr.mxu0 0.0
        %1490 = vmatpush1.msra.mxu0 0.0
        %1491 = vmatprep.subr.mxu0 0.0
        %1492 = vmatpush1.msra.mxu0 0.0
        %1493 = vmatprep.subr.mxu0 0.0
        %1494 = vmatpush1.msra.mxu0 0.0
        %1495 = vmatprep.mubr.f32.mxu0 0.0
        %1496 = vmatmul.mubr.f32.gmra.mrb[0].mxu0 %v1426
        %v1497 = vpop.f32.mrb[0].mxu0
        %v1498 = vadd.f32 0.0, %v1497
        %v1499 = vpop.f32.mrb[0].mxu0
        %1500 = vmatprep.mubr.f32.mxu0 0.0
        %1501 = vmatmul.mubr.f32.gmra.mrb[0].mxu0 %v1429
        %v1502 = vpop.f32.mrb[0].mxu0
        %v1503 = vadd.f32 0.0, %v1502
        %v1504 = vpop.f32.mrb[0].mxu0
        %1505 = vdwg.mxu0
        %s1506 = scalar_lea.vmem %s5, 256
        %v1507 = vld [vmem:[%s1506] sm:$0xff]
        %v1508 = vld [vmem:[%s1506 + $0x8] sm:$0xff]
        %v1509 = vld [vmem:[%s1506 + $0x10] sm:$0xff]
        %v1510 = vld [vmem:[%s1506 + $0x18] sm:$0xff]
        %v1511 = vld [vmem:[%s1506 + $0x20] sm:$0xff]
        %v1512 = vld [vmem:[%s1506 + $0x28] sm:$0xff]
        %v1513 = vld [vmem:[%s1506 + $0x30] sm:$0xff]
        %v1514 = vld [vmem:[%s1506 + $0x38] sm:$0xff]
        %v1515 = vld [vmem:[%s1506 + $0x40] sm:$0xff]
        %v1516 = vld [vmem:[%s1506 + $0x48] sm:$0xff]
        %v1517 = vld [vmem:[%s1506 + $0x50] sm:$0xff]
        %v1518 = vld [vmem:[%s1506 + $0x58] sm:$0xff]
        %v1519 = vld [vmem:[%s1506 + $0x60] sm:$0xff]
        %v1520 = vld [vmem:[%s1506 + $0x68] sm:$0xff]
        %v1521 = vld [vmem:[%s1506 + $0x70] sm:$0xff]
        %v1522 = vld [vmem:[%s1506 + $0x78] sm:$0xff]
        %1523 = vmatprep.subr.mxu0 0.0
        %1524 = vmatpush1.msra.mxu0 %v1507
        %1525 = vmatprep.subr.mxu0 0.0
        %1526 = vmatpush1.msra.mxu0 %v1508
        %1527 = vmatprep.subr.mxu0 0.0
        %1528 = vmatpush1.msra.mxu0 %v1509
        %1529 = vmatprep.subr.mxu0 0.0
        %1530 = vmatpush1.msra.mxu0 %v1510
        %1531 = vmatprep.subr.mxu0 0.0
        %1532 = vmatpush1.msra.mxu0 %v1511
        %1533 = vmatprep.subr.mxu0 0.0
        %1534 = vmatpush1.msra.mxu0 %v1512
        %1535 = vmatprep.subr.mxu0 0.0
        %1536 = vmatpush1.msra.mxu0 %v1513
        %1537 = vmatprep.subr.mxu0 0.0
        %1538 = vmatpush1.msra.mxu0 %v1514
        %1539 = vmatprep.subr.mxu0 0.0
        %1540 = vmatpush1.msra.mxu0 %v1515
        %1541 = vmatprep.subr.mxu0 0.0
        %1542 = vmatpush1.msra.mxu0 %v1516
        %1543 = vmatprep.subr.mxu0 0.0
        %1544 = vmatpush1.msra.mxu0 %v1517
        %1545 = vmatprep.subr.mxu0 0.0
        %1546 = vmatpush1.msra.mxu0 %v1518
        %1547 = vmatprep.subr.mxu0 0.0
        %1548 = vmatpush1.msra.mxu0 %v1519
        %1549 = vmatprep.subr.mxu0 0.0
        %1550 = vmatpush1.msra.mxu0 %v1520
        %1551 = vmatprep.subr.mxu0 0.0
        %1552 = vmatpush1.msra.mxu0 %v1521
        %1553 = vmatprep.subr.mxu0 0.0
        %1554 = vmatpush1.msra.mxu0 %v1522
        %1555 = vmatprep.subr.mxu0 0.0
        %1556 = vmatpush1.msra.mxu0 0.0
        %1557 = vmatprep.subr.mxu0 0.0
        %1558 = vmatpush1.msra.mxu0 0.0
        %1559 = vmatprep.subr.mxu0 0.0
        %1560 = vmatpush1.msra.mxu0 0.0
        %1561 = vmatprep.subr.mxu0 0.0
        %1562 = vmatpush1.msra.mxu0 0.0
        %1563 = vmatprep.subr.mxu0 0.0
        %1564 = vmatpush1.msra.mxu0 0.0
        %1565 = vmatprep.subr.mxu0 0.0
        %1566 = vmatpush1.msra.mxu0 0.0
        %1567 = vmatprep.subr.mxu0 0.0
        %1568 = vmatpush1.msra.mxu0 0.0
        %1569 = vmatprep.subr.mxu0 0.0
        %1570 = vmatpush1.msra.mxu0 0.0
        %1571 = vmatprep.subr.mxu0 0.0
        %1572 = vmatpush1.msra.mxu0 0.0
        %1573 = vmatprep.subr.mxu0 0.0
        %1574 = vmatpush1.msra.mxu0 0.0
        %1575 = vmatprep.subr.mxu0 0.0
        %1576 = vmatpush1.msra.mxu0 0.0
        %1577 = vmatprep.subr.mxu0 0.0
        %1578 = vmatpush1.msra.mxu0 0.0
        %1579 = vmatprep.subr.mxu0 0.0
        %1580 = vmatpush1.msra.mxu0 0.0
        %1581 = vmatprep.subr.mxu0 0.0
        %1582 = vmatpush1.msra.mxu0 0.0
        %1583 = vmatprep.subr.mxu0 0.0
        %1584 = vmatpush1.msra.mxu0 0.0
        %1585 = vmatprep.subr.mxu0 0.0
        %1586 = vmatpush1.msra.mxu0 0.0
        %1587 = vmatprep.mubr.f32.mxu0 0.0
        %1588 = vmatmul.mubr.f32.gmra.mrb[0].mxu0 %v1498
        %v1589 = vpop.f32.mrb[0].mxu0
        %v1590 = vadd.f32 0.0, %v1589
        %v1591 = vpop.f32.mrb[0].mxu0
        %1592 = vmatprep.mubr.f32.mxu0 0.0
        %1593 = vmatmul.mubr.f32.gmra.mrb[0].mxu0 %v1503
        %v1594 = vpop.f32.mrb[0].mxu0
        %v1595 = vadd.f32 0.0, %v1594
        %v1596 = vpop.f32.mrb[0].mxu0
        %1597 = vdwg.mxu0
        %v1598 = vadd.f32 %v1414, %v1590
        %v1599 = vadd.f32 %v1419, %v1595
        %v1600 = vld [vmem:[%s6] sm:$0x1]
        %v1602 = vlaneseq
        %v1603 = vshrl.u32 %v1602, 7
        %v1604 = vsub.s32 0, %v1603
        %v1605 = vrot.slane %v1600, %v1604
        %v1607 = vadd.f32 %v1598, %v1605
        %v1608 = vadd.f32 %v1599, %v1605
        %v1609 = vmax.f32 %v1607, 0.0
        %v1610 = vmax.f32 %v1608, 0.0
        %1611 = vmatprep.subr.mxu0 0.0
        %1612 = vmatpush1.msra.mxu0 %v1609
        %1613 = vmatprep.subr.mxu0 0.0
        %1614 = vmatpush1.msra.mxu0 %v1610
        %1615 = vmatprep.subr.mxu0 0.0
        %1616 = vmatpush1.msra.mxu0 0.0
        %1617 = vmatprep.subr.mxu0 0.0
        %1618 = vmatpush1.msra.mxu0 0.0
        %1619 = vmatprep.subr.mxu0 0.0
        %1620 = vmatpush1.msra.mxu0 0.0
        %1621 = vmatprep.subr.mxu0 0.0
        %1622 = vmatpush1.msra.mxu0 0.0
        %1623 = vmatprep.subr.mxu0 0.0
        %1624 = vmatpush1.msra.mxu0 0.0
        %1625 = vmatprep.subr.mxu0 0.0
        %1626 = vmatpush1.msra.mxu0 0.0
        %1627 = vmatprep.subr.mxu0 0.0
        %1628 = vmatpush1.msra.mxu0 0.0
        %1629 = vmatprep.subr.mxu0 0.0
        %1630 = vmatpush1.msra.mxu0 0.0
        %1631 = vmatprep.subr.mxu0 0.0
        %1632 = vmatpush1.msra.mxu0 0.0
        %1633 = vmatprep.subr.mxu0 0.0
        %1634 = vmatpush1.msra.mxu0 0.0
        %1635 = vmatprep.subr.mxu0 0.0
        %1636 = vmatpush1.msra.mxu0 0.0
        %1637 = vmatprep.subr.mxu0 0.0
        %1638 = vmatpush1.msra.mxu0 0.0
        %1639 = vmatprep.subr.mxu0 0.0
        %1640 = vmatpush1.msra.mxu0 0.0
        %1641 = vmatprep.subr.mxu0 0.0
        %1642 = vmatpush1.msra.mxu0 0.0
        %1643 = vmatprep.subr.mxu0 0.0
        %1644 = vmatpush1.msra.mxu0 0.0
        %1645 = vmatprep.subr.mxu0 0.0
        %1646 = vmatpush1.msra.mxu0 0.0
        %1647 = vmatprep.subr.mxu0 0.0
        %1648 = vmatpush1.msra.mxu0 0.0
        %1649 = vmatprep.subr.mxu0 0.0
        %1650 = vmatpush1.msra.mxu0 0.0
        %1651 = vmatprep.subr.mxu0 0.0
        %1652 = vmatpush1.msra.mxu0 0.0
        %1653 = vmatprep.subr.mxu0 0.0
        %1654 = vmatpush1.msra.mxu0 0.0
        %1655 = vmatprep.subr.mxu0 0.0
        %1656 = vmatpush1.msra.mxu0 0.0
        %1657 = vmatprep.subr.mxu0 0.0
        %1658 = vmatpush1.msra.mxu0 0.0
        %1659 = vmatprep.subr.mxu0 0.0
        %1660 = vmatpush1.msra.mxu0 0.0
        %1661 = vmatprep.subr.mxu0 0.0
        %1662 = vmatpush1.msra.mxu0 0.0
        %1663 = vmatprep.subr.mxu0 0.0
        %1664 = vmatpush1.msra.mxu0 0.0
        %1665 = vmatprep.subr.mxu0 0.0
        %1666 = vmatpush1.msra.mxu0 0.0
        %1667 = vmatprep.subr.mxu0 0.0
        %1668 = vmatpush1.msra.mxu0 0.0
        %1669 = vmatprep.subr.mxu0 0.0
        %1670 = vmatpush1.msra.mxu0 0.0
        %1671 = vmatprep.subr.mxu0 0.0
        %1672 = vmatpush1.msra.mxu0 0.0
        %1673 = vmatprep.subr.mxu0 0.0
        %1674 = vmatpush1.msra.mxu0 0.0
        %1675 = vmatprep.mubr.f32.mxu0 0.0
        %1676 = vmatmul.mubr.f32.gmra.mrb[0].mxu0 %v1075
        %v1677 = vpop.f32.mrb[0].mxu0
        %v1678 = vadd.f32 0.0, %v1677
        %v1679 = vpop.f32.mrb[0].mxu0
        %1680 = vmatprep.mubr.f32.mxu0 0.0
        %1681 = vmatmul.mubr.f32.gmra.mrb[0].mxu0 %v1078
        %v1682 = vpop.f32.mrb[0].mxu0
        %v1683 = vadd.f32 0.0, %v1682
        %v1684 = vpop.f32.mrb[0].mxu0
        %1685 = vdwg.mxu0
        %v1686 = vld [vmem:[%s7] sm:$0xff]
        %v1687 = vld [vmem:[%s7 + $0x8] sm:$0xff]
        %v1688 = vld [vmem:[%s7 + $0x10] sm:$0xff]
        %v1689 = vld [vmem:[%s7 + $0x18] sm:$0xff]
        %v1690 = vld [vmem:[%s7 + $0x20] sm:$0xff]
        %v1691 = vld [vmem:[%s7 + $0x28] sm:$0xff]
        %v1692 = vld [vmem:[%s7 + $0x30] sm:$0xff]
        %v1693 = vld [vmem:[%s7 + $0x38] sm:$0xff]
        %v1694 = vld [vmem:[%s7 + $0x40] sm:$0xff]
        %v1695 = vld [vmem:[%s7 + $0x48] sm:$0xff]
        %v1696 = vld [vmem:[%s7 + $0x50] sm:$0xff]
        %v1697 = vld [vmem:[%s7 + $0x58] sm:$0xff]
        %v1698 = vld [vmem:[%s7 + $0x60] sm:$0xff]
        %v1699 = vld [vmem:[%s7 + $0x68] sm:$0xff]
        %v1700 = vld [vmem:[%s7 + $0x70] sm:$0xff]
        %v1701 = vld [vmem:[%s7 + $0x78] sm:$0xff]
        %1702 = vmatprep.subr.mxu0 0.0
        %1703 = vmatpush1.msra.mxu0 %v1609
        %1704 = vmatprep.subr.mxu0 0.0
        %1705 = vmatpush1.msra.mxu0 %v1610
        %1706 = vmatprep.subr.mxu0 0.0
        %1707 = vmatpush1.msra.mxu0 0.0
        %1708 = vmatprep.subr.mxu0 0.0
        %1709 = vmatpush1.msra.mxu0 0.0
        %1710 = vmatprep.subr.mxu0 0.0
        %1711 = vmatpush1.msra.mxu0 0.0
        %1712 = vmatprep.subr.mxu0 0.0
        %1713 = vmatpush1.msra.mxu0 0.0
        %1714 = vmatprep.subr.mxu0 0.0
        %1715 = vmatpush1.msra.mxu0 0.0
        %1716 = vmatprep.subr.mxu0 0.0
        %1717 = vmatpush1.msra.mxu0 0.0
        %1718 = vmatprep.subr.mxu0 0.0
        %1719 = vmatpush1.msra.mxu0 0.0
        %1720 = vmatprep.subr.mxu0 0.0
        %1721 = vmatpush1.msra.mxu0 0.0
        %1722 = vmatprep.subr.mxu0 0.0
        %1723 = vmatpush1.msra.mxu0 0.0
        %1724 = vmatprep.subr.mxu0 0.0
        %1725 = vmatpush1.msra.mxu0 0.0
        %1726 = vmatprep.subr.mxu0 0.0
        %1727 = vmatpush1.msra.mxu0 0.0
        %1728 = vmatprep.subr.mxu0 0.0
        %1729 = vmatpush1.msra.mxu0 0.0
        %1730 = vmatprep.subr.mxu0 0.0
        %1731 = vmatpush1.msra.mxu0 0.0
        %1732 = vmatprep.subr.mxu0 0.0
        %1733 = vmatpush1.msra.mxu0 0.0
        %1734 = vmatprep.subr.mxu0 0.0
        %1735 = vmatpush1.msra.mxu0 0.0
        %1736 = vmatprep.subr.mxu0 0.0
        %1737 = vmatpush1.msra.mxu0 0.0
        %1738 = vmatprep.subr.mxu0 0.0
        %1739 = vmatpush1.msra.mxu0 0.0
        %1740 = vmatprep.subr.mxu0 0.0
        %1741 = vmatpush1.msra.mxu0 0.0
        %1742 = vmatprep.subr.mxu0 0.0
        %1743 = vmatpush1.msra.mxu0 0.0
        %1744 = vmatprep.subr.mxu0 0.0
        %1745 = vmatpush1.msra.mxu0 0.0
        %1746 = vmatprep.subr.mxu0 0.0
        %1747 = vmatpush1.msra.mxu0 0.0
        %1748 = vmatprep.subr.mxu0 0.0
        %1749 = vmatpush1.msra.mxu0 0.0
        %1750 = vmatprep.subr.mxu0 0.0
        %1751 = vmatpush1.msra.mxu0 0.0
        %1752 = vmatprep.subr.mxu0 0.0
        %1753 = vmatpush1.msra.mxu0 0.0
        %1754 = vmatprep.subr.mxu0 0.0
        %1755 = vmatpush1.msra.mxu0 0.0
        %1756 = vmatprep.subr.mxu0 0.0
        %1757 = vmatpush1.msra.mxu0 0.0
        %1758 = vmatprep.subr.mxu0 0.0
        %1759 = vmatpush1.msra.mxu0 0.0
        %1760 = vmatprep.subr.mxu0 0.0
        %1761 = vmatpush1.msra.mxu0 0.0
        %1762 = vmatprep.subr.mxu0 0.0
        %1763 = vmatpush1.msra.mxu0 0.0
        %1764 = vmatprep.subr.mxu0 0.0
        %1765 = vmatpush1.msra.mxu0 0.0
        %1766 = vmatprep.mubr.f32.mxu0 0.0
        %1767 = vmatmul.mubr.f32.gmra.mrb[0].mxu0 %v1175
        %v1768 = vpop.f32.mrb[0].mxu0
        %v1769 = vadd.f32 0.0, %v1768
        %v1770 = vpop.f32.mrb[0].mxu0
        %1771 = vmatprep.mubr.f32.mxu0 0.0
        %1772 = vmatmul.mubr.f32.gmra.mrb[0].mxu0 %v1178
        %v1773 = vpop.f32.mrb[0].mxu0
        %v1774 = vadd.f32 0.0, %v1773
        %v1775 = vpop.f32.mrb[0].mxu0
        %1776 = vdwg.mxu0
        %s1777 = scalar_lea.vmem %s7, 128
        %v1778 = vld [vmem:[%s1777] sm:$0xff]
        %v1779 = vld [vmem:[%s1777 + $0x8] sm:$0xff]
        %v1780 = vld [vmem:[%s1777 + $0x10] sm:$0xff]
        %v1781 = vld [vmem:[%s1777 + $0x18] sm:$0xff]
        %v1782 = vld [vmem:[%s1777 + $0x20] sm:$0xff]
        %v1783 = vld [vmem:[%s1777 + $0x28] sm:$0xff]
        %v1784 = vld [vmem:[%s1777 + $0x30] sm:$0xff]
        %v1785 = vld [vmem:[%s1777 + $0x38] sm:$0xff]
        %v1786 = vld [vmem:[%s1777 + $0x40] sm:$0xff]
        %v1787 = vld [vmem:[%s1777 + $0x48] sm:$0xff]
        %v1788 = vld [vmem:[%s1777 + $0x50] sm:$0xff]
        %v1789 = vld [vmem:[%s1777 + $0x58] sm:$0xff]
        %v1790 = vld [vmem:[%s1777 + $0x60] sm:$0xff]
        %v1791 = vld [vmem:[%s1777 + $0x68] sm:$0xff]
        %v1792 = vld [vmem:[%s1777 + $0x70] sm:$0xff]
        %v1793 = vld [vmem:[%s1777 + $0x78] sm:$0xff]
        %1794 = vmatprep.subr.mxu0 0.0
        %1795 = vmatpush1.msra.mxu0 %v1778
        %1796 = vmatprep.subr.mxu0 0.0
        %1797 = vmatpush1.msra.mxu0 %v1779
        %1798 = vmatprep.subr.mxu0 0.0
        %1799 = vmatpush1.msra.mxu0 %v1780
        %1800 = vmatprep.subr.mxu0 0.0
        %1801 = vmatpush1.msra.mxu0 %v1781
        %1802 = vmatprep.subr.mxu0 0.0
        %1803 = vmatpush1.msra.mxu0 %v1782
        %1804 = vmatprep.subr.mxu0 0.0
        %1805 = vmatpush1.msra.mxu0 %v1783
        %1806 = vmatprep.subr.mxu0 0.0
        %1807 = vmatpush1.msra.mxu0 %v1784
        %1808 = vmatprep.subr.mxu0 0.0
        %1809 = vmatpush1.msra.mxu0 %v1785
        %1810 = vmatprep.subr.mxu0 0.0
        %1811 = vmatpush1.msra.mxu0 %v1786
        %1812 = vmatprep.subr.mxu0 0.0
        %1813 = vmatpush1.msra.mxu0 %v1787
        %1814 = vmatprep.subr.mxu0 0.0
        %1815 = vmatpush1.msra.mxu0 %v1788
        %1816 = vmatprep.subr.mxu0 0.0
        %1817 = vmatpush1.msra.mxu0 %v1789
        %1818 = vmatprep.subr.mxu0 0.0
        %1819 = vmatpush1.msra.mxu0 %v1790
        %1820 = vmatprep.subr.mxu0 0.0
        %1821 = vmatpush1.msra.mxu0 %v1791
        %1822 = vmatprep.subr.mxu0 0.0
        %1823 = vmatpush1.msra.mxu0 %v1792
        %1824 = vmatprep.subr.mxu0 0.0
        %1825 = vmatpush1.msra.mxu0 %v1793
        %1826 = vmatprep.subr.mxu0 0.0
        %1827 = vmatpush1.msra.mxu0 0.0
        %1828 = vmatprep.subr.mxu0 0.0
        %1829 = vmatpush1.msra.mxu0 0.0
        %1830 = vmatprep.subr.mxu0 0.0
        %1831 = vmatpush1.msra.mxu0 0.0
        %1832 = vmatprep.subr.mxu0 0.0
        %1833 = vmatpush1.msra.mxu0 0.0
        %1834 = vmatprep.subr.mxu0 0.0
        %1835 = vmatpush1.msra.mxu0 0.0
        %1836 = vmatprep.subr.mxu0 0.0
        %1837 = vmatpush1.msra.mxu0 0.0
        %1838 = vmatprep.subr.mxu0 0.0
        %1839 = vmatpush1.msra.mxu0 0.0
        %1840 = vmatprep.subr.mxu0 0.0
        %1841 = vmatpush1.msra.mxu0 0.0
        %1842 = vmatprep.subr.mxu0 0.0
        %1843 = vmatpush1.msra.mxu0 0.0
        %1844 = vmatprep.subr.mxu0 0.0
        %1845 = vmatpush1.msra.mxu0 0.0
        %1846 = vmatprep.subr.mxu0 0.0
        %1847 = vmatpush1.msra.mxu0 0.0
        %1848 = vmatprep.subr.mxu0 0.0
        %1849 = vmatpush1.msra.mxu0 0.0
        %1850 = vmatprep.subr.mxu0 0.0
        %1851 = vmatpush1.msra.mxu0 0.0
        %1852 = vmatprep.subr.mxu0 0.0
        %1853 = vmatpush1.msra.mxu0 0.0
        %1854 = vmatprep.subr.mxu0 0.0
        %1855 = vmatpush1.msra.mxu0 0.0
        %1856 = vmatprep.subr.mxu0 0.0
        %1857 = vmatpush1.msra.mxu0 0.0
        %1858 = vmatprep.mubr.f32.mxu0 0.0
        %1859 = vmatmul.mubr.f32.gmra.mrb[0].mxu0 %v1769
        %v1860 = vpop.f32.mrb[0].mxu0
        %v1861 = vadd.f32 0.0, %v1860
        %v1862 = vpop.f32.mrb[0].mxu0
        %1863 = vmatprep.mubr.f32.mxu0 0.0
        %1864 = vmatmul.mubr.f32.gmra.mrb[0].mxu0 %v1774
        %v1865 = vpop.f32.mrb[0].mxu0
        %v1866 = vadd.f32 0.0, %v1865
        %v1867 = vpop.f32.mrb[0].mxu0
        %1868 = vdwg.mxu0
        %1869 = vmatprep.subr.mxu0 0.0
        %1870 = vmatpush1.msra.mxu0 %v1686
        %1871 = vmatprep.subr.mxu0 0.0
        %1872 = vmatpush1.msra.mxu0 %v1687
        %1873 = vmatprep.subr.mxu0 0.0
        %1874 = vmatpush1.msra.mxu0 %v1688
        %1875 = vmatprep.subr.mxu0 0.0
        %1876 = vmatpush1.msra.mxu0 %v1689
        %1877 = vmatprep.subr.mxu0 0.0
        %1878 = vmatpush1.msra.mxu0 %v1690
        %1879 = vmatprep.subr.mxu0 0.0
        %1880 = vmatpush1.msra.mxu0 %v1691
        %1881 = vmatprep.subr.mxu0 0.0
        %1882 = vmatpush1.msra.mxu0 %v1692
        %1883 = vmatprep.subr.mxu0 0.0
        %1884 = vmatpush1.msra.mxu0 %v1693
        %1885 = vmatprep.subr.mxu0 0.0
        %1886 = vmatpush1.msra.mxu0 %v1694
        %1887 = vmatprep.subr.mxu0 0.0
        %1888 = vmatpush1.msra.mxu0 %v1695
        %1889 = vmatprep.subr.mxu0 0.0
        %1890 = vmatpush1.msra.mxu0 %v1696
        %1891 = vmatprep.subr.mxu0 0.0
        %1892 = vmatpush1.msra.mxu0 %v1697
        %1893 = vmatprep.subr.mxu0 0.0
        %1894 = vmatpush1.msra.mxu0 %v1698
        %1895 = vmatprep.subr.mxu0 0.0
        %1896 = vmatpush1.msra.mxu0 %v1699
        %1897 = vmatprep.subr.mxu0 0.0
        %1898 = vmatpush1.msra.mxu0 %v1700
        %1899 = vmatprep.subr.mxu0 0.0
        %1900 = vmatpush1.msra.mxu0 %v1701
        %1901 = vmatprep.subr.mxu0 0.0
        %1902 = vmatpush1.msra.mxu0 0.0
        %1903 = vmatprep.subr.mxu0 0.0
        %1904 = vmatpush1.msra.mxu0 0.0
        %1905 = vmatprep.subr.mxu0 0.0
        %1906 = vmatpush1.msra.mxu0 0.0
        %1907 = vmatprep.subr.mxu0 0.0
        %1908 = vmatpush1.msra.mxu0 0.0
        %1909 = vmatprep.subr.mxu0 0.0
        %1910 = vmatpush1.msra.mxu0 0.0
        %1911 = vmatprep.subr.mxu0 0.0
        %1912 = vmatpush1.msra.mxu0 0.0
        %1913 = vmatprep.subr.mxu0 0.0
        %1914 = vmatpush1.msra.mxu0 0.0
        %1915 = vmatprep.subr.mxu0 0.0
        %1916 = vmatpush1.msra.mxu0 0.0
        %1917 = vmatprep.subr.mxu0 0.0
        %1918 = vmatpush1.msra.mxu0 0.0
        %1919 = vmatprep.subr.mxu0 0.0
        %1920 = vmatpush1.msra.mxu0 0.0
        %1921 = vmatprep.subr.mxu0 0.0
        %1922 = vmatpush1.msra.mxu0 0.0
        %1923 = vmatprep.subr.mxu0 0.0
        %1924 = vmatpush1.msra.mxu0 0.0
        %1925 = vmatprep.subr.mxu0 0.0
        %1926 = vmatpush1.msra.mxu0 0.0
        %1927 = vmatprep.subr.mxu0 0.0
        %1928 = vmatpush1.msra.mxu0 0.0
        %1929 = vmatprep.subr.mxu0 0.0
        %1930 = vmatpush1.msra.mxu0 0.0
        %1931 = vmatprep.subr.mxu0 0.0
        %1932 = vmatpush1.msra.mxu0 0.0
        %1933 = vmatprep.mubr.f32.mxu0 0.0
        %1934 = vmatmul.mubr.f32.gmra.mrb[0].mxu0 %v1678
        %v1935 = vpop.f32.mrb[0].mxu0
        %v1936 = vadd.f32 %v1861, %v1935
        %v1937 = vpop.f32.mrb[0].mxu0
        %1938 = vmatprep.mubr.f32.mxu0 0.0
        %1939 = vmatmul.mubr.f32.gmra.mrb[0].mxu0 %v1683
        %v1940 = vpop.f32.mrb[0].mxu0
        %v1941 = vadd.f32 %v1866, %v1940
        %v1942 = vpop.f32.mrb[0].mxu0
        %1943 = vdwg.mxu0
        %1944 = vmatprep.subr.mxu0 0.0
        %1945 = vmatpush1.msra.mxu0 %v1609
        %1946 = vmatprep.subr.mxu0 0.0
        %1947 = vmatpush1.msra.mxu0 %v1610
        %1948 = vmatprep.subr.mxu0 0.0
        %1949 = vmatpush1.msra.mxu0 0.0
        %1950 = vmatprep.subr.mxu0 0.0
        %1951 = vmatpush1.msra.mxu0 0.0
        %1952 = vmatprep.subr.mxu0 0.0
        %1953 = vmatpush1.msra.mxu0 0.0
        %1954 = vmatprep.subr.mxu0 0.0
        %1955 = vmatpush1.msra.mxu0 0.0
        %1956 = vmatprep.subr.mxu0 0.0
        %1957 = vmatpush1.msra.mxu0 0.0
        %1958 = vmatprep.subr.mxu0 0.0
        %1959 = vmatpush1.msra.mxu0 0.0
        %1960 = vmatprep.subr.mxu0 0.0
        %1961 = vmatpush1.msra.mxu0 0.0
        %1962 = vmatprep.subr.mxu0 0.0
        %1963 = vmatpush1.msra.mxu0 0.0
        %1964 = vmatprep.subr.mxu0 0.0
        %1965 = vmatpush1.msra.mxu0 0.0
        %1966 = vmatprep.subr.mxu0 0.0
        %1967 = vmatpush1.msra.mxu0 0.0
        %1968 = vmatprep.subr.mxu0 0.0
        %1969 = vmatpush1.msra.mxu0 0.0
        %1970 = vmatprep.subr.mxu0 0.0
        %1971 = vmatpush1.msra.mxu0 0.0
        %1972 = vmatprep.subr.mxu0 0.0
        %1973 = vmatpush1.msra.mxu0 0.0
        %1974 = vmatprep.subr.mxu0 0.0
        %1975 = vmatpush1.msra.mxu0 0.0
        %1976 = vmatprep.subr.mxu0 0.0
        %1977 = vmatpush1.msra.mxu0 0.0
        %1978 = vmatprep.subr.mxu0 0.0
        %1979 = vmatpush1.msra.mxu0 0.0
        %1980 = vmatprep.subr.mxu0 0.0
        %1981 = vmatpush1.msra.mxu0 0.0
        %1982 = vmatprep.subr.mxu0 0.0
        %1983 = vmatpush1.msra.mxu0 0.0
        %1984 = vmatprep.subr.mxu0 0.0
        %1985 = vmatpush1.msra.mxu0 0.0
        %1986 = vmatprep.subr.mxu0 0.0
        %1987 = vmatpush1.msra.mxu0 0.0
        %1988 = vmatprep.subr.mxu0 0.0
        %1989 = vmatpush1.msra.mxu0 0.0
        %1990 = vmatprep.subr.mxu0 0.0
        %1991 = vmatpush1.msra.mxu0 0.0
        %1992 = vmatprep.subr.mxu0 0.0
        %1993 = vmatpush1.msra.mxu0 0.0
        %1994 = vmatprep.subr.mxu0 0.0
        %1995 = vmatpush1.msra.mxu0 0.0
        %1996 = vmatprep.subr.mxu0 0.0
        %1997 = vmatpush1.msra.mxu0 0.0
        %1998 = vmatprep.subr.mxu0 0.0
        %1999 = vmatpush1.msra.mxu0 0.0
        %2000 = vmatprep.subr.mxu0 0.0
        %2001 = vmatpush1.msra.mxu0 0.0
        %2002 = vmatprep.subr.mxu0 0.0
        %2003 = vmatpush1.msra.mxu0 0.0
        %2004 = vmatprep.subr.mxu0 0.0
        %2005 = vmatpush1.msra.mxu0 0.0
        %2006 = vmatprep.subr.mxu0 0.0
        %2007 = vmatpush1.msra.mxu0 0.0
        %2008 = vmatprep.mubr.f32.mxu0 0.0
        %2009 = vmatmul.mubr.f32.gmra.mrb[0].mxu0 %v1426
        %v2010 = vpop.f32.mrb[0].mxu0
        %v2011 = vadd.f32 0.0, %v2010
        %v2012 = vpop.f32.mrb[0].mxu0
        %2013 = vmatprep.mubr.f32.mxu0 0.0
        %2014 = vmatmul.mubr.f32.gmra.mrb[0].mxu0 %v1429
        %v2015 = vpop.f32.mrb[0].mxu0
        %v2016 = vadd.f32 0.0, %v2015
        %v2017 = vpop.f32.mrb[0].mxu0
        %2018 = vdwg.mxu0
        %s2019 = scalar_lea.vmem %s7, 256
        %v2020 = vld [vmem:[%s2019] sm:$0xff]
        %v2021 = vld [vmem:[%s2019 + $0x8] sm:$0xff]
        %v2022 = vld [vmem:[%s2019 + $0x10] sm:$0xff]
        %v2023 = vld [vmem:[%s2019 + $0x18] sm:$0xff]
        %v2024 = vld [vmem:[%s2019 + $0x20] sm:$0xff]
        %v2025 = vld [vmem:[%s2019 + $0x28] sm:$0xff]
        %v2026 = vld [vmem:[%s2019 + $0x30] sm:$0xff]
        %v2027 = vld [vmem:[%s2019 + $0x38] sm:$0xff]
        %v2028 = vld [vmem:[%s2019 + $0x40] sm:$0xff]
        %v2029 = vld [vmem:[%s2019 + $0x48] sm:$0xff]
        %v2030 = vld [vmem:[%s2019 + $0x50] sm:$0xff]
        %v2031 = vld [vmem:[%s2019 + $0x58] sm:$0xff]
        %v2032 = vld [vmem:[%s2019 + $0x60] sm:$0xff]
        %v2033 = vld [vmem:[%s2019 + $0x68] sm:$0xff]
        %v2034 = vld [vmem:[%s2019 + $0x70] sm:$0xff]
        %v2035 = vld [vmem:[%s2019 + $0x78] sm:$0xff]
        %2036 = vmatprep.subr.mxu0 0.0
        %2037 = vmatpush1.msra.mxu0 %v2020
        %2038 = vmatprep.subr.mxu0 0.0
        %2039 = vmatpush1.msra.mxu0 %v2021
        %2040 = vmatprep.subr.mxu0 0.0
        %2041 = vmatpush1.msra.mxu0 %v2022
        %2042 = vmatprep.subr.mxu0 0.0
        %2043 = vmatpush1.msra.mxu0 %v2023
        %2044 = vmatprep.subr.mxu0 0.0
        %2045 = vmatpush1.msra.mxu0 %v2024
        %2046 = vmatprep.subr.mxu0 0.0
        %2047 = vmatpush1.msra.mxu0 %v2025
        %2048 = vmatprep.subr.mxu0 0.0
        %2049 = vmatpush1.msra.mxu0 %v2026
        %2050 = vmatprep.subr.mxu0 0.0
        %2051 = vmatpush1.msra.mxu0 %v2027
        %2052 = vmatprep.subr.mxu0 0.0
        %2053 = vmatpush1.msra.mxu0 %v2028
        %2054 = vmatprep.subr.mxu0 0.0
        %2055 = vmatpush1.msra.mxu0 %v2029
        %2056 = vmatprep.subr.mxu0 0.0
        %2057 = vmatpush1.msra.mxu0 %v2030
        %2058 = vmatprep.subr.mxu0 0.0
        %2059 = vmatpush1.msra.mxu0 %v2031
        %2060 = vmatprep.subr.mxu0 0.0
        %2061 = vmatpush1.msra.mxu0 %v2032
        %2062 = vmatprep.subr.mxu0 0.0
        %2063 = vmatpush1.msra.mxu0 %v2033
        %2064 = vmatprep.subr.mxu0 0.0
        %2065 = vmatpush1.msra.mxu0 %v2034
        %2066 = vmatprep.subr.mxu0 0.0
        %2067 = vmatpush1.msra.mxu0 %v2035
        %2068 = vmatprep.subr.mxu0 0.0
        %2069 = vmatpush1.msra.mxu0 0.0
        %2070 = vmatprep.subr.mxu0 0.0
        %2071 = vmatpush1.msra.mxu0 0.0
        %2072 = vmatprep.subr.mxu0 0.0
        %2073 = vmatpush1.msra.mxu0 0.0
        %2074 = vmatprep.subr.mxu0 0.0
        %2075 = vmatpush1.msra.mxu0 0.0
        %2076 = vmatprep.subr.mxu0 0.0
        %2077 = vmatpush1.msra.mxu0 0.0
        %2078 = vmatprep.subr.mxu0 0.0
        %2079 = vmatpush1.msra.mxu0 0.0
        %2080 = vmatprep.subr.mxu0 0.0
        %2081 = vmatpush1.msra.mxu0 0.0
        %2082 = vmatprep.subr.mxu0 0.0
        %2083 = vmatpush1.msra.mxu0 0.0
        %2084 = vmatprep.subr.mxu0 0.0
        %2085 = vmatpush1.msra.mxu0 0.0
        %2086 = vmatprep.subr.mxu0 0.0
        %2087 = vmatpush1.msra.mxu0 0.0
        %2088 = vmatprep.subr.mxu0 0.0
        %2089 = vmatpush1.msra.mxu0 0.0
        %2090 = vmatprep.subr.mxu0 0.0
        %2091 = vmatpush1.msra.mxu0 0.0
        %2092 = vmatprep.subr.mxu0 0.0
        %2093 = vmatpush1.msra.mxu0 0.0
        %2094 = vmatprep.subr.mxu0 0.0
        %2095 = vmatpush1.msra.mxu0 0.0
        %2096 = vmatprep.subr.mxu0 0.0
        %2097 = vmatpush1.msra.mxu0 0.0
        %2098 = vmatprep.subr.mxu0 0.0
        %2099 = vmatpush1.msra.mxu0 0.0
        %2100 = vmatprep.mubr.f32.mxu0 0.0
        %2101 = vmatmul.mubr.f32.gmra.mrb[0].mxu0 %v2011
        %v2102 = vpop.f32.mrb[0].mxu0
        %v2103 = vadd.f32 0.0, %v2102
        %v2104 = vpop.f32.mrb[0].mxu0
        %2105 = vmatprep.mubr.f32.mxu0 0.0
        %2106 = vmatmul.mubr.f32.gmra.mrb[0].mxu0 %v2016
        %v2107 = vpop.f32.mrb[0].mxu0
        %v2108 = vadd.f32 0.0, %v2107
        %v2109 = vpop.f32.mrb[0].mxu0
        %2110 = vdwg.mxu0
        %v2111 = vadd.f32 %v1936, %v2103
        %v2112 = vadd.f32 %v1941, %v2108
        %v2113 = vld [vmem:[%s8] sm:$0x1]
        %v2115 = vlaneseq
        %v2116 = vshrl.u32 %v2115, 7
        %v2117 = vsub.s32 0, %v2116
        %v2118 = vrot.slane %v2113, %v2117
        %v2120 = vadd.f32 %v2111, %v2118
        %v2121 = vadd.f32 %v2112, %v2118
        %v2122 = vadd.f32 %v2120, %v1069
        %v2123 = vadd.f32 %v2121, %v1070
        %v2124 = vmax.f32 %v2122, 0.0
        %v2125 = vmax.f32 %v2123, 0.0
        %v2126 = vld [vmem:[%s9] sm:$0xff]
        %v2128 = vsel %vm1073, %v2126, 0
        %2130 = vmatprep.subr.mxu0 0.0
        %2131 = vmatpush1.msra.mxu0 %v2124
        %2132 = vmatprep.subr.mxu0 0.0
        %2133 = vmatpush1.msra.mxu0 %v2125
        %2134 = vmatprep.subr.mxu0 0.0
        %2135 = vmatpush1.msra.mxu0 0.0
        %2136 = vmatprep.subr.mxu0 0.0
        %2137 = vmatpush1.msra.mxu0 0.0
        %2138 = vmatprep.subr.mxu0 0.0
        %2139 = vmatpush1.msra.mxu0 0.0
        %2140 = vmatprep.subr.mxu0 0.0
        %2141 = vmatpush1.msra.mxu0 0.0
        %2142 = vmatprep.subr.mxu0 0.0
        %2143 = vmatpush1.msra.mxu0 0.0
        %2144 = vmatprep.subr.mxu0 0.0
        %2145 = vmatpush1.msra.mxu0 0.0
        %2146 = vmatprep.subr.mxu0 0.0
        %2147 = vmatpush1.msra.mxu0 0.0
        %2148 = vmatprep.subr.mxu0 0.0
        %2149 = vmatpush1.msra.mxu0 0.0
        %2150 = vmatprep.subr.mxu0 0.0
        %2151 = vmatpush1.msra.mxu0 0.0
        %2152 = vmatprep.subr.mxu0 0.0
        %2153 = vmatpush1.msra.mxu0 0.0
        %2154 = vmatprep.subr.mxu0 0.0
        %2155 = vmatpush1.msra.mxu0 0.0
        %2156 = vmatprep.subr.mxu0 0.0
        %2157 = vmatpush1.msra.mxu0 0.0
        %2158 = vmatprep.subr.mxu0 0.0
        %2159 = vmatpush1.msra.mxu0 0.0
        %2160 = vmatprep.subr.mxu0 0.0
        %2161 = vmatpush1.msra.mxu0 0.0
        %2162 = vmatprep.subr.mxu0 0.0
        %2163 = vmatpush1.msra.mxu0 0.0
        %2164 = vmatprep.subr.mxu0 0.0
        %2165 = vmatpush1.msra.mxu0 0.0
        %2166 = vmatprep.subr.mxu0 0.0
        %2167 = vmatpush1.msra.mxu0 0.0
        %2168 = vmatprep.subr.mxu0 0.0
        %2169 = vmatpush1.msra.mxu0 0.0
        %2170 = vmatprep.subr.mxu0 0.0
        %2171 = vmatpush1.msra.mxu0 0.0
        %2172 = vmatprep.subr.mxu0 0.0
        %2173 = vmatpush1.msra.mxu0 0.0
        %2174 = vmatprep.subr.mxu0 0.0
        %2175 = vmatpush1.msra.mxu0 0.0
        %2176 = vmatprep.subr.mxu0 0.0
        %2177 = vmatpush1.msra.mxu0 0.0
        %2178 = vmatprep.subr.mxu0 0.0
        %2179 = vmatpush1.msra.mxu0 0.0
        %2180 = vmatprep.subr.mxu0 0.0
        %2181 = vmatpush1.msra.mxu0 0.0
        %2182 = vmatprep.subr.mxu0 0.0
        %2183 = vmatpush1.msra.mxu0 0.0
        %2184 = vmatprep.subr.mxu0 0.0
        %2185 = vmatpush1.msra.mxu0 0.0
        %2186 = vmatprep.subr.mxu0 0.0
        %2187 = vmatpush1.msra.mxu0 0.0
        %2188 = vmatprep.subr.mxu0 0.0
        %2189 = vmatpush1.msra.mxu0 0.0
        %2190 = vmatprep.subr.mxu0 0.0
        %2191 = vmatpush1.msra.mxu0 0.0
        %2192 = vmatprep.subr.mxu0 0.0
        %2193 = vmatpush1.msra.mxu0 0.0
        %2194 = vmatprep.mubr.f32.mxu0 0.0
        %2195 = vmatmul.mubr.f32.gmra.mrb[0].mxu0 %v2128
        %v2196 = vpop.f32.mrb[0].mxu0
        %v2197 = vadd.f32 0.0, %v2196
        %v2198 = vpop.f32.mrb[0].mxu0
        %2199 = vdwg.mxu0
        %v2200 = vld [vmem:[%s10] sm:$0xff]
        %v2201 = vld [vmem:[%s10 + $0x8] sm:$0xff]
        %v2202 = vld [vmem:[%s10 + $0x10] sm:$0xff]
        %v2203 = vld [vmem:[%s10 + $0x18] sm:$0xff]
        %v2204 = vld [vmem:[%s10 + $0x20] sm:$0xff]
        %v2205 = vld [vmem:[%s10 + $0x28] sm:$0xff]
        %v2206 = vld [vmem:[%s10 + $0x30] sm:$0xff]
        %v2207 = vld [vmem:[%s10 + $0x38] sm:$0xff]
        %v2208 = vld [vmem:[%s10 + $0x40] sm:$0xff]
        %v2209 = vld [vmem:[%s10 + $0x48] sm:$0xff]
        %v2210 = vld [vmem:[%s10 + $0x50] sm:$0xff]
        %v2211 = vld [vmem:[%s10 + $0x58] sm:$0xff]
        %v2212 = vld [vmem:[%s10 + $0x60] sm:$0xff]
        %v2213 = vld [vmem:[%s10 + $0x68] sm:$0xff]
        %v2214 = vld [vmem:[%s10 + $0x70] sm:$0xff]
        %v2215 = vld [vmem:[%s10 + $0x78] sm:$0xff]
        %s2216 = scalar_lea.vmem %s9, 8
        %v2217 = vld [vmem:[%s2216] sm:$0xff]
        %v2219 = vsel %vm1073, %v2217, 0
        %2221 = vmatprep.subr.mxu0 0.0
        %2222 = vmatpush1.msra.mxu0 %v2124
        %2223 = vmatprep.subr.mxu0 0.0
        %2224 = vmatpush1.msra.mxu0 %v2125
        %2225 = vmatprep.subr.mxu0 0.0
        %2226 = vmatpush1.msra.mxu0 0.0
        %2227 = vmatprep.subr.mxu0 0.0
        %2228 = vmatpush1.msra.mxu0 0.0
        %2229 = vmatprep.subr.mxu0 0.0
        %2230 = vmatpush1.msra.mxu0 0.0
        %2231 = vmatprep.subr.mxu0 0.0
        %2232 = vmatpush1.msra.mxu0 0.0
        %2233 = vmatprep.subr.mxu0 0.0
        %2234 = vmatpush1.msra.mxu0 0.0
        %2235 = vmatprep.subr.mxu0 0.0
        %2236 = vmatpush1.msra.mxu0 0.0
        %2237 = vmatprep.subr.mxu0 0.0
        %2238 = vmatpush1.msra.mxu0 0.0
        %2239 = vmatprep.subr.mxu0 0.0
        %2240 = vmatpush1.msra.mxu0 0.0
        %2241 = vmatprep.subr.mxu0 0.0
        %2242 = vmatpush1.msra.mxu0 0.0
        %2243 = vmatprep.subr.mxu0 0.0
        %2244 = vmatpush1.msra.mxu0 0.0
        %2245 = vmatprep.subr.mxu0 0.0
        %2246 = vmatpush1.msra.mxu0 0.0
        %2247 = vmatprep.subr.mxu0 0.0
        %2248 = vmatpush1.msra.mxu0 0.0
        %2249 = vmatprep.subr.mxu0 0.0
        %2250 = vmatpush1.msra.mxu0 0.0
        %2251 = vmatprep.subr.mxu0 0.0
        %2252 = vmatpush1.msra.mxu0 0.0
        %2253 = vmatprep.subr.mxu0 0.0
        %2254 = vmatpush1.msra.mxu0 0.0
        %2255 = vmatprep.subr.mxu0 0.0
        %2256 = vmatpush1.msra.mxu0 0.0
        %2257 = vmatprep.subr.mxu0 0.0
        %2258 = vmatpush1.msra.mxu0 0.0
        %2259 = vmatprep.subr.mxu0 0.0
        %2260 = vmatpush1.msra.mxu0 0.0
        %2261 = vmatprep.subr.mxu0 0.0
        %2262 = vmatpush1.msra.mxu0 0.0
        %2263 = vmatprep.subr.mxu0 0.0
        %2264 = vmatpush1.msra.mxu0 0.0
        %2265 = vmatprep.subr.mxu0 0.0
        %2266 = vmatpush1.msra.mxu0 0.0
        %2267 = vmatprep.subr.mxu0 0.0
        %2268 = vmatpush1.msra.mxu0 0.0
        %2269 = vmatprep.subr.mxu0 0.0
        %2270 = vmatpush1.msra.mxu0 0.0
        %2271 = vmatprep.subr.mxu0 0.0
        %2272 = vmatpush1.msra.mxu0 0.0
        %2273 = vmatprep.subr.mxu0 0.0
        %2274 = vmatpush1.msra.mxu0 0.0
        %2275 = vmatprep.subr.mxu0 0.0
        %2276 = vmatpush1.msra.mxu0 0.0
        %2277 = vmatprep.subr.mxu0 0.0
        %2278 = vmatpush1.msra.mxu0 0.0
        %2279 = vmatprep.subr.mxu0 0.0
        %2280 = vmatpush1.msra.mxu0 0.0
        %2281 = vmatprep.subr.mxu0 0.0
        %2282 = vmatpush1.msra.mxu0 0.0
        %2283 = vmatprep.subr.mxu0 0.0
        %2284 = vmatpush1.msra.mxu0 0.0
        %2285 = vmatprep.mubr.f32.mxu0 0.0
        %2286 = vmatmul.mubr.f32.gmra.mrb[0].mxu0 %v2219
        %v2287 = vpop.f32.mrb[0].mxu0
        %v2288 = vadd.f32 0.0, %v2287
        %v2289 = vpop.f32.mrb[0].mxu0
        %2290 = vdwg.mxu0
        %s2291 = scalar_lea.vmem %s10, 128
        %v2292 = vld [vmem:[%s2291] sm:$0xff]
        %v2293 = vld [vmem:[%s2291 + $0x8] sm:$0xff]
        %v2294 = vld [vmem:[%s2291 + $0x10] sm:$0xff]
        %v2295 = vld [vmem:[%s2291 + $0x18] sm:$0xff]
        %v2296 = vld [vmem:[%s2291 + $0x20] sm:$0xff]
        %v2297 = vld [vmem:[%s2291 + $0x28] sm:$0xff]
        %v2298 = vld [vmem:[%s2291 + $0x30] sm:$0xff]
        %v2299 = vld [vmem:[%s2291 + $0x38] sm:$0xff]
        %v2300 = vld [vmem:[%s2291 + $0x40] sm:$0xff]
        %v2301 = vld [vmem:[%s2291 + $0x48] sm:$0xff]
        %v2302 = vld [vmem:[%s2291 + $0x50] sm:$0xff]
        %v2303 = vld [vmem:[%s2291 + $0x58] sm:$0xff]
        %v2304 = vld [vmem:[%s2291 + $0x60] sm:$0xff]
        %v2305 = vld [vmem:[%s2291 + $0x68] sm:$0xff]
        %v2306 = vld [vmem:[%s2291 + $0x70] sm:$0xff]
        %v2307 = vld [vmem:[%s2291 + $0x78] sm:$0xff]
        %2308 = vmatprep.subr.mxu0 0.0
        %2309 = vmatpush1.msra.mxu0 %v2292
        %2310 = vmatprep.subr.mxu0 0.0
        %2311 = vmatpush1.msra.mxu0 %v2293
        %2312 = vmatprep.subr.mxu0 0.0
        %2313 = vmatpush1.msra.mxu0 %v2294
        %2314 = vmatprep.subr.mxu0 0.0
        %2315 = vmatpush1.msra.mxu0 %v2295
        %2316 = vmatprep.subr.mxu0 0.0
        %2317 = vmatpush1.msra.mxu0 %v2296
        %2318 = vmatprep.subr.mxu0 0.0
        %2319 = vmatpush1.msra.mxu0 %v2297
        %2320 = vmatprep.subr.mxu0 0.0
        %2321 = vmatpush1.msra.mxu0 %v2298
        %2322 = vmatprep.subr.mxu0 0.0
        %2323 = vmatpush1.msra.mxu0 %v2299
        %2324 = vmatprep.subr.mxu0 0.0
        %2325 = vmatpush1.msra.mxu0 %v2300
        %2326 = vmatprep.subr.mxu0 0.0
        %2327 = vmatpush1.msra.mxu0 %v2301
        %2328 = vmatprep.subr.mxu0 0.0
        %2329 = vmatpush1.msra.mxu0 %v2302
        %2330 = vmatprep.subr.mxu0 0.0
        %2331 = vmatpush1.msra.mxu0 %v2303
        %2332 = vmatprep.subr.mxu0 0.0
        %2333 = vmatpush1.msra.mxu0 %v2304
        %2334 = vmatprep.subr.mxu0 0.0
        %2335 = vmatpush1.msra.mxu0 %v2305
        %2336 = vmatprep.subr.mxu0 0.0
        %2337 = vmatpush1.msra.mxu0 %v2306
        %2338 = vmatprep.subr.mxu0 0.0
        %2339 = vmatpush1.msra.mxu0 %v2307
        %2340 = vmatprep.subr.mxu0 0.0
        %2341 = vmatpush1.msra.mxu0 0.0
        %2342 = vmatprep.subr.mxu0 0.0
        %2343 = vmatpush1.msra.mxu0 0.0
        %2344 = vmatprep.subr.mxu0 0.0
        %2345 = vmatpush1.msra.mxu0 0.0
        %2346 = vmatprep.subr.mxu0 0.0
        %2347 = vmatpush1.msra.mxu0 0.0
        %2348 = vmatprep.subr.mxu0 0.0
        %2349 = vmatpush1.msra.mxu0 0.0
        %2350 = vmatprep.subr.mxu0 0.0
        %2351 = vmatpush1.msra.mxu0 0.0
        %2352 = vmatprep.subr.mxu0 0.0
        %2353 = vmatpush1.msra.mxu0 0.0
        %2354 = vmatprep.subr.mxu0 0.0
        %2355 = vmatpush1.msra.mxu0 0.0
        %2356 = vmatprep.subr.mxu0 0.0
        %2357 = vmatpush1.msra.mxu0 0.0
        %2358 = vmatprep.subr.mxu0 0.0
        %2359 = vmatpush1.msra.mxu0 0.0
        %2360 = vmatprep.subr.mxu0 0.0
        %2361 = vmatpush1.msra.mxu0 0.0
        %2362 = vmatprep.subr.mxu0 0.0
        %2363 = vmatpush1.msra.mxu0 0.0
        %2364 = vmatprep.subr.mxu0 0.0
        %2365 = vmatpush1.msra.mxu0 0.0
        %2366 = vmatprep.subr.mxu0 0.0
        %2367 = vmatpush1.msra.mxu0 0.0
        %2368 = vmatprep.subr.mxu0 0.0
        %2369 = vmatpush1.msra.mxu0 0.0
        %2370 = vmatprep.subr.mxu0 0.0
        %2371 = vmatpush1.msra.mxu0 0.0
        %2372 = vmatprep.mubr.f32.mxu0 0.0
        %2373 = vmatmul.mubr.f32.gmra.mrb[0].mxu0 %v2288
        %v2374 = vpop.f32.mrb[0].mxu0
        %v2375 = vadd.f32 0.0, %v2374
        %v2376 = vpop.f32.mrb[0].mxu0
        %2377 = vdwg.mxu0
        %2378 = vmatprep.subr.mxu0 0.0
        %2379 = vmatpush1.msra.mxu0 %v2200
        %2380 = vmatprep.subr.mxu0 0.0
        %2381 = vmatpush1.msra.mxu0 %v2201
        %2382 = vmatprep.subr.mxu0 0.0
        %2383 = vmatpush1.msra.mxu0 %v2202
        %2384 = vmatprep.subr.mxu0 0.0
        %2385 = vmatpush1.msra.mxu0 %v2203
        %2386 = vmatprep.subr.mxu0 0.0
        %2387 = vmatpush1.msra.mxu0 %v2204
        %2388 = vmatprep.subr.mxu0 0.0
        %2389 = vmatpush1.msra.mxu0 %v2205
        %2390 = vmatprep.subr.mxu0 0.0
        %2391 = vmatpush1.msra.mxu0 %v2206
        %2392 = vmatprep.subr.mxu0 0.0
        %2393 = vmatpush1.msra.mxu0 %v2207
        %2394 = vmatprep.subr.mxu0 0.0
        %2395 = vmatpush1.msra.mxu0 %v2208
        %2396 = vmatprep.subr.mxu0 0.0
        %2397 = vmatpush1.msra.mxu0 %v2209
        %2398 = vmatprep.subr.mxu0 0.0
        %2399 = vmatpush1.msra.mxu0 %v2210
        %2400 = vmatprep.subr.mxu0 0.0
        %2401 = vmatpush1.msra.mxu0 %v2211
        %2402 = vmatprep.subr.mxu0 0.0
        %2403 = vmatpush1.msra.mxu0 %v2212
        %2404 = vmatprep.subr.mxu0 0.0
        %2405 = vmatpush1.msra.mxu0 %v2213
        %2406 = vmatprep.subr.mxu0 0.0
        %2407 = vmatpush1.msra.mxu0 %v2214
        %2408 = vmatprep.subr.mxu0 0.0
        %2409 = vmatpush1.msra.mxu0 %v2215
        %2410 = vmatprep.subr.mxu0 0.0
        %2411 = vmatpush1.msra.mxu0 0.0
        %2412 = vmatprep.subr.mxu0 0.0
        %2413 = vmatpush1.msra.mxu0 0.0
        %2414 = vmatprep.subr.mxu0 0.0
        %2415 = vmatpush1.msra.mxu0 0.0
        %2416 = vmatprep.subr.mxu0 0.0
        %2417 = vmatpush1.msra.mxu0 0.0
        %2418 = vmatprep.subr.mxu0 0.0
        %2419 = vmatpush1.msra.mxu0 0.0
        %2420 = vmatprep.subr.mxu0 0.0
        %2421 = vmatpush1.msra.mxu0 0.0
        %2422 = vmatprep.subr.mxu0 0.0
        %2423 = vmatpush1.msra.mxu0 0.0
        %2424 = vmatprep.subr.mxu0 0.0
        %2425 = vmatpush1.msra.mxu0 0.0
        %2426 = vmatprep.subr.mxu0 0.0
        %2427 = vmatpush1.msra.mxu0 0.0
        %2428 = vmatprep.subr.mxu0 0.0
        %2429 = vmatpush1.msra.mxu0 0.0
        %2430 = vmatprep.subr.mxu0 0.0
        %2431 = vmatpush1.msra.mxu0 0.0
        %2432 = vmatprep.subr.mxu0 0.0
        %2433 = vmatpush1.msra.mxu0 0.0
        %2434 = vmatprep.subr.mxu0 0.0
        %2435 = vmatpush1.msra.mxu0 0.0
        %2436 = vmatprep.subr.mxu0 0.0
        %2437 = vmatpush1.msra.mxu0 0.0
        %2438 = vmatprep.subr.mxu0 0.0
        %2439 = vmatpush1.msra.mxu0 0.0
        %2440 = vmatprep.subr.mxu0 0.0
        %2441 = vmatpush1.msra.mxu0 0.0
        %2442 = vmatprep.mubr.f32.mxu0 0.0
        %2443 = vmatmul.mubr.f32.gmra.mrb[0].mxu0 %v2197
        %v2444 = vpop.f32.mrb[0].mxu0
        %v2445 = vadd.f32 %v2375, %v2444
        %v2446 = vpop.f32.mrb[0].mxu0
        %2447 = vdwg.mxu0
        %s2448 = scalar_lea.vmem %s9, 16
        %v2449 = vld [vmem:[%s2448] sm:$0xff]
        %v2451 = vsel %vm1073, %v2449, 0
        %2453 = vmatprep.subr.mxu0 0.0
        %2454 = vmatpush1.msra.mxu0 %v2124
        %2455 = vmatprep.subr.mxu0 0.0
        %2456 = vmatpush1.msra.mxu0 %v2125
        %2457 = vmatprep.subr.mxu0 0.0
        %2458 = vmatpush1.msra.mxu0 0.0
        %2459 = vmatprep.subr.mxu0 0.0
        %2460 = vmatpush1.msra.mxu0 0.0
        %2461 = vmatprep.subr.mxu0 0.0
        %2462 = vmatpush1.msra.mxu0 0.0
        %2463 = vmatprep.subr.mxu0 0.0
        %2464 = vmatpush1.msra.mxu0 0.0
        %2465 = vmatprep.subr.mxu0 0.0
        %2466 = vmatpush1.msra.mxu0 0.0
        %2467 = vmatprep.subr.mxu0 0.0
        %2468 = vmatpush1.msra.mxu0 0.0
        %2469 = vmatprep.subr.mxu0 0.0
        %2470 = vmatpush1.msra.mxu0 0.0
        %2471 = vmatprep.subr.mxu0 0.0
        %2472 = vmatpush1.msra.mxu0 0.0
        %2473 = vmatprep.subr.mxu0 0.0
        %2474 = vmatpush1.msra.mxu0 0.0
        %2475 = vmatprep.subr.mxu0 0.0
        %2476 = vmatpush1.msra.mxu0 0.0
        %2477 = vmatprep.subr.mxu0 0.0
        %2478 = vmatpush1.msra.mxu0 0.0
        %2479 = vmatprep.subr.mxu0 0.0
        %2480 = vmatpush1.msra.mxu0 0.0
        %2481 = vmatprep.subr.mxu0 0.0
        %2482 = vmatpush1.msra.mxu0 0.0
        %2483 = vmatprep.subr.mxu0 0.0
        %2484 = vmatpush1.msra.mxu0 0.0
        %2485 = vmatprep.subr.mxu0 0.0
        %2486 = vmatpush1.msra.mxu0 0.0
        %2487 = vmatprep.subr.mxu0 0.0
        %2488 = vmatpush1.msra.mxu0 0.0
        %2489 = vmatprep.subr.mxu0 0.0
        %2490 = vmatpush1.msra.mxu0 0.0
        %2491 = vmatprep.subr.mxu0 0.0
        %2492 = vmatpush1.msra.mxu0 0.0
        %2493 = vmatprep.subr.mxu0 0.0
        %2494 = vmatpush1.msra.mxu0 0.0
        %2495 = vmatprep.subr.mxu0 0.0
        %2496 = vmatpush1.msra.mxu0 0.0
        %2497 = vmatprep.subr.mxu0 0.0
        %2498 = vmatpush1.msra.mxu0 0.0
        %2499 = vmatprep.subr.mxu0 0.0
        %2500 = vmatpush1.msra.mxu0 0.0
        %2501 = vmatprep.subr.mxu0 0.0
        %2502 = vmatpush1.msra.mxu0 0.0
        %2503 = vmatprep.subr.mxu0 0.0
        %2504 = vmatpush1.msra.mxu0 0.0
        %2505 = vmatprep.subr.mxu0 0.0
        %2506 = vmatpush1.msra.mxu0 0.0
        %2507 = vmatprep.subr.mxu0 0.0
        %2508 = vmatpush1.msra.mxu0 0.0
        %2509 = vmatprep.subr.mxu0 0.0
        %2510 = vmatpush1.msra.mxu0 0.0
        %2511 = vmatprep.subr.mxu0 0.0
        %2512 = vmatpush1.msra.mxu0 0.0
        %2513 = vmatprep.subr.mxu0 0.0
        %2514 = vmatpush1.msra.mxu0 0.0
        %2515 = vmatprep.subr.mxu0 0.0
        %2516 = vmatpush1.msra.mxu0 0.0
        %2517 = vmatprep.mubr.f32.mxu0 0.0
        %2518 = vmatmul.mubr.f32.gmra.mrb[0].mxu0 %v2451
        %v2519 = vpop.f32.mrb[0].mxu0
        %v2520 = vadd.f32 0.0, %v2519
        %v2521 = vpop.f32.mrb[0].mxu0
        %2522 = vdwg.mxu0
        %s2523 = scalar_lea.vmem %s10, 256
        %v2524 = vld [vmem:[%s2523] sm:$0xff]
        %v2525 = vld [vmem:[%s2523 + $0x8] sm:$0xff]
        %v2526 = vld [vmem:[%s2523 + $0x10] sm:$0xff]
        %v2527 = vld [vmem:[%s2523 + $0x18] sm:$0xff]
        %v2528 = vld [vmem:[%s2523 + $0x20] sm:$0xff]
        %v2529 = vld [vmem:[%s2523 + $0x28] sm:$0xff]
        %v2530 = vld [vmem:[%s2523 + $0x30] sm:$0xff]
        %v2531 = vld [vmem:[%s2523 + $0x38] sm:$0xff]
        %v2532 = vld [vmem:[%s2523 + $0x40] sm:$0xff]
        %v2533 = vld [vmem:[%s2523 + $0x48] sm:$0xff]
        %v2534 = vld [vmem:[%s2523 + $0x50] sm:$0xff]
        %v2535 = vld [vmem:[%s2523 + $0x58] sm:$0xff]
        %v2536 = vld [vmem:[%s2523 + $0x60] sm:$0xff]
        %v2537 = vld [vmem:[%s2523 + $0x68] sm:$0xff]
        %v2538 = vld [vmem:[%s2523 + $0x70] sm:$0xff]
        %v2539 = vld [vmem:[%s2523 + $0x78] sm:$0xff]
        %2540 = vmatprep.subr.mxu0 0.0
        %2541 = vmatpush1.msra.mxu0 %v2524
        %2542 = vmatprep.subr.mxu0 0.0
        %2543 = vmatpush1.msra.mxu0 %v2525
        %2544 = vmatprep.subr.mxu0 0.0
        %2545 = vmatpush1.msra.mxu0 %v2526
        %2546 = vmatprep.subr.mxu0 0.0
        %2547 = vmatpush1.msra.mxu0 %v2527
        %2548 = vmatprep.subr.mxu0 0.0
        %2549 = vmatpush1.msra.mxu0 %v2528
        %2550 = vmatprep.subr.mxu0 0.0
        %2551 = vmatpush1.msra.mxu0 %v2529
        %2552 = vmatprep.subr.mxu0 0.0
        %2553 = vmatpush1.msra.mxu0 %v2530
        %2554 = vmatprep.subr.mxu0 0.0
        %2555 = vmatpush1.msra.mxu0 %v2531
        %2556 = vmatprep.subr.mxu0 0.0
        %2557 = vmatpush1.msra.mxu0 %v2532
        %2558 = vmatprep.subr.mxu0 0.0
        %2559 = vmatpush1.msra.mxu0 %v2533
        %2560 = vmatprep.subr.mxu0 0.0
        %2561 = vmatpush1.msra.mxu0 %v2534
        %2562 = vmatprep.subr.mxu0 0.0
        %2563 = vmatpush1.msra.mxu0 %v2535
        %2564 = vmatprep.subr.mxu0 0.0
        %2565 = vmatpush1.msra.mxu0 %v2536
        %2566 = vmatprep.subr.mxu0 0.0
        %2567 = vmatpush1.msra.mxu0 %v2537
        %2568 = vmatprep.subr.mxu0 0.0
        %2569 = vmatpush1.msra.mxu0 %v2538
        %2570 = vmatprep.subr.mxu0 0.0
        %2571 = vmatpush1.msra.mxu0 %v2539
        %2572 = vmatprep.subr.mxu0 0.0
        %2573 = vmatpush1.msra.mxu0 0.0
        %2574 = vmatprep.subr.mxu0 0.0
        %2575 = vmatpush1.msra.mxu0 0.0
        %2576 = vmatprep.subr.mxu0 0.0
        %2577 = vmatpush1.msra.mxu0 0.0
        %2578 = vmatprep.subr.mxu0 0.0
        %2579 = vmatpush1.msra.mxu0 0.0
        %2580 = vmatprep.subr.mxu0 0.0
        %2581 = vmatpush1.msra.mxu0 0.0
        %2582 = vmatprep.subr.mxu0 0.0
        %2583 = vmatpush1.msra.mxu0 0.0
        %2584 = vmatprep.subr.mxu0 0.0
        %2585 = vmatpush1.msra.mxu0 0.0
        %2586 = vmatprep.subr.mxu0 0.0
        %2587 = vmatpush1.msra.mxu0 0.0
        %2588 = vmatprep.subr.mxu0 0.0
        %2589 = vmatpush1.msra.mxu0 0.0
        %2590 = vmatprep.subr.mxu0 0.0
        %2591 = vmatpush1.msra.mxu0 0.0
        %2592 = vmatprep.subr.mxu0 0.0
        %2593 = vmatpush1.msra.mxu0 0.0
        %2594 = vmatprep.subr.mxu0 0.0
        %2595 = vmatpush1.msra.mxu0 0.0
        %2596 = vmatprep.subr.mxu0 0.0
        %2597 = vmatpush1.msra.mxu0 0.0
        %2598 = vmatprep.subr.mxu0 0.0
        %2599 = vmatpush1.msra.mxu0 0.0
        %2600 = vmatprep.subr.mxu0 0.0
        %2601 = vmatpush1.msra.mxu0 0.0
        %2602 = vmatprep.subr.mxu0 0.0
        %2603 = vmatpush1.msra.mxu0 0.0
        %2604 = vmatprep.mubr.f32.mxu0 0.0
        %2605 = vmatmul.mubr.f32.gmra.mrb[0].mxu0 %v2520
        %v2606 = vpop.f32.mrb[0].mxu0
        %v2607 = vadd.f32 0.0, %v2606
        %v2608 = vpop.f32.mrb[0].mxu0
        %2609 = vdwg.mxu0
        %v2610 = vadd.f32 %v2445, %v2607
        %v2611 = vld [vmem:[%s11] sm:$0x1]
        %v2613 = vlaneseq
        %v2614 = vshrl.u32 %v2613, 7
        %v2615 = vsub.s32 0, %v2614
        %v2616 = vrot.slane %v2611, %v2615
        %v2618 = vadd.f32 %v2610, %v2616
        %v2619 = vmax.f32 %v2618, 0.0
        %v2620 = vld [vmem:[%s14] sm:$0xff]
        %v2621 = vld [vmem:[%s14 + $0x8] sm:$0xff]
        %v2622 = vld [vmem:[%s15] sm:$0xff]
        %v2623 = vld [vmem:[%s15 + $0x8] sm:$0xff]
        %v2624 = vld [vmem:[%s15 + $0x10] sm:$0xff]
        %v2625 = vld [vmem:[%s15 + $0x18] sm:$0xff]
        %v2626 = vld [vmem:[%s15 + $0x20] sm:$0xff]
        %v2627 = vld [vmem:[%s15 + $0x28] sm:$0xff]
        %v2628 = vld [vmem:[%s15 + $0x30] sm:$0xff]
        %v2629 = vld [vmem:[%s15 + $0x38] sm:$0xff]
        %v2630 = vld [vmem:[%s15 + $0x40] sm:$0xff]
        %v2631 = vld [vmem:[%s15 + $0x48] sm:$0xff]
        %v2632 = vld [vmem:[%s15 + $0x50] sm:$0xff]
        %v2633 = vld [vmem:[%s15 + $0x58] sm:$0xff]
        %v2634 = vld [vmem:[%s15 + $0x60] sm:$0xff]
        %v2635 = vld [vmem:[%s15 + $0x68] sm:$0xff]
        %v2636 = vld [vmem:[%s15 + $0x70] sm:$0xff]
        %v2637 = vld [vmem:[%s15 + $0x78] sm:$0xff]
        %v2638 = vld [vmem:[%s15 + $0x80] sm:$0xff]
        %v2639 = vld [vmem:[%s15 + $0x88] sm:$0xff]
        %v2640 = vld [vmem:[%s15 + $0x90] sm:$0xff]
        %v2641 = vld [vmem:[%s15 + $0x98] sm:$0xff]
        %v2642 = vld [vmem:[%s15 + $0xa0] sm:$0xff]
        %v2643 = vld [vmem:[%s15 + $0xa8] sm:$0xff]
        %v2644 = vld [vmem:[%s15 + $0xb0] sm:$0xff]
        %v2645 = vld [vmem:[%s15 + $0xb8] sm:$0xff]
        %v2646 = vld [vmem:[%s15 + $0xc0] sm:$0xff]
        %v2647 = vld [vmem:[%s15 + $0xc8] sm:$0xff]
        %v2648 = vld [vmem:[%s15 + $0xd0] sm:$0xff]
        %v2649 = vld [vmem:[%s15 + $0xd8] sm:$0xff]
        %v2650 = vld [vmem:[%s12] sm:$0xff]
        %v2651 = vld [vmem:[%s12 + $0x8] sm:$0xff]
        %v2652 = vld [vmem:[%s12 + $0x10] sm:$0xff]
        %v2653 = vld [vmem:[%s12 + $0x18] sm:$0xff]
        %v2654 = vld [vmem:[%s12 + $0x20] sm:$0xff]
        %v2655 = vld [vmem:[%s12 + $0x28] sm:$0xff]
        %v2656 = vld [vmem:[%s12 + $0x30] sm:$0xff]
        %v2657 = vld [vmem:[%s12 + $0x38] sm:$0xff]
        %v2658 = vld [vmem:[%s12 + $0x40] sm:$0xff]
        %v2659 = vld [vmem:[%s12 + $0x48] sm:$0xff]
        %v2660 = vld [vmem:[%s12 + $0x50] sm:$0xff]
        %v2661 = vld [vmem:[%s12 + $0x58] sm:$0xff]
        %v2662 = vld [vmem:[%s12 + $0x60] sm:$0xff]
        %v2663 = vld [vmem:[%s12 + $0x68] sm:$0xff]
        %v2664 = vld [vmem:[%s12 + $0x70] sm:$0xff]
        %v2665 = vld [vmem:[%s12 + $0x78] sm:$0xff]
        %v2666 = vld [vmem:[%s13] sm:$0x1]
        %v2668 = vlaneseq
        %v2669 = vshrl.u32 %v2668, 7
        %v2670 = vsub.s32 0, %v2669
        %v2671 = vrot.slane %v2666, %v2670
        %2673 = vmatprep.subr.mxu0 0.0
        %2674 = vmatpush1.msra.mxu0 %v2650
        %2675 = vmatprep.subr.mxu0 0.0
        %2676 = vmatpush1.msra.mxu0 %v2651
        %2677 = vmatprep.subr.mxu0 0.0
        %2678 = vmatpush1.msra.mxu0 %v2652
        %2679 = vmatprep.subr.mxu0 0.0
        %2680 = vmatpush1.msra.mxu0 %v2653
        %2681 = vmatprep.subr.mxu0 0.0
        %2682 = vmatpush1.msra.mxu0 %v2654
        %2683 = vmatprep.subr.mxu0 0.0
        %2684 = vmatpush1.msra.mxu0 %v2655
        %2685 = vmatprep.subr.mxu0 0.0
        %2686 = vmatpush1.msra.mxu0 %v2656
        %2687 = vmatprep.subr.mxu0 0.0
        %2688 = vmatpush1.msra.mxu0 %v2657
        %2689 = vmatprep.subr.mxu0 0.0
        %2690 = vmatpush1.msra.mxu0 %v2658
        %2691 = vmatprep.subr.mxu0 0.0
        %2692 = vmatpush1.msra.mxu0 %v2659
        %2693 = vmatprep.subr.mxu0 0.0
        %2694 = vmatpush1.msra.mxu0 %v2660
        %2695 = vmatprep.subr.mxu0 0.0
        %2696 = vmatpush1.msra.mxu0 %v2661
        %2697 = vmatprep.subr.mxu0 0.0
        %2698 = vmatpush1.msra.mxu0 %v2662
        %2699 = vmatprep.subr.mxu0 0.0
        %2700 = vmatpush1.msra.mxu0 %v2663
        %2701 = vmatprep.subr.mxu0 0.0
        %2702 = vmatpush1.msra.mxu0 %v2664
        %2703 = vmatprep.subr.mxu0 0.0
        %2704 = vmatpush1.msra.mxu0 %v2665
        %2705 = vmatprep.subr.mxu0 0.0
        %2706 = vmatpush1.msra.mxu0 0.0
        %2707 = vmatprep.subr.mxu0 0.0
        %2708 = vmatpush1.msra.mxu0 0.0
        %2709 = vmatprep.subr.mxu0 0.0
        %2710 = vmatpush1.msra.mxu0 0.0
        %2711 = vmatprep.subr.mxu0 0.0
        %2712 = vmatpush1.msra.mxu0 0.0
        %2713 = vmatprep.subr.mxu0 0.0
        %2714 = vmatpush1.msra.mxu0 0.0
        %2715 = vmatprep.subr.mxu0 0.0
        %2716 = vmatpush1.msra.mxu0 0.0
        %2717 = vmatprep.subr.mxu0 0.0
        %2718 = vmatpush1.msra.mxu0 0.0
        %2719 = vmatprep.subr.mxu0 0.0
        %2720 = vmatpush1.msra.mxu0 0.0
        %2721 = vmatprep.subr.mxu0 0.0
        %2722 = vmatpush1.msra.mxu0 0.0
        %2723 = vmatprep.subr.mxu0 0.0
        %2724 = vmatpush1.msra.mxu0 0.0
        %2725 = vmatprep.subr.mxu0 0.0
        %2726 = vmatpush1.msra.mxu0 0.0
        %2727 = vmatprep.subr.mxu0 0.0
        %2728 = vmatpush1.msra.mxu0 0.0
        %2729 = vmatprep.subr.mxu0 0.0
        %2730 = vmatpush1.msra.mxu0 0.0
        %2731 = vmatprep.subr.mxu0 0.0
        %2732 = vmatpush1.msra.mxu0 0.0
        %2733 = vmatprep.subr.mxu0 0.0
        %2734 = vmatpush1.msra.mxu0 0.0
        %2735 = vmatprep.subr.mxu0 0.0
        %2736 = vmatpush1.msra.mxu0 0.0
        %2737 = vmatprep.mubr.f32.mxu0 0.0
        %2738 = vmatmul.mubr.f32.gmra.mrb[0].mxu0 %v2619
        %v2739 = vpop.f32.mrb[0].mxu0
        %v2740 = vadd.f32 %v2671, %v2739
        %v2741 = vpop.f32.mrb[0].mxu0
        %2742 = vdwg.mxu0
        %vm2743 = vcmask 64512
        %v2745 = vsel %vm2743, %v2740, 0
        %2747 = vmatprep.subr.mxu0 %v2621
        %2748 = vmatpush1.msra.mxu0 %v2620
        %2749 = vmatprep.subr.mxu0 0.0
        %2750 = vmatpush1.msra.mxu0 0.0
        %2751 = vmatprep.subr.mxu0 0.0
        %2752 = vmatpush1.msra.mxu0 0.0
        %2753 = vmatprep.subr.mxu0 0.0
        %2754 = vmatpush1.msra.mxu0 0.0
        %2755 = vmatprep.subr.mxu0 0.0
        %2756 = vmatpush1.msra.mxu0 0.0
        %2757 = vmatprep.subr.mxu0 0.0
        %2758 = vmatpush1.msra.mxu0 0.0
        %2759 = vmatprep.subr.mxu0 0.0
        %2760 = vmatpush1.msra.mxu0 0.0
        %2761 = vmatprep.subr.mxu0 0.0
        %2762 = vmatpush1.msra.mxu0 0.0
        %2763 = vmatprep.subr.mxu0 0.0
        %2764 = vmatpush1.msra.mxu0 0.0
        %2765 = vmatprep.subr.mxu0 0.0
        %2766 = vmatpush1.msra.mxu0 0.0
        %2767 = vmatprep.subr.mxu0 0.0
        %2768 = vmatpush1.msra.mxu0 0.0
        %2769 = vmatprep.subr.mxu0 0.0
        %2770 = vmatpush1.msra.mxu0 0.0
        %2771 = vmatprep.subr.mxu0 0.0
        %2772 = vmatpush1.msra.mxu0 0.0
        %2773 = vmatprep.subr.mxu0 0.0
        %2774 = vmatpush1.msra.mxu0 0.0
        %2775 = vmatprep.subr.mxu0 0.0
        %2776 = vmatpush1.msra.mxu0 0.0
        %2777 = vmatprep.subr.mxu0 0.0
        %2778 = vmatpush1.msra.mxu0 0.0
        %2779 = vmatprep.subr.mxu0 0.0
        %2780 = vmatpush1.msra.mxu0 0.0
        %2781 = vmatprep.subr.mxu0 0.0
        %2782 = vmatpush1.msra.mxu0 0.0
        %2783 = vmatprep.subr.mxu0 0.0
        %2784 = vmatpush1.msra.mxu0 0.0
        %2785 = vmatprep.subr.mxu0 0.0
        %2786 = vmatpush1.msra.mxu0 0.0
        %2787 = vmatprep.subr.mxu0 0.0
        %2788 = vmatpush1.msra.mxu0 0.0
        %2789 = vmatprep.subr.mxu0 0.0
        %2790 = vmatpush1.msra.mxu0 0.0
        %2791 = vmatprep.subr.mxu0 0.0
        %2792 = vmatpush1.msra.mxu0 0.0
        %2793 = vmatprep.subr.mxu0 0.0
        %2794 = vmatpush1.msra.mxu0 0.0
        %2795 = vmatprep.subr.mxu0 0.0
        %2796 = vmatpush1.msra.mxu0 0.0
        %2797 = vmatprep.subr.mxu0 0.0
        %2798 = vmatpush1.msra.mxu0 0.0
        %2799 = vmatprep.subr.mxu0 0.0
        %2800 = vmatpush1.msra.mxu0 0.0
        %2801 = vmatprep.subr.mxu0 0.0
        %2802 = vmatpush1.msra.mxu0 0.0
        %2803 = vmatprep.subr.mxu0 0.0
        %2804 = vmatpush1.msra.mxu0 0.0
        %2805 = vmatprep.subr.mxu0 0.0
        %2806 = vmatpush1.msra.mxu0 0.0
        %2807 = vmatprep.subr.mxu0 0.0
        %2808 = vmatpush1.msra.mxu0 0.0
        %2809 = vmatprep.subr.mxu0 0.0
        %2810 = vmatpush1.msra.mxu0 0.0
        %2811 = vmatprep.mubr.f32.mxu0 0.0
        %2812 = vmatmul.mubr.f32.gmra.mrb[0].mxu0 %v2745
        %v2813 = vpop.f32.mrb[0].mxu0
        %v2814 = vadd.f32 0.0, %v2813
        %v2815 = vpop.f32.mrb[0].mxu0
        %v2816 = vadd.f32 0.0, %v2815
        %2817 = vdwg.mxu0
        %v2819 = vsel %vm2743, %v2622, 0
        %v2822 = vsel %vm2743, %v2623, 0
        %v2825 = vsel %vm2743, %v2624, 0
        %v2828 = vsel %vm2743, %v2625, 0
        %v2831 = vsel %vm2743, %v2626, 0
        %v2834 = vsel %vm2743, %v2627, 0
        %v2837 = vsel %vm2743, %v2628, 0
        %v2840 = vsel %vm2743, %v2629, 0
        %v2843 = vsel %vm2743, %v2630, 0
        %v2846 = vsel %vm2743, %v2631, 0
        %v2849 = vsel %vm2743, %v2632, 0
        %v2852 = vsel %vm2743, %v2633, 0
        %v2855 = vsel %vm2743, %v2634, 0
        %v2858 = vsel %vm2743, %v2635, 0
        %v2861 = vsel %vm2743, %v2636, 0
        %v2864 = vsel %vm2743, %v2637, 0
        %v2867 = vsel %vm2743, %v2638, 0
        %v2870 = vsel %vm2743, %v2639, 0
        %v2873 = vsel %vm2743, %v2640, 0
        %v2876 = vsel %vm2743, %v2641, 0
        %v2879 = vsel %vm2743, %v2642, 0
        %v2882 = vsel %vm2743, %v2643, 0
        %v2885 = vsel %vm2743, %v2644, 0
        %v2888 = vsel %vm2743, %v2645, 0
        %v2891 = vsel %vm2743, %v2646, 0
        %v2894 = vsel %vm2743, %v2647, 0
        %v2897 = vsel %vm2743, %v2648, 0
        %v2900 = vsel %vm2743, %v2649, 0
        %2902 = vmatprep.subr.mxu0 %v2816
        %2903 = vmatpush1.msra.mxu0 %v2814
        %2904 = vmatprep.subr.mxu0 0.0
        %2905 = vmatpush1.msra.mxu0 0.0
        %2906 = vmatprep.subr.mxu0 0.0
        %2907 = vmatpush1.msra.mxu0 0.0
        %2908 = vmatprep.subr.mxu0 0.0
        %2909 = vmatpush1.msra.mxu0 0.0
        %2910 = vmatprep.subr.mxu0 0.0
        %2911 = vmatpush1.msra.mxu0 0.0
        %2912 = vmatprep.subr.mxu0 0.0
        %2913 = vmatpush1.msra.mxu0 0.0
        %2914 = vmatprep.subr.mxu0 0.0
        %2915 = vmatpush1.msra.mxu0 0.0
        %2916 = vmatprep.subr.mxu0 0.0
        %2917 = vmatpush1.msra.mxu0 0.0
        %2918 = vmatprep.subr.mxu0 0.0
        %2919 = vmatpush1.msra.mxu0 0.0
        %2920 = vmatprep.subr.mxu0 0.0
        %2921 = vmatpush1.msra.mxu0 0.0
        %2922 = vmatprep.subr.mxu0 0.0
        %2923 = vmatpush1.msra.mxu0 0.0
        %2924 = vmatprep.subr.mxu0 0.0
        %2925 = vmatpush1.msra.mxu0 0.0
        %2926 = vmatprep.subr.mxu0 0.0
        %2927 = vmatpush1.msra.mxu0 0.0
        %2928 = vmatprep.subr.mxu0 0.0
        %2929 = vmatpush1.msra.mxu0 0.0
        %2930 = vmatprep.subr.mxu0 0.0
        %2931 = vmatpush1.msra.mxu0 0.0
        %2932 = vmatprep.subr.mxu0 0.0
        %2933 = vmatpush1.msra.mxu0 0.0
        %2934 = vmatprep.subr.mxu0 0.0
        %2935 = vmatpush1.msra.mxu0 0.0
        %2936 = vmatprep.subr.mxu0 0.0
        %2937 = vmatpush1.msra.mxu0 0.0
        %2938 = vmatprep.subr.mxu0 0.0
        %2939 = vmatpush1.msra.mxu0 0.0
        %2940 = vmatprep.subr.mxu0 0.0
        %2941 = vmatpush1.msra.mxu0 0.0
        %2942 = vmatprep.subr.mxu0 0.0
        %2943 = vmatpush1.msra.mxu0 0.0
        %2944 = vmatprep.subr.mxu0 0.0
        %2945 = vmatpush1.msra.mxu0 0.0
        %2946 = vmatprep.subr.mxu0 0.0
        %2947 = vmatpush1.msra.mxu0 0.0
        %2948 = vmatprep.subr.mxu0 0.0
        %2949 = vmatpush1.msra.mxu0 0.0
        %2950 = vmatprep.subr.mxu0 0.0
        %2951 = vmatpush1.msra.mxu0 0.0
        %2952 = vmatprep.subr.mxu0 0.0
        %2953 = vmatpush1.msra.mxu0 0.0
        %2954 = vmatprep.subr.mxu0 0.0
        %2955 = vmatpush1.msra.mxu0 0.0
        %2956 = vmatprep.subr.mxu0 0.0
        %2957 = vmatpush1.msra.mxu0 0.0
        %2958 = vmatprep.subr.mxu0 0.0
        %2959 = vmatpush1.msra.mxu0 0.0
        %2960 = vmatprep.subr.mxu0 0.0
        %2961 = vmatpush1.msra.mxu0 0.0
        %2962 = vmatprep.subr.mxu0 0.0
        %2963 = vmatpush1.msra.mxu0 0.0
        %2964 = vmatprep.subr.mxu0 0.0
        %2965 = vmatpush1.msra.mxu0 0.0
        %2966 = vmatprep.mubr.f32.mxu0 0.0
        %2967 = vmatmul.mubr.f32.gmra.mrb[0].mxu0 %v2819
        %v2968 = vpop.f32.mrb[0].mxu0
        %v2969 = vadd.f32 0.0, %v2968
        %v2970 = vpop.f32.mrb[0].mxu0
        %v2971 = vadd.f32 0.0, %v2970
        %2972 = vmatprep.mubr.f32.mxu0 0.0
        %2973 = vmatmul.mubr.f32.gmra.mrb[0].mxu0 %v2822
        %v2974 = vpop.f32.mrb[0].mxu0
        %v2975 = vadd.f32 0.0, %v2974
        %v2976 = vpop.f32.mrb[0].mxu0
        %v2977 = vadd.f32 0.0, %v2976
        %2978 = vmatprep.mubr.f32.mxu0 0.0
        %2979 = vmatmul.mubr.f32.gmra.mrb[0].mxu0 %v2825
        %v2980 = vpop.f32.mrb[0].mxu0
        %v2981 = vadd.f32 0.0, %v2980
        %v2982 = vpop.f32.mrb[0].mxu0
        %v2983 = vadd.f32 0.0, %v2982
        %2984 = vmatprep.mubr.f32.mxu0 0.0
        %2985 = vmatmul.mubr.f32.gmra.mrb[0].mxu0 %v2828
        %v2986 = vpop.f32.mrb[0].mxu0
        %v2987 = vadd.f32 0.0, %v2986
        %v2988 = vpop.f32.mrb[0].mxu0
        %v2989 = vadd.f32 0.0, %v2988
        %2990 = vmatprep.mubr.f32.mxu0 0.0
        %2991 = vmatmul.mubr.f32.gmra.mrb[0].mxu0 %v2831
        %v2992 = vpop.f32.mrb[0].mxu0
        %v2993 = vadd.f32 0.0, %v2992
        %v2994 = vpop.f32.mrb[0].mxu0
        %v2995 = vadd.f32 0.0, %v2994
        %2996 = vmatprep.mubr.f32.mxu0 0.0
        %2997 = vmatmul.mubr.f32.gmra.mrb[0].mxu0 %v2834
        %v2998 = vpop.f32.mrb[0].mxu0
        %v2999 = vadd.f32 0.0, %v2998
        %v3000 = vpop.f32.mrb[0].mxu0
        %v3001 = vadd.f32 0.0, %v3000
        %3002 = vmatprep.mubr.f32.mxu0 0.0
        %3003 = vmatmul.mubr.f32.gmra.mrb[0].mxu0 %v2837
        %v3004 = vpop.f32.mrb[0].mxu0
        %v3005 = vadd.f32 0.0, %v3004
        %v3006 = vpop.f32.mrb[0].mxu0
        %v3007 = vadd.f32 0.0, %v3006
        %3008 = vmatprep.mubr.f32.mxu0 0.0
        %3009 = vmatmul.mubr.f32.gmra.mrb[0].mxu0 %v2840
        %v3010 = vpop.f32.mrb[0].mxu0
        %v3011 = vadd.f32 0.0, %v3010
        %v3012 = vpop.f32.mrb[0].mxu0
        %v3013 = vadd.f32 0.0, %v3012
        %3014 = vmatprep.mubr.f32.mxu0 0.0
        %3015 = vmatmul.mubr.f32.gmra.mrb[0].mxu0 %v2843
        %v3016 = vpop.f32.mrb[0].mxu0
        %v3017 = vadd.f32 0.0, %v3016
        %v3018 = vpop.f32.mrb[0].mxu0
        %v3019 = vadd.f32 0.0, %v3018
        %3020 = vmatprep.mubr.f32.mxu0 0.0
        %3021 = vmatmul.mubr.f32.gmra.mrb[0].mxu0 %v2846
        %v3022 = vpop.f32.mrb[0].mxu0
        %v3023 = vadd.f32 0.0, %v3022
        %v3024 = vpop.f32.mrb[0].mxu0
        %v3025 = vadd.f32 0.0, %v3024
        %3026 = vmatprep.mubr.f32.mxu0 0.0
        %3027 = vmatmul.mubr.f32.gmra.mrb[0].mxu0 %v2849
        %v3028 = vpop.f32.mrb[0].mxu0
        %v3029 = vadd.f32 0.0, %v3028
        %v3030 = vpop.f32.mrb[0].mxu0
        %v3031 = vadd.f32 0.0, %v3030
        %3032 = vmatprep.mubr.f32.mxu0 0.0
        %3033 = vmatmul.mubr.f32.gmra.mrb[0].mxu0 %v2852
        %v3034 = vpop.f32.mrb[0].mxu0
        %v3035 = vadd.f32 0.0, %v3034
        %v3036 = vpop.f32.mrb[0].mxu0
        %v3037 = vadd.f32 0.0, %v3036
        %3038 = vmatprep.mubr.f32.mxu0 0.0
        %3039 = vmatmul.mubr.f32.gmra.mrb[0].mxu0 %v2855
        %v3040 = vpop.f32.mrb[0].mxu0
        %v3041 = vadd.f32 0.0, %v3040
        %v3042 = vpop.f32.mrb[0].mxu0
        %v3043 = vadd.f32 0.0, %v3042
        %3044 = vmatprep.mubr.f32.mxu0 0.0
        %3045 = vmatmul.mubr.f32.gmra.mrb[0].mxu0 %v2858
        %v3046 = vpop.f32.mrb[0].mxu0
        %v3047 = vadd.f32 0.0, %v3046
        %v3048 = vpop.f32.mrb[0].mxu0
        %v3049 = vadd.f32 0.0, %v3048
        %3050 = vmatprep.mubr.f32.mxu0 0.0
        %3051 = vmatmul.mubr.f32.gmra.mrb[0].mxu0 %v2861
        %v3052 = vpop.f32.mrb[0].mxu0
        %v3053 = vadd.f32 0.0, %v3052
        %v3054 = vpop.f32.mrb[0].mxu0
        %v3055 = vadd.f32 0.0, %v3054
        %3056 = vmatprep.mubr.f32.mxu0 0.0
        %3057 = vmatmul.mubr.f32.gmra.mrb[0].mxu0 %v2864
        %v3058 = vpop.f32.mrb[0].mxu0
        %v3059 = vadd.f32 0.0, %v3058
        %v3060 = vpop.f32.mrb[0].mxu0
        %v3061 = vadd.f32 0.0, %v3060
        %3062 = vmatprep.mubr.f32.mxu0 0.0
        %3063 = vmatmul.mubr.f32.gmra.mrb[0].mxu0 %v2867
        %v3064 = vpop.f32.mrb[0].mxu0
        %v3065 = vadd.f32 0.0, %v3064
        %v3066 = vpop.f32.mrb[0].mxu0
        %v3067 = vadd.f32 0.0, %v3066
        %3068 = vmatprep.mubr.f32.mxu0 0.0
        %3069 = vmatmul.mubr.f32.gmra.mrb[0].mxu0 %v2870
        %v3070 = vpop.f32.mrb[0].mxu0
        %v3071 = vadd.f32 0.0, %v3070
        %v3072 = vpop.f32.mrb[0].mxu0
        %v3073 = vadd.f32 0.0, %v3072
        %3074 = vmatprep.mubr.f32.mxu0 0.0
        %3075 = vmatmul.mubr.f32.gmra.mrb[0].mxu0 %v2873
        %v3076 = vpop.f32.mrb[0].mxu0
        %v3077 = vadd.f32 0.0, %v3076
        %v3078 = vpop.f32.mrb[0].mxu0
        %v3079 = vadd.f32 0.0, %v3078
        %3080 = vmatprep.mubr.f32.mxu0 0.0
        %3081 = vmatmul.mubr.f32.gmra.mrb[0].mxu0 %v2876
        %v3082 = vpop.f32.mrb[0].mxu0
        %v3083 = vadd.f32 0.0, %v3082
        %v3084 = vpop.f32.mrb[0].mxu0
        %v3085 = vadd.f32 0.0, %v3084
        %3086 = vmatprep.mubr.f32.mxu0 0.0
        %3087 = vmatmul.mubr.f32.gmra.mrb[0].mxu0 %v2879
        %v3088 = vpop.f32.mrb[0].mxu0
        %v3089 = vadd.f32 0.0, %v3088
        %v3090 = vpop.f32.mrb[0].mxu0
        %v3091 = vadd.f32 0.0, %v3090
        %3092 = vmatprep.mubr.f32.mxu0 0.0
        %3093 = vmatmul.mubr.f32.gmra.mrb[0].mxu0 %v2882
        %v3094 = vpop.f32.mrb[0].mxu0
        %v3095 = vadd.f32 0.0, %v3094
        %v3096 = vpop.f32.mrb[0].mxu0
        %v3097 = vadd.f32 0.0, %v3096
        %3098 = vmatprep.mubr.f32.mxu0 0.0
        %3099 = vmatmul.mubr.f32.gmra.mrb[0].mxu0 %v2885
        %v3100 = vpop.f32.mrb[0].mxu0
        %v3101 = vadd.f32 0.0, %v3100
        %v3102 = vpop.f32.mrb[0].mxu0
        %v3103 = vadd.f32 0.0, %v3102
        %3104 = vmatprep.mubr.f32.mxu0 0.0
        %3105 = vmatmul.mubr.f32.gmra.mrb[0].mxu0 %v2888
        %v3106 = vpop.f32.mrb[0].mxu0
        %v3107 = vadd.f32 0.0, %v3106
        %v3108 = vpop.f32.mrb[0].mxu0
        %v3109 = vadd.f32 0.0, %v3108
        %3110 = vmatprep.mubr.f32.mxu0 0.0
        %3111 = vmatmul.mubr.f32.gmra.mrb[0].mxu0 %v2891
        %v3112 = vpop.f32.mrb[0].mxu0
        %v3113 = vadd.f32 0.0, %v3112
        %v3114 = vpop.f32.mrb[0].mxu0
        %v3115 = vadd.f32 0.0, %v3114
        %3116 = vmatprep.mubr.f32.mxu0 0.0
        %3117 = vmatmul.mubr.f32.gmra.mrb[0].mxu0 %v2894
        %v3118 = vpop.f32.mrb[0].mxu0
        %v3119 = vadd.f32 0.0, %v3118
        %v3120 = vpop.f32.mrb[0].mxu0
        %v3121 = vadd.f32 0.0, %v3120
        %3122 = vmatprep.mubr.f32.mxu0 0.0
        %3123 = vmatmul.mubr.f32.gmra.mrb[0].mxu0 %v2897
        %v3124 = vpop.f32.mrb[0].mxu0
        %v3125 = vadd.f32 0.0, %v3124
        %v3126 = vpop.f32.mrb[0].mxu0
        %v3127 = vadd.f32 0.0, %v3126
        %3128 = vmatprep.mubr.f32.mxu0 0.0
        %3129 = vmatmul.mubr.f32.gmra.mrb[0].mxu0 %v2900
        %v3130 = vpop.f32.mrb[0].mxu0
        %v3131 = vadd.f32 0.0, %v3130
        %v3132 = vpop.f32.mrb[0].mxu0
        %v3133 = vadd.f32 0.0, %v3132
        %3134 = vdwg.mxu0
        %3135 = vst [vmem:[%s514] sm:$0xff] %v2969
        %3136 = vst.msk [vmem:[%s514 + $0x8] sm:$0xff] %vm717, %v2971
        %3137 = vst [vmem:[%s514 + $0x10] sm:$0xff] %v2975
        %3138 = vst.msk [vmem:[%s514 + $0x18] sm:$0xff] %vm717, %v2977
        %3139 = vst [vmem:[%s514 + $0x20] sm:$0xff] %v2981
        %3140 = vst.msk [vmem:[%s514 + $0x28] sm:$0xff] %vm717, %v2983
        %3141 = vst [vmem:[%s514 + $0x30] sm:$0xff] %v2987
        %3142 = vst.msk [vmem:[%s514 + $0x38] sm:$0xff] %vm717, %v2989
        %3143 = vst [vmem:[%s514 + $0x40] sm:$0xff] %v2993
        %3144 = vst.msk [vmem:[%s514 + $0x48] sm:$0xff] %vm717, %v2995
        %3145 = vst [vmem:[%s514 + $0x50] sm:$0xff] %v2999
        %3146 = vst.msk [vmem:[%s514 + $0x58] sm:$0xff] %vm717, %v3001
        %3147 = vst [vmem:[%s514 + $0x60] sm:$0xff] %v3005
        %3148 = vst.msk [vmem:[%s514 + $0x68] sm:$0xff] %vm717, %v3007
        %3149 = vst [vmem:[%s514 + $0x70] sm:$0xff] %v3011
        %3150 = vst.msk [vmem:[%s514 + $0x78] sm:$0xff] %vm717, %v3013
        %3151 = vst [vmem:[%s514 + $0x80] sm:$0xff] %v3017
        %3152 = vst.msk [vmem:[%s514 + $0x88] sm:$0xff] %vm717, %v3019
        %3153 = vst [vmem:[%s514 + $0x90] sm:$0xff] %v3023
        %3154 = vst.msk [vmem:[%s514 + $0x98] sm:$0xff] %vm717, %v3025
        %3155 = vst [vmem:[%s514 + $0xa0] sm:$0xff] %v3029
        %3156 = vst.msk [vmem:[%s514 + $0xa8] sm:$0xff] %vm717, %v3031
        %3157 = vst [vmem:[%s514 + $0xb0] sm:$0xff] %v3035
        %3158 = vst.msk [vmem:[%s514 + $0xb8] sm:$0xff] %vm717, %v3037
        %3159 = vst [vmem:[%s514 + $0xc0] sm:$0xff] %v3041
        %3160 = vst.msk [vmem:[%s514 + $0xc8] sm:$0xff] %vm717, %v3043
        %3161 = vst [vmem:[%s514 + $0xd0] sm:$0xff] %v3047
        %3162 = vst.msk [vmem:[%s514 + $0xd8] sm:$0xff] %vm717, %v3049
        %3163 = vst [vmem:[%s514 + $0xe0] sm:$0xff] %v3053
        %3164 = vst.msk [vmem:[%s514 + $0xe8] sm:$0xff] %vm717, %v3055
        %3165 = vst [vmem:[%s514 + $0xf0] sm:$0xff] %v3059
        %3166 = vst.msk [vmem:[%s514 + $0xf8] sm:$0xff] %vm717, %v3061
        %3167 = vst [vmem:[%s514 + $0x100] sm:$0xff] %v3065
        %3168 = vst.msk [vmem:[%s514 + $0x108] sm:$0xff] %vm717, %v3067
        %3169 = vst [vmem:[%s514 + $0x110] sm:$0xff] %v3071
        %3170 = vst.msk [vmem:[%s514 + $0x118] sm:$0xff] %vm717, %v3073
        %3171 = vst [vmem:[%s514 + $0x120] sm:$0xff] %v3077
        %3172 = vst.msk [vmem:[%s514 + $0x128] sm:$0xff] %vm717, %v3079
        %3173 = vst [vmem:[%s514 + $0x130] sm:$0xff] %v3083
        %3174 = vst.msk [vmem:[%s514 + $0x138] sm:$0xff] %vm717, %v3085
        %3175 = vst [vmem:[%s514 + $0x140] sm:$0xff] %v3089
        %3176 = vst.msk [vmem:[%s514 + $0x148] sm:$0xff] %vm717, %v3091
        %3177 = vst [vmem:[%s514 + $0x150] sm:$0xff] %v3095
        %3178 = vst.msk [vmem:[%s514 + $0x158] sm:$0xff] %vm717, %v3097
        %3179 = vst [vmem:[%s514 + $0x160] sm:$0xff] %v3101
        %3180 = vst.msk [vmem:[%s514 + $0x168] sm:$0xff] %vm717, %v3103
        %3181 = vst [vmem:[%s514 + $0x170] sm:$0xff] %v3107
        %3182 = vst.msk [vmem:[%s514 + $0x178] sm:$0xff] %vm717, %v3109
        %3183 = vst [vmem:[%s514 + $0x180] sm:$0xff] %v3113
        %3184 = vst.msk [vmem:[%s514 + $0x188] sm:$0xff] %vm717, %v3115
        %3185 = vst [vmem:[%s514 + $0x190] sm:$0xff] %v3119
        %3186 = vst.msk [vmem:[%s514 + $0x198] sm:$0xff] %vm717, %v3121
        %3187 = vst [vmem:[%s514 + $0x1a0] sm:$0xff] %v3125
        %3188 = vst.msk [vmem:[%s514 + $0x1a8] sm:$0xff] %vm717, %v3127
        %3189 = vst [vmem:[%s514 + $0x1b0] sm:$0xff] %v3131
        %3190 = vst.msk [vmem:[%s514 + $0x1b8] sm:$0xff] %vm717, %v3133
        %s3191 = scalar_lea.vmem %s12, 128
        %v3192 = vld [vmem:[%s3191] sm:$0xff]
        %v3193 = vld [vmem:[%s3191 + $0x8] sm:$0xff]
        %v3194 = vld [vmem:[%s3191 + $0x10] sm:$0xff]
        %v3195 = vld [vmem:[%s3191 + $0x18] sm:$0xff]
        %v3196 = vld [vmem:[%s3191 + $0x20] sm:$0xff]
        %v3197 = vld [vmem:[%s3191 + $0x28] sm:$0xff]
        %v3198 = vld [vmem:[%s3191 + $0x30] sm:$0xff]
        %v3199 = vld [vmem:[%s3191 + $0x38] sm:$0xff]
        %v3200 = vld [vmem:[%s3191 + $0x40] sm:$0xff]
        %v3201 = vld [vmem:[%s3191 + $0x48] sm:$0xff]
        %v3202 = vld [vmem:[%s3191 + $0x50] sm:$0xff]
        %v3203 = vld [vmem:[%s3191 + $0x58] sm:$0xff]
        %v3204 = vld [vmem:[%s3191 + $0x60] sm:$0xff]
        %v3205 = vld [vmem:[%s3191 + $0x68] sm:$0xff]
        %v3206 = vld [vmem:[%s3191 + $0x70] sm:$0xff]
        %v3207 = vld [vmem:[%s3191 + $0x78] sm:$0xff]
        %s3208 = scalar_lea.vmem %s13, 1
        %v3209 = vld [vmem:[%s3208] sm:$0x1]
        %v3211 = vlaneseq
        %v3212 = vshrl.u32 %v3211, 7
        %v3213 = vsub.s32 0, %v3212
        %v3214 = vrot.slane %v3209, %v3213
        %3216 = vmatprep.subr.mxu0 0.0
        %3217 = vmatpush1.msra.mxu0 %v3192
        %3218 = vmatprep.subr.mxu0 0.0
        %3219 = vmatpush1.msra.mxu0 %v3193
        %3220 = vmatprep.subr.mxu0 0.0
        %3221 = vmatpush1.msra.mxu0 %v3194
        %3222 = vmatprep.subr.mxu0 0.0
        %3223 = vmatpush1.msra.mxu0 %v3195
        %3224 = vmatprep.subr.mxu0 0.0
        %3225 = vmatpush1.msra.mxu0 %v3196
        %3226 = vmatprep.subr.mxu0 0.0
        %3227 = vmatpush1.msra.mxu0 %v3197
        %3228 = vmatprep.subr.mxu0 0.0
        %3229 = vmatpush1.msra.mxu0 %v3198
        %3230 = vmatprep.subr.mxu0 0.0
        %3231 = vmatpush1.msra.mxu0 %v3199
        %3232 = vmatprep.subr.mxu0 0.0
        %3233 = vmatpush1.msra.mxu0 %v3200
        %3234 = vmatprep.subr.mxu0 0.0
        %3235 = vmatpush1.msra.mxu0 %v3201
        %3236 = vmatprep.subr.mxu0 0.0
        %3237 = vmatpush1.msra.mxu0 %v3202
        %3238 = vmatprep.subr.mxu0 0.0
        %3239 = vmatpush1.msra.mxu0 %v3203
        %3240 = vmatprep.subr.mxu0 0.0
        %3241 = vmatpush1.msra.mxu0 %v3204
        %3242 = vmatprep.subr.mxu0 0.0
        %3243 = vmatpush1.msra.mxu0 %v3205
        %3244 = vmatprep.subr.mxu0 0.0
        %3245 = vmatpush1.msra.mxu0 %v3206
        %3246 = vmatprep.subr.mxu0 0.0
        %3247 = vmatpush1.msra.mxu0 %v3207
        %3248 = vmatprep.subr.mxu0 0.0
        %3249 = vmatpush1.msra.mxu0 0.0
        %3250 = vmatprep.subr.mxu0 0.0
        %3251 = vmatpush1.msra.mxu0 0.0
        %3252 = vmatprep.subr.mxu0 0.0
        %3253 = vmatpush1.msra.mxu0 0.0
        %3254 = vmatprep.subr.mxu0 0.0
        %3255 = vmatpush1.msra.mxu0 0.0
        %3256 = vmatprep.subr.mxu0 0.0
        %3257 = vmatpush1.msra.mxu0 0.0
        %3258 = vmatprep.subr.mxu0 0.0
        %3259 = vmatpush1.msra.mxu0 0.0
        %3260 = vmatprep.subr.mxu0 0.0
        %3261 = vmatpush1.msra.mxu0 0.0
        %3262 = vmatprep.subr.mxu0 0.0
        %3263 = vmatpush1.msra.mxu0 0.0
        %3264 = vmatprep.subr.mxu0 0.0
        %3265 = vmatpush1.msra.mxu0 0.0
        %3266 = vmatprep.subr.mxu0 0.0
        %3267 = vmatpush1.msra.mxu0 0.0
        %3268 = vmatprep.subr.mxu0 0.0
        %3269 = vmatpush1.msra.mxu0 0.0
        %3270 = vmatprep.subr.mxu0 0.0
        %3271 = vmatpush1.msra.mxu0 0.0
        %3272 = vmatprep.subr.mxu0 0.0
        %3273 = vmatpush1.msra.mxu0 0.0
        %3274 = vmatprep.subr.mxu0 0.0
        %3275 = vmatpush1.msra.mxu0 0.0
        %3276 = vmatprep.subr.mxu0 0.0
        %3277 = vmatpush1.msra.mxu0 0.0
        %3278 = vmatprep.subr.mxu0 0.0
        %3279 = vmatpush1.msra.mxu0 0.0
        %3280 = vmatprep.mubr.f32.mxu0 0.0
        %3281 = vmatmul.mubr.f32.gmra.mrb[0].mxu0 %v2619
        %v3282 = vpop.f32.mrb[0].mxu0
        %v3283 = vadd.f32 %v3214, %v3282
        %v3284 = vpop.f32.mrb[0].mxu0
        %3285 = vdwg.mxu0
        %v3287 = vsel %vm2743, %v3283, 0
        %3289 = vmatprep.subr.mxu0 %v2621
        %3290 = vmatpush1.msra.mxu0 %v2620
        %3291 = vmatprep.subr.mxu0 0.0
        %3292 = vmatpush1.msra.mxu0 0.0
        %3293 = vmatprep.subr.mxu0 0.0
        %3294 = vmatpush1.msra.mxu0 0.0
        %3295 = vmatprep.subr.mxu0 0.0
        %3296 = vmatpush1.msra.mxu0 0.0
        %3297 = vmatprep.subr.mxu0 0.0
        %3298 = vmatpush1.msra.mxu0 0.0
        %3299 = vmatprep.subr.mxu0 0.0
        %3300 = vmatpush1.msra.mxu0 0.0
        %3301 = vmatprep.subr.mxu0 0.0
        %3302 = vmatpush1.msra.mxu0 0.0
        %3303 = vmatprep.subr.mxu0 0.0
        %3304 = vmatpush1.msra.mxu0 0.0
        %3305 = vmatprep.subr.mxu0 0.0
        %3306 = vmatpush1.msra.mxu0 0.0
        %3307 = vmatprep.subr.mxu0 0.0
        %3308 = vmatpush1.msra.mxu0 0.0
        %3309 = vmatprep.subr.mxu0 0.0
        %3310 = vmatpush1.msra.mxu0 0.0
        %3311 = vmatprep.subr.mxu0 0.0
        %3312 = vmatpush1.msra.mxu0 0.0
        %3313 = vmatprep.subr.mxu0 0.0
        %3314 = vmatpush1.msra.mxu0 0.0
        %3315 = vmatprep.subr.mxu0 0.0
        %3316 = vmatpush1.msra.mxu0 0.0
        %3317 = vmatprep.subr.mxu0 0.0
        %3318 = vmatpush1.msra.mxu0 0.0
        %3319 = vmatprep.subr.mxu0 0.0
        %3320 = vmatpush1.msra.mxu0 0.0
        %3321 = vmatprep.subr.mxu0 0.0
        %3322 = vmatpush1.msra.mxu0 0.0
        %3323 = vmatprep.subr.mxu0 0.0
        %3324 = vmatpush1.msra.mxu0 0.0
        %3325 = vmatprep.subr.mxu0 0.0
        %3326 = vmatpush1.msra.mxu0 0.0
        %3327 = vmatprep.subr.mxu0 0.0
        %3328 = vmatpush1.msra.mxu0 0.0
        %3329 = vmatprep.subr.mxu0 0.0
        %3330 = vmatpush1.msra.mxu0 0.0
        %3331 = vmatprep.subr.mxu0 0.0
        %3332 = vmatpush1.msra.mxu0 0.0
        %3333 = vmatprep.subr.mxu0 0.0
        %3334 = vmatpush1.msra.mxu0 0.0
        %3335 = vmatprep.subr.mxu0 0.0
        %3336 = vmatpush1.msra.mxu0 0.0
        %3337 = vmatprep.subr.mxu0 0.0
        %3338 = vmatpush1.msra.mxu0 0.0
        %3339 = vmatprep.subr.mxu0 0.0
        %3340 = vmatpush1.msra.mxu0 0.0
        %3341 = vmatprep.subr.mxu0 0.0
        %3342 = vmatpush1.msra.mxu0 0.0
        %3343 = vmatprep.subr.mxu0 0.0
        %3344 = vmatpush1.msra.mxu0 0.0
        %3345 = vmatprep.subr.mxu0 0.0
        %3346 = vmatpush1.msra.mxu0 0.0
        %3347 = vmatprep.subr.mxu0 0.0
        %3348 = vmatpush1.msra.mxu0 0.0
        %3349 = vmatprep.subr.mxu0 0.0
        %3350 = vmatpush1.msra.mxu0 0.0
        %3351 = vmatprep.subr.mxu0 0.0
        %3352 = vmatpush1.msra.mxu0 0.0
        %3353 = vmatprep.mubr.f32.mxu0 0.0
        %3354 = vmatmul.mubr.f32.gmra.mrb[0].mxu0 %v3287
        %v3355 = vpop.f32.mrb[0].mxu0
        %v3356 = vadd.f32 0.0, %v3355
        %v3357 = vpop.f32.mrb[0].mxu0
        %v3358 = vadd.f32 0.0, %v3357
        %3359 = vdwg.mxu0
        %3360 = vmatprep.subr.mxu0 %v3358
        %3361 = vmatpush1.msra.mxu0 %v3356
        %3362 = vmatprep.subr.mxu0 0.0
        %3363 = vmatpush1.msra.mxu0 0.0
        %3364 = vmatprep.subr.mxu0 0.0
        %3365 = vmatpush1.msra.mxu0 0.0
        %3366 = vmatprep.subr.mxu0 0.0
        %3367 = vmatpush1.msra.mxu0 0.0
        %3368 = vmatprep.subr.mxu0 0.0
        %3369 = vmatpush1.msra.mxu0 0.0
        %3370 = vmatprep.subr.mxu0 0.0
        %3371 = vmatpush1.msra.mxu0 0.0
        %3372 = vmatprep.subr.mxu0 0.0
        %3373 = vmatpush1.msra.mxu0 0.0
        %3374 = vmatprep.subr.mxu0 0.0
        %3375 = vmatpush1.msra.mxu0 0.0
        %3376 = vmatprep.subr.mxu0 0.0
        %3377 = vmatpush1.msra.mxu0 0.0
        %3378 = vmatprep.subr.mxu0 0.0
        %3379 = vmatpush1.msra.mxu0 0.0
        %3380 = vmatprep.subr.mxu0 0.0
        %3381 = vmatpush1.msra.mxu0 0.0
        %3382 = vmatprep.subr.mxu0 0.0
        %3383 = vmatpush1.msra.mxu0 0.0
        %3384 = vmatprep.subr.mxu0 0.0
        %3385 = vmatpush1.msra.mxu0 0.0
        %3386 = vmatprep.subr.mxu0 0.0
        %3387 = vmatpush1.msra.mxu0 0.0
        %3388 = vmatprep.subr.mxu0 0.0
        %3389 = vmatpush1.msra.mxu0 0.0
        %3390 = vmatprep.subr.mxu0 0.0
        %3391 = vmatpush1.msra.mxu0 0.0
        %3392 = vmatprep.subr.mxu0 0.0
        %3393 = vmatpush1.msra.mxu0 0.0
        %3394 = vmatprep.subr.mxu0 0.0
        %3395 = vmatpush1.msra.mxu0 0.0
        %3396 = vmatprep.subr.mxu0 0.0
        %3397 = vmatpush1.msra.mxu0 0.0
        %3398 = vmatprep.subr.mxu0 0.0
        %3399 = vmatpush1.msra.mxu0 0.0
        %3400 = vmatprep.subr.mxu0 0.0
        %3401 = vmatpush1.msra.mxu0 0.0
        %3402 = vmatprep.subr.mxu0 0.0
        %3403 = vmatpush1.msra.mxu0 0.0
        %3404 = vmatprep.subr.mxu0 0.0
        %3405 = vmatpush1.msra.mxu0 0.0
        %3406 = vmatprep.subr.mxu0 0.0
        %3407 = vmatpush1.msra.mxu0 0.0
        %3408 = vmatprep.subr.mxu0 0.0
        %3409 = vmatpush1.msra.mxu0 0.0
        %3410 = vmatprep.subr.mxu0 0.0
        %3411 = vmatpush1.msra.mxu0 0.0
        %3412 = vmatprep.subr.mxu0 0.0
        %3413 = vmatpush1.msra.mxu0 0.0
        %3414 = vmatprep.subr.mxu0 0.0
        %3415 = vmatpush1.msra.mxu0 0.0
        %3416 = vmatprep.subr.mxu0 0.0
        %3417 = vmatpush1.msra.mxu0 0.0
        %3418 = vmatprep.subr.mxu0 0.0
        %3419 = vmatpush1.msra.mxu0 0.0
        %3420 = vmatprep.subr.mxu0 0.0
        %3421 = vmatpush1.msra.mxu0 0.0
        %3422 = vmatprep.subr.mxu0 0.0
        %3423 = vmatpush1.msra.mxu0 0.0
        %3424 = vmatprep.mubr.f32.mxu0 0.0
        %3425 = vmatmul.mubr.f32.gmra.mrb[0].mxu0 %v2819
        %v3426 = vpop.f32.mrb[0].mxu0
        %v3427 = vadd.f32 0.0, %v3426
        %v3428 = vpop.f32.mrb[0].mxu0
        %v3429 = vadd.f32 0.0, %v3428
        %3430 = vmatprep.mubr.f32.mxu0 0.0
        %3431 = vmatmul.mubr.f32.gmra.mrb[0].mxu0 %v2822
        %v3432 = vpop.f32.mrb[0].mxu0
        %v3433 = vadd.f32 0.0, %v3432
        %v3434 = vpop.f32.mrb[0].mxu0
        %v3435 = vadd.f32 0.0, %v3434
        %3436 = vmatprep.mubr.f32.mxu0 0.0
        %3437 = vmatmul.mubr.f32.gmra.mrb[0].mxu0 %v2825
        %v3438 = vpop.f32.mrb[0].mxu0
        %v3439 = vadd.f32 0.0, %v3438
        %v3440 = vpop.f32.mrb[0].mxu0
        %v3441 = vadd.f32 0.0, %v3440
        %3442 = vmatprep.mubr.f32.mxu0 0.0
        %3443 = vmatmul.mubr.f32.gmra.mrb[0].mxu0 %v2828
        %v3444 = vpop.f32.mrb[0].mxu0
        %v3445 = vadd.f32 0.0, %v3444
        %v3446 = vpop.f32.mrb[0].mxu0
        %v3447 = vadd.f32 0.0, %v3446
        %3448 = vmatprep.mubr.f32.mxu0 0.0
        %3449 = vmatmul.mubr.f32.gmra.mrb[0].mxu0 %v2831
        %v3450 = vpop.f32.mrb[0].mxu0
        %v3451 = vadd.f32 0.0, %v3450
        %v3452 = vpop.f32.mrb[0].mxu0
        %v3453 = vadd.f32 0.0, %v3452
        %3454 = vmatprep.mubr.f32.mxu0 0.0
        %3455 = vmatmul.mubr.f32.gmra.mrb[0].mxu0 %v2834
        %v3456 = vpop.f32.mrb[0].mxu0
        %v3457 = vadd.f32 0.0, %v3456
        %v3458 = vpop.f32.mrb[0].mxu0
        %v3459 = vadd.f32 0.0, %v3458
        %3460 = vmatprep.mubr.f32.mxu0 0.0
        %3461 = vmatmul.mubr.f32.gmra.mrb[0].mxu0 %v2837
        %v3462 = vpop.f32.mrb[0].mxu0
        %v3463 = vadd.f32 0.0, %v3462
        %v3464 = vpop.f32.mrb[0].mxu0
        %v3465 = vadd.f32 0.0, %v3464
        %3466 = vmatprep.mubr.f32.mxu0 0.0
        %3467 = vmatmul.mubr.f32.gmra.mrb[0].mxu0 %v2840
        %v3468 = vpop.f32.mrb[0].mxu0
        %v3469 = vadd.f32 0.0, %v3468
        %v3470 = vpop.f32.mrb[0].mxu0
        %v3471 = vadd.f32 0.0, %v3470
        %3472 = vmatprep.mubr.f32.mxu0 0.0
        %3473 = vmatmul.mubr.f32.gmra.mrb[0].mxu0 %v2843
        %v3474 = vpop.f32.mrb[0].mxu0
        %v3475 = vadd.f32 0.0, %v3474
        %v3476 = vpop.f32.mrb[0].mxu0
        %v3477 = vadd.f32 0.0, %v3476
        %3478 = vmatprep.mubr.f32.mxu0 0.0
        %3479 = vmatmul.mubr.f32.gmra.mrb[0].mxu0 %v2846
        %v3480 = vpop.f32.mrb[0].mxu0
        %v3481 = vadd.f32 0.0, %v3480
        %v3482 = vpop.f32.mrb[0].mxu0
        %v3483 = vadd.f32 0.0, %v3482
        %3484 = vmatprep.mubr.f32.mxu0 0.0
        %3485 = vmatmul.mubr.f32.gmra.mrb[0].mxu0 %v2849
        %v3486 = vpop.f32.mrb[0].mxu0
        %v3487 = vadd.f32 0.0, %v3486
        %v3488 = vpop.f32.mrb[0].mxu0
        %v3489 = vadd.f32 0.0, %v3488
        %3490 = vmatprep.mubr.f32.mxu0 0.0
        %3491 = vmatmul.mubr.f32.gmra.mrb[0].mxu0 %v2852
        %v3492 = vpop.f32.mrb[0].mxu0
        %v3493 = vadd.f32 0.0, %v3492
        %v3494 = vpop.f32.mrb[0].mxu0
        %v3495 = vadd.f32 0.0, %v3494
        %3496 = vmatprep.mubr.f32.mxu0 0.0
        %3497 = vmatmul.mubr.f32.gmra.mrb[0].mxu0 %v2855
        %v3498 = vpop.f32.mrb[0].mxu0
        %v3499 = vadd.f32 0.0, %v3498
        %v3500 = vpop.f32.mrb[0].mxu0
        %v3501 = vadd.f32 0.0, %v3500
        %3502 = vmatprep.mubr.f32.mxu0 0.0
        %3503 = vmatmul.mubr.f32.gmra.mrb[0].mxu0 %v2858
        %v3504 = vpop.f32.mrb[0].mxu0
        %v3505 = vadd.f32 0.0, %v3504
        %v3506 = vpop.f32.mrb[0].mxu0
        %v3507 = vadd.f32 0.0, %v3506
        %3508 = vmatprep.mubr.f32.mxu0 0.0
        %3509 = vmatmul.mubr.f32.gmra.mrb[0].mxu0 %v2861
        %v3510 = vpop.f32.mrb[0].mxu0
        %v3511 = vadd.f32 0.0, %v3510
        %v3512 = vpop.f32.mrb[0].mxu0
        %v3513 = vadd.f32 0.0, %v3512
        %3514 = vmatprep.mubr.f32.mxu0 0.0
        %3515 = vmatmul.mubr.f32.gmra.mrb[0].mxu0 %v2864
        %v3516 = vpop.f32.mrb[0].mxu0
        %v3517 = vadd.f32 0.0, %v3516
        %v3518 = vpop.f32.mrb[0].mxu0
        %v3519 = vadd.f32 0.0, %v3518
        %3520 = vmatprep.mubr.f32.mxu0 0.0
        %3521 = vmatmul.mubr.f32.gmra.mrb[0].mxu0 %v2867
        %v3522 = vpop.f32.mrb[0].mxu0
        %v3523 = vadd.f32 0.0, %v3522
        %v3524 = vpop.f32.mrb[0].mxu0
        %v3525 = vadd.f32 0.0, %v3524
        %3526 = vmatprep.mubr.f32.mxu0 0.0
        %3527 = vmatmul.mubr.f32.gmra.mrb[0].mxu0 %v2870
        %v3528 = vpop.f32.mrb[0].mxu0
        %v3529 = vadd.f32 0.0, %v3528
        %v3530 = vpop.f32.mrb[0].mxu0
        %v3531 = vadd.f32 0.0, %v3530
        %3532 = vmatprep.mubr.f32.mxu0 0.0
        %3533 = vmatmul.mubr.f32.gmra.mrb[0].mxu0 %v2873
        %v3534 = vpop.f32.mrb[0].mxu0
        %v3535 = vadd.f32 0.0, %v3534
        %v3536 = vpop.f32.mrb[0].mxu0
        %v3537 = vadd.f32 0.0, %v3536
        %3538 = vmatprep.mubr.f32.mxu0 0.0
        %3539 = vmatmul.mubr.f32.gmra.mrb[0].mxu0 %v2876
        %v3540 = vpop.f32.mrb[0].mxu0
        %v3541 = vadd.f32 0.0, %v3540
        %v3542 = vpop.f32.mrb[0].mxu0
        %v3543 = vadd.f32 0.0, %v3542
        %3544 = vmatprep.mubr.f32.mxu0 0.0
        %3545 = vmatmul.mubr.f32.gmra.mrb[0].mxu0 %v2879
        %v3546 = vpop.f32.mrb[0].mxu0
        %v3547 = vadd.f32 0.0, %v3546
        %v3548 = vpop.f32.mrb[0].mxu0
        %v3549 = vadd.f32 0.0, %v3548
        %3550 = vmatprep.mubr.f32.mxu0 0.0
        %3551 = vmatmul.mubr.f32.gmra.mrb[0].mxu0 %v2882
        %v3552 = vpop.f32.mrb[0].mxu0
        %v3553 = vadd.f32 0.0, %v3552
        %v3554 = vpop.f32.mrb[0].mxu0
        %v3555 = vadd.f32 0.0, %v3554
        %3556 = vmatprep.mubr.f32.mxu0 0.0
        %3557 = vmatmul.mubr.f32.gmra.mrb[0].mxu0 %v2885
        %v3558 = vpop.f32.mrb[0].mxu0
        %v3559 = vadd.f32 0.0, %v3558
        %v3560 = vpop.f32.mrb[0].mxu0
        %v3561 = vadd.f32 0.0, %v3560
        %3562 = vmatprep.mubr.f32.mxu0 0.0
        %3563 = vmatmul.mubr.f32.gmra.mrb[0].mxu0 %v2888
        %v3564 = vpop.f32.mrb[0].mxu0
        %v3565 = vadd.f32 0.0, %v3564
        %v3566 = vpop.f32.mrb[0].mxu0
        %v3567 = vadd.f32 0.0, %v3566
        %3568 = vmatprep.mubr.f32.mxu0 0.0
        %3569 = vmatmul.mubr.f32.gmra.mrb[0].mxu0 %v2891
        %v3570 = vpop.f32.mrb[0].mxu0
        %v3571 = vadd.f32 0.0, %v3570
        %v3572 = vpop.f32.mrb[0].mxu0
        %v3573 = vadd.f32 0.0, %v3572
        %3574 = vmatprep.mubr.f32.mxu0 0.0
        %3575 = vmatmul.mubr.f32.gmra.mrb[0].mxu0 %v2894
        %v3576 = vpop.f32.mrb[0].mxu0
        %v3577 = vadd.f32 0.0, %v3576
        %v3578 = vpop.f32.mrb[0].mxu0
        %v3579 = vadd.f32 0.0, %v3578
        %3580 = vmatprep.mubr.f32.mxu0 0.0
        %3581 = vmatmul.mubr.f32.gmra.mrb[0].mxu0 %v2897
        %v3582 = vpop.f32.mrb[0].mxu0
        %v3583 = vadd.f32 0.0, %v3582
        %v3584 = vpop.f32.mrb[0].mxu0
        %v3585 = vadd.f32 0.0, %v3584
        %3586 = vmatprep.mubr.f32.mxu0 0.0
        %3587 = vmatmul.mubr.f32.gmra.mrb[0].mxu0 %v2900
        %v3588 = vpop.f32.mrb[0].mxu0
        %v3589 = vadd.f32 0.0, %v3588
        %v3590 = vpop.f32.mrb[0].mxu0
        %v3591 = vadd.f32 0.0, %v3590
        %3592 = vdwg.mxu0
        %s3593 = scalar_lea.vmem %s514, 448 [#allocation2]
        %3594 = vst [vmem:[%s3593] sm:$0xff] %v3427
        %3595 = vst.msk [vmem:[%s3593 + $0x8] sm:$0xff] %vm717, %v3429
        %3596 = vst [vmem:[%s3593 + $0x10] sm:$0xff] %v3433
        %3597 = vst.msk [vmem:[%s3593 + $0x18] sm:$0xff] %vm717, %v3435
        %3598 = vst [vmem:[%s3593 + $0x20] sm:$0xff] %v3439
        %3599 = vst.msk [vmem:[%s3593 + $0x28] sm:$0xff] %vm717, %v3441
        %3600 = vst [vmem:[%s3593 + $0x30] sm:$0xff] %v3445
        %3601 = vst.msk [vmem:[%s3593 + $0x38] sm:$0xff] %vm717, %v3447
        %3602 = vst [vmem:[%s3593 + $0x40] sm:$0xff] %v3451
        %3603 = vst.msk [vmem:[%s3593 + $0x48] sm:$0xff] %vm717, %v3453
        %3604 = vst [vmem:[%s3593 + $0x50] sm:$0xff] %v3457
        %3605 = vst.msk [vmem:[%s3593 + $0x58] sm:$0xff] %vm717, %v3459
        %3606 = vst [vmem:[%s3593 + $0x60] sm:$0xff] %v3463
        %3607 = vst.msk [vmem:[%s3593 + $0x68] sm:$0xff] %vm717, %v3465
        %3608 = vst [vmem:[%s3593 + $0x70] sm:$0xff] %v3469
        %3609 = vst.msk [vmem:[%s3593 + $0x78] sm:$0xff] %vm717, %v3471
        %3610 = vst [vmem:[%s3593 + $0x80] sm:$0xff] %v3475
        %3611 = vst.msk [vmem:[%s3593 + $0x88] sm:$0xff] %vm717, %v3477
        %3612 = vst [vmem:[%s3593 + $0x90] sm:$0xff] %v3481
        %3613 = vst.msk [vmem:[%s3593 + $0x98] sm:$0xff] %vm717, %v3483
        %3614 = vst [vmem:[%s3593 + $0xa0] sm:$0xff] %v3487
        %3615 = vst.msk [vmem:[%s3593 + $0xa8] sm:$0xff] %vm717, %v3489
        %3616 = vst [vmem:[%s3593 + $0xb0] sm:$0xff] %v3493
        %3617 = vst.msk [vmem:[%s3593 + $0xb8] sm:$0xff] %vm717, %v3495
        %3618 = vst [vmem:[%s3593 + $0xc0] sm:$0xff] %v3499
        %3619 = vst.msk [vmem:[%s3593 + $0xc8] sm:$0xff] %vm717, %v3501
        %3620 = vst [vmem:[%s3593 + $0xd0] sm:$0xff] %v3505
        %3621 = vst.msk [vmem:[%s3593 + $0xd8] sm:$0xff] %vm717, %v3507
        %3622 = vst [vmem:[%s3593 + $0xe0] sm:$0xff] %v3511
        %3623 = vst.msk [vmem:[%s3593 + $0xe8] sm:$0xff] %vm717, %v3513
        %3624 = vst [vmem:[%s3593 + $0xf0] sm:$0xff] %v3517
        %3625 = vst.msk [vmem:[%s3593 + $0xf8] sm:$0xff] %vm717, %v3519
        %3626 = vst [vmem:[%s3593 + $0x100] sm:$0xff] %v3523
        %3627 = vst.msk [vmem:[%s3593 + $0x108] sm:$0xff] %vm717, %v3525
        %3628 = vst [vmem:[%s3593 + $0x110] sm:$0xff] %v3529
        %3629 = vst.msk [vmem:[%s3593 + $0x118] sm:$0xff] %vm717, %v3531
        %3630 = vst [vmem:[%s3593 + $0x120] sm:$0xff] %v3535
        %3631 = vst.msk [vmem:[%s3593 + $0x128] sm:$0xff] %vm717, %v3537
        %3632 = vst [vmem:[%s3593 + $0x130] sm:$0xff] %v3541
        %3633 = vst.msk [vmem:[%s3593 + $0x138] sm:$0xff] %vm717, %v3543
        %3634 = vst [vmem:[%s3593 + $0x140] sm:$0xff] %v3547
        %3635 = vst.msk [vmem:[%s3593 + $0x148] sm:$0xff] %vm717, %v3549
        %3636 = vst [vmem:[%s3593 + $0x150] sm:$0xff] %v3553
        %3637 = vst.msk [vmem:[%s3593 + $0x158] sm:$0xff] %vm717, %v3555
        %3638 = vst [vmem:[%s3593 + $0x160] sm:$0xff] %v3559
        %3639 = vst.msk [vmem:[%s3593 + $0x168] sm:$0xff] %vm717, %v3561
        %3640 = vst [vmem:[%s3593 + $0x170] sm:$0xff] %v3565
        %3641 = vst.msk [vmem:[%s3593 + $0x178] sm:$0xff] %vm717, %v3567
        %3642 = vst [vmem:[%s3593 + $0x180] sm:$0xff] %v3571
        %3643 = vst.msk [vmem:[%s3593 + $0x188] sm:$0xff] %vm717, %v3573
        %3644 = vst [vmem:[%s3593 + $0x190] sm:$0xff] %v3577
        %3645 = vst.msk [vmem:[%s3593 + $0x198] sm:$0xff] %vm717, %v3579
        %3646 = vst [vmem:[%s3593 + $0x1a0] sm:$0xff] %v3583
        %3647 = vst.msk [vmem:[%s3593 + $0x1a8] sm:$0xff] %vm717, %v3585
        %3648 = vst [vmem:[%s3593 + $0x1b0] sm:$0xff] %v3589
        %3649 = vst.msk [vmem:[%s3593 + $0x1b8] sm:$0xff] %vm717, %v3591
        %s3650 = scalar_lea.vmem %s12, 256
        %v3651 = vld [vmem:[%s3650] sm:$0xff]
        %v3652 = vld [vmem:[%s3650 + $0x8] sm:$0xff]
        %v3653 = vld [vmem:[%s3650 + $0x10] sm:$0xff]
        %v3654 = vld [vmem:[%s3650 + $0x18] sm:$0xff]
        %v3655 = vld [vmem:[%s3650 + $0x20] sm:$0xff]
        %v3656 = vld [vmem:[%s3650 + $0x28] sm:$0xff]
        %v3657 = vld [vmem:[%s3650 + $0x30] sm:$0xff]
        %v3658 = vld [vmem:[%s3650 + $0x38] sm:$0xff]
        %v3659 = vld [vmem:[%s3650 + $0x40] sm:$0xff]
        %v3660 = vld [vmem:[%s3650 + $0x48] sm:$0xff]
        %v3661 = vld [vmem:[%s3650 + $0x50] sm:$0xff]
        %v3662 = vld [vmem:[%s3650 + $0x58] sm:$0xff]
        %v3663 = vld [vmem:[%s3650 + $0x60] sm:$0xff]
        %v3664 = vld [vmem:[%s3650 + $0x68] sm:$0xff]
        %v3665 = vld [vmem:[%s3650 + $0x70] sm:$0xff]
        %v3666 = vld [vmem:[%s3650 + $0x78] sm:$0xff]
        %s3667 = scalar_lea.vmem %s13, 2
        %v3668 = vld [vmem:[%s3667] sm:$0x1]
        %v3670 = vlaneseq
        %v3671 = vshrl.u32 %v3670, 7
        %v3672 = vsub.s32 0, %v3671
        %v3673 = vrot.slane %v3668, %v3672
        %3675 = vmatprep.subr.mxu0 0.0
        %3676 = vmatpush1.msra.mxu0 %v3651
        %3677 = vmatprep.subr.mxu0 0.0
        %3678 = vmatpush1.msra.mxu0 %v3652
        %3679 = vmatprep.subr.mxu0 0.0
        %3680 = vmatpush1.msra.mxu0 %v3653
        %3681 = vmatprep.subr.mxu0 0.0
        %3682 = vmatpush1.msra.mxu0 %v3654
        %3683 = vmatprep.subr.mxu0 0.0
        %3684 = vmatpush1.msra.mxu0 %v3655
        %3685 = vmatprep.subr.mxu0 0.0
        %3686 = vmatpush1.msra.mxu0 %v3656
        %3687 = vmatprep.subr.mxu0 0.0
        %3688 = vmatpush1.msra.mxu0 %v3657
        %3689 = vmatprep.subr.mxu0 0.0
        %3690 = vmatpush1.msra.mxu0 %v3658
        %3691 = vmatprep.subr.mxu0 0.0
        %3692 = vmatpush1.msra.mxu0 %v3659
        %3693 = vmatprep.subr.mxu0 0.0
        %3694 = vmatpush1.msra.mxu0 %v3660
        %3695 = vmatprep.subr.mxu0 0.0
        %3696 = vmatpush1.msra.mxu0 %v3661
        %3697 = vmatprep.subr.mxu0 0.0
        %3698 = vmatpush1.msra.mxu0 %v3662
        %3699 = vmatprep.subr.mxu0 0.0
        %3700 = vmatpush1.msra.mxu0 %v3663
        %3701 = vmatprep.subr.mxu0 0.0
        %3702 = vmatpush1.msra.mxu0 %v3664
        %3703 = vmatprep.subr.mxu0 0.0
        %3704 = vmatpush1.msra.mxu0 %v3665
        %3705 = vmatprep.subr.mxu0 0.0
        %3706 = vmatpush1.msra.mxu0 %v3666
        %3707 = vmatprep.subr.mxu0 0.0
        %3708 = vmatpush1.msra.mxu0 0.0
        %3709 = vmatprep.subr.mxu0 0.0
        %3710 = vmatpush1.msra.mxu0 0.0
        %3711 = vmatprep.subr.mxu0 0.0
        %3712 = vmatpush1.msra.mxu0 0.0
        %3713 = vmatprep.subr.mxu0 0.0
        %3714 = vmatpush1.msra.mxu0 0.0
        %3715 = vmatprep.subr.mxu0 0.0
        %3716 = vmatpush1.msra.mxu0 0.0
        %3717 = vmatprep.subr.mxu0 0.0
        %3718 = vmatpush1.msra.mxu0 0.0
        %3719 = vmatprep.subr.mxu0 0.0
        %3720 = vmatpush1.msra.mxu0 0.0
        %3721 = vmatprep.subr.mxu0 0.0
        %3722 = vmatpush1.msra.mxu0 0.0
        %3723 = vmatprep.subr.mxu0 0.0
        %3724 = vmatpush1.msra.mxu0 0.0
        %3725 = vmatprep.subr.mxu0 0.0
        %3726 = vmatpush1.msra.mxu0 0.0
        %3727 = vmatprep.subr.mxu0 0.0
        %3728 = vmatpush1.msra.mxu0 0.0
        %3729 = vmatprep.subr.mxu0 0.0
        %3730 = vmatpush1.msra.mxu0 0.0
        %3731 = vmatprep.subr.mxu0 0.0
        %3732 = vmatpush1.msra.mxu0 0.0
        %3733 = vmatprep.subr.mxu0 0.0
        %3734 = vmatpush1.msra.mxu0 0.0
        %3735 = vmatprep.subr.mxu0 0.0
        %3736 = vmatpush1.msra.mxu0 0.0
        %3737 = vmatprep.subr.mxu0 0.0
        %3738 = vmatpush1.msra.mxu0 0.0
        %3739 = vmatprep.mubr.f32.mxu0 0.0
        %3740 = vmatmul.mubr.f32.gmra.mrb[0].mxu0 %v2619
        %v3741 = vpop.f32.mrb[0].mxu0
        %v3742 = vadd.f32 %v3673, %v3741
        %v3743 = vpop.f32.mrb[0].mxu0
        %3744 = vdwg.mxu0
        %v3746 = vsel %vm2743, %v3742, 0
        %3748 = vmatprep.subr.mxu0 %v2621
        %3749 = vmatpush1.msra.mxu0 %v2620
        %3750 = vmatprep.subr.mxu0 0.0
        %3751 = vmatpush1.msra.mxu0 0.0
        %3752 = vmatprep.subr.mxu0 0.0
        %3753 = vmatpush1.msra.mxu0 0.0
        %3754 = vmatprep.subr.mxu0 0.0
        %3755 = vmatpush1.msra.mxu0 0.0
        %3756 = vmatprep.subr.mxu0 0.0
        %3757 = vmatpush1.msra.mxu0 0.0
        %3758 = vmatprep.subr.mxu0 0.0
        %3759 = vmatpush1.msra.mxu0 0.0
        %3760 = vmatprep.subr.mxu0 0.0
        %3761 = vmatpush1.msra.mxu0 0.0
        %3762 = vmatprep.subr.mxu0 0.0
        %3763 = vmatpush1.msra.mxu0 0.0
        %3764 = vmatprep.subr.mxu0 0.0
        %3765 = vmatpush1.msra.mxu0 0.0
        %3766 = vmatprep.subr.mxu0 0.0
        %3767 = vmatpush1.msra.mxu0 0.0
        %3768 = vmatprep.subr.mxu0 0.0
        %3769 = vmatpush1.msra.mxu0 0.0
        %3770 = vmatprep.subr.mxu0 0.0
        %3771 = vmatpush1.msra.mxu0 0.0
        %3772 = vmatprep.subr.mxu0 0.0
        %3773 = vmatpush1.msra.mxu0 0.0
        %3774 = vmatprep.subr.mxu0 0.0
        %3775 = vmatpush1.msra.mxu0 0.0
        %3776 = vmatprep.subr.mxu0 0.0
        %3777 = vmatpush1.msra.mxu0 0.0
        %3778 = vmatprep.subr.mxu0 0.0
        %3779 = vmatpush1.msra.mxu0 0.0
        %3780 = vmatprep.subr.mxu0 0.0
        %3781 = vmatpush1.msra.mxu0 0.0
        %3782 = vmatprep.subr.mxu0 0.0
        %3783 = vmatpush1.msra.mxu0 0.0
        %3784 = vmatprep.subr.mxu0 0.0
        %3785 = vmatpush1.msra.mxu0 0.0
        %3786 = vmatprep.subr.mxu0 0.0
        %3787 = vmatpush1.msra.mxu0 0.0
        %3788 = vmatprep.subr.mxu0 0.0
        %3789 = vmatpush1.msra.mxu0 0.0
        %3790 = vmatprep.subr.mxu0 0.0
        %3791 = vmatpush1.msra.mxu0 0.0
        %3792 = vmatprep.subr.mxu0 0.0
        %3793 = vmatpush1.msra.mxu0 0.0
        %3794 = vmatprep.subr.mxu0 0.0
        %3795 = vmatpush1.msra.mxu0 0.0
        %3796 = vmatprep.subr.mxu0 0.0
        %3797 = vmatpush1.msra.mxu0 0.0
        %3798 = vmatprep.subr.mxu0 0.0
        %3799 = vmatpush1.msra.mxu0 0.0
        %3800 = vmatprep.subr.mxu0 0.0
        %3801 = vmatpush1.msra.mxu0 0.0
        %3802 = vmatprep.subr.mxu0 0.0
        %3803 = vmatpush1.msra.mxu0 0.0
        %3804 = vmatprep.subr.mxu0 0.0
        %3805 = vmatpush1.msra.mxu0 0.0
        %3806 = vmatprep.subr.mxu0 0.0
        %3807 = vmatpush1.msra.mxu0 0.0
        %3808 = vmatprep.subr.mxu0 0.0
        %3809 = vmatpush1.msra.mxu0 0.0
        %3810 = vmatprep.subr.mxu0 0.0
        %3811 = vmatpush1.msra.mxu0 0.0
        %3812 = vmatprep.mubr.f32.mxu0 0.0
        %3813 = vmatmul.mubr.f32.gmra.mrb[0].mxu0 %v3746
        %v3814 = vpop.f32.mrb[0].mxu0
        %v3815 = vadd.f32 0.0, %v3814
        %v3816 = vpop.f32.mrb[0].mxu0
        %v3817 = vadd.f32 0.0, %v3816
        %3818 = vdwg.mxu0
        %3819 = vmatprep.subr.mxu0 %v3817
        %3820 = vmatpush1.msra.mxu0 %v3815
        %3821 = vmatprep.subr.mxu0 0.0
        %3822 = vmatpush1.msra.mxu0 0.0
        %3823 = vmatprep.subr.mxu0 0.0
        %3824 = vmatpush1.msra.mxu0 0.0
        %3825 = vmatprep.subr.mxu0 0.0
        %3826 = vmatpush1.msra.mxu0 0.0
        %3827 = vmatprep.subr.mxu0 0.0
        %3828 = vmatpush1.msra.mxu0 0.0
        %3829 = vmatprep.subr.mxu0 0.0
        %3830 = vmatpush1.msra.mxu0 0.0
        %3831 = vmatprep.subr.mxu0 0.0
        %3832 = vmatpush1.msra.mxu0 0.0
        %3833 = vmatprep.subr.mxu0 0.0
        %3834 = vmatpush1.msra.mxu0 0.0
        %3835 = vmatprep.subr.mxu0 0.0
        %3836 = vmatpush1.msra.mxu0 0.0
        %3837 = vmatprep.subr.mxu0 0.0
        %3838 = vmatpush1.msra.mxu0 0.0
        %3839 = vmatprep.subr.mxu0 0.0
        %3840 = vmatpush1.msra.mxu0 0.0
        %3841 = vmatprep.subr.mxu0 0.0
        %3842 = vmatpush1.msra.mxu0 0.0
        %3843 = vmatprep.subr.mxu0 0.0
        %3844 = vmatpush1.msra.mxu0 0.0
        %3845 = vmatprep.subr.mxu0 0.0
        %3846 = vmatpush1.msra.mxu0 0.0
        %3847 = vmatprep.subr.mxu0 0.0
        %3848 = vmatpush1.msra.mxu0 0.0
        %3849 = vmatprep.subr.mxu0 0.0
        %3850 = vmatpush1.msra.mxu0 0.0
        %3851 = vmatprep.subr.mxu0 0.0
        %3852 = vmatpush1.msra.mxu0 0.0
        %3853 = vmatprep.subr.mxu0 0.0
        %3854 = vmatpush1.msra.mxu0 0.0
        %3855 = vmatprep.subr.mxu0 0.0
        %3856 = vmatpush1.msra.mxu0 0.0
        %3857 = vmatprep.subr.mxu0 0.0
        %3858 = vmatpush1.msra.mxu0 0.0
        %3859 = vmatprep.subr.mxu0 0.0
        %3860 = vmatpush1.msra.mxu0 0.0
        %3861 = vmatprep.subr.mxu0 0.0
        %3862 = vmatpush1.msra.mxu0 0.0
        %3863 = vmatprep.subr.mxu0 0.0
        %3864 = vmatpush1.msra.mxu0 0.0
        %3865 = vmatprep.subr.mxu0 0.0
        %3866 = vmatpush1.msra.mxu0 0.0
        %3867 = vmatprep.subr.mxu0 0.0
        %3868 = vmatpush1.msra.mxu0 0.0
        %3869 = vmatprep.subr.mxu0 0.0
        %3870 = vmatpush1.msra.mxu0 0.0
        %3871 = vmatprep.subr.mxu0 0.0
        %3872 = vmatpush1.msra.mxu0 0.0
        %3873 = vmatprep.subr.mxu0 0.0
        %3874 = vmatpush1.msra.mxu0 0.0
        %3875 = vmatprep.subr.mxu0 0.0
        %3876 = vmatpush1.msra.mxu0 0.0
        %3877 = vmatprep.subr.mxu0 0.0
        %3878 = vmatpush1.msra.mxu0 0.0
        %3879 = vmatprep.subr.mxu0 0.0
        %3880 = vmatpush1.msra.mxu0 0.0
        %3881 = vmatprep.subr.mxu0 0.0
        %3882 = vmatpush1.msra.mxu0 0.0
        %3883 = vmatprep.mubr.f32.mxu0 0.0
        %3884 = vmatmul.mubr.f32.gmra.mrb[0].mxu0 %v2819
        %v3885 = vpop.f32.mrb[0].mxu0
        %v3886 = vadd.f32 0.0, %v3885
        %v3887 = vpop.f32.mrb[0].mxu0
        %v3888 = vadd.f32 0.0, %v3887
        %3889 = vmatprep.mubr.f32.mxu0 0.0
        %3890 = vmatmul.mubr.f32.gmra.mrb[0].mxu0 %v2822
        %v3891 = vpop.f32.mrb[0].mxu0
        %v3892 = vadd.f32 0.0, %v3891
        %v3893 = vpop.f32.mrb[0].mxu0
        %v3894 = vadd.f32 0.0, %v3893
        %3895 = vmatprep.mubr.f32.mxu0 0.0
        %3896 = vmatmul.mubr.f32.gmra.mrb[0].mxu0 %v2825
        %v3897 = vpop.f32.mrb[0].mxu0
        %v3898 = vadd.f32 0.0, %v3897
        %v3899 = vpop.f32.mrb[0].mxu0
        %v3900 = vadd.f32 0.0, %v3899
        %3901 = vmatprep.mubr.f32.mxu0 0.0
        %3902 = vmatmul.mubr.f32.gmra.mrb[0].mxu0 %v2828
        %v3903 = vpop.f32.mrb[0].mxu0
        %v3904 = vadd.f32 0.0, %v3903
        %v3905 = vpop.f32.mrb[0].mxu0
        %v3906 = vadd.f32 0.0, %v3905
        %3907 = vmatprep.mubr.f32.mxu0 0.0
        %3908 = vmatmul.mubr.f32.gmra.mrb[0].mxu0 %v2831
        %v3909 = vpop.f32.mrb[0].mxu0
        %v3910 = vadd.f32 0.0, %v3909
        %v3911 = vpop.f32.mrb[0].mxu0
        %v3912 = vadd.f32 0.0, %v3911
        %3913 = vmatprep.mubr.f32.mxu0 0.0
        %3914 = vmatmul.mubr.f32.gmra.mrb[0].mxu0 %v2834
        %v3915 = vpop.f32.mrb[0].mxu0
        %v3916 = vadd.f32 0.0, %v3915
        %v3917 = vpop.f32.mrb[0].mxu0
        %v3918 = vadd.f32 0.0, %v3917
        %3919 = vmatprep.mubr.f32.mxu0 0.0
        %3920 = vmatmul.mubr.f32.gmra.mrb[0].mxu0 %v2837
        %v3921 = vpop.f32.mrb[0].mxu0
        %v3922 = vadd.f32 0.0, %v3921
        %v3923 = vpop.f32.mrb[0].mxu0
        %v3924 = vadd.f32 0.0, %v3923
        %3925 = vmatprep.mubr.f32.mxu0 0.0
        %3926 = vmatmul.mubr.f32.gmra.mrb[0].mxu0 %v2840
        %v3927 = vpop.f32.mrb[0].mxu0
        %v3928 = vadd.f32 0.0, %v3927
        %v3929 = vpop.f32.mrb[0].mxu0
        %v3930 = vadd.f32 0.0, %v3929
        %3931 = vmatprep.mubr.f32.mxu0 0.0
        %3932 = vmatmul.mubr.f32.gmra.mrb[0].mxu0 %v2843
        %v3933 = vpop.f32.mrb[0].mxu0
        %v3934 = vadd.f32 0.0, %v3933
        %v3935 = vpop.f32.mrb[0].mxu0
        %v3936 = vadd.f32 0.0, %v3935
        %3937 = vmatprep.mubr.f32.mxu0 0.0
        %3938 = vmatmul.mubr.f32.gmra.mrb[0].mxu0 %v2846
        %v3939 = vpop.f32.mrb[0].mxu0
        %v3940 = vadd.f32 0.0, %v3939
        %v3941 = vpop.f32.mrb[0].mxu0
        %v3942 = vadd.f32 0.0, %v3941
        %3943 = vmatprep.mubr.f32.mxu0 0.0
        %3944 = vmatmul.mubr.f32.gmra.mrb[0].mxu0 %v2849
        %v3945 = vpop.f32.mrb[0].mxu0
        %v3946 = vadd.f32 0.0, %v3945
        %v3947 = vpop.f32.mrb[0].mxu0
        %v3948 = vadd.f32 0.0, %v3947
        %3949 = vmatprep.mubr.f32.mxu0 0.0
        %3950 = vmatmul.mubr.f32.gmra.mrb[0].mxu0 %v2852
        %v3951 = vpop.f32.mrb[0].mxu0
        %v3952 = vadd.f32 0.0, %v3951
        %v3953 = vpop.f32.mrb[0].mxu0
        %v3954 = vadd.f32 0.0, %v3953
        %3955 = vmatprep.mubr.f32.mxu0 0.0
        %3956 = vmatmul.mubr.f32.gmra.mrb[0].mxu0 %v2855
        %v3957 = vpop.f32.mrb[0].mxu0
        %v3958 = vadd.f32 0.0, %v3957
        %v3959 = vpop.f32.mrb[0].mxu0
        %v3960 = vadd.f32 0.0, %v3959
        %3961 = vmatprep.mubr.f32.mxu0 0.0
        %3962 = vmatmul.mubr.f32.gmra.mrb[0].mxu0 %v2858
        %v3963 = vpop.f32.mrb[0].mxu0
        %v3964 = vadd.f32 0.0, %v3963
        %v3965 = vpop.f32.mrb[0].mxu0
        %v3966 = vadd.f32 0.0, %v3965
        %3967 = vmatprep.mubr.f32.mxu0 0.0
        %3968 = vmatmul.mubr.f32.gmra.mrb[0].mxu0 %v2861
        %v3969 = vpop.f32.mrb[0].mxu0
        %v3970 = vadd.f32 0.0, %v3969
        %v3971 = vpop.f32.mrb[0].mxu0
        %v3972 = vadd.f32 0.0, %v3971
        %3973 = vmatprep.mubr.f32.mxu0 0.0
        %3974 = vmatmul.mubr.f32.gmra.mrb[0].mxu0 %v2864
        %v3975 = vpop.f32.mrb[0].mxu0
        %v3976 = vadd.f32 0.0, %v3975
        %v3977 = vpop.f32.mrb[0].mxu0
        %v3978 = vadd.f32 0.0, %v3977
        %3979 = vmatprep.mubr.f32.mxu0 0.0
        %3980 = vmatmul.mubr.f32.gmra.mrb[0].mxu0 %v2867
        %v3981 = vpop.f32.mrb[0].mxu0
        %v3982 = vadd.f32 0.0, %v3981
        %v3983 = vpop.f32.mrb[0].mxu0
        %v3984 = vadd.f32 0.0, %v3983
        %3985 = vmatprep.mubr.f32.mxu0 0.0
        %3986 = vmatmul.mubr.f32.gmra.mrb[0].mxu0 %v2870
        %v3987 = vpop.f32.mrb[0].mxu0
        %v3988 = vadd.f32 0.0, %v3987
        %v3989 = vpop.f32.mrb[0].mxu0
        %v3990 = vadd.f32 0.0, %v3989
        %3991 = vmatprep.mubr.f32.mxu0 0.0
        %3992 = vmatmul.mubr.f32.gmra.mrb[0].mxu0 %v2873
        %v3993 = vpop.f32.mrb[0].mxu0
        %v3994 = vadd.f32 0.0, %v3993
        %v3995 = vpop.f32.mrb[0].mxu0
        %v3996 = vadd.f32 0.0, %v3995
        %3997 = vmatprep.mubr.f32.mxu0 0.0
        %3998 = vmatmul.mubr.f32.gmra.mrb[0].mxu0 %v2876
        %v3999 = vpop.f32.mrb[0].mxu0
        %v4000 = vadd.f32 0.0, %v3999
        %v4001 = vpop.f32.mrb[0].mxu0
        %v4002 = vadd.f32 0.0, %v4001
        %4003 = vmatprep.mubr.f32.mxu0 0.0
        %4004 = vmatmul.mubr.f32.gmra.mrb[0].mxu0 %v2879
        %v4005 = vpop.f32.mrb[0].mxu0
        %v4006 = vadd.f32 0.0, %v4005
        %v4007 = vpop.f32.mrb[0].mxu0
        %v4008 = vadd.f32 0.0, %v4007
        %4009 = vmatprep.mubr.f32.mxu0 0.0
        %4010 = vmatmul.mubr.f32.gmra.mrb[0].mxu0 %v2882
        %v4011 = vpop.f32.mrb[0].mxu0
        %v4012 = vadd.f32 0.0, %v4011
        %v4013 = vpop.f32.mrb[0].mxu0
        %v4014 = vadd.f32 0.0, %v4013
        %4015 = vmatprep.mubr.f32.mxu0 0.0
        %4016 = vmatmul.mubr.f32.gmra.mrb[0].mxu0 %v2885
        %v4017 = vpop.f32.mrb[0].mxu0
        %v4018 = vadd.f32 0.0, %v4017
        %v4019 = vpop.f32.mrb[0].mxu0
        %v4020 = vadd.f32 0.0, %v4019
        %4021 = vmatprep.mubr.f32.mxu0 0.0
        %4022 = vmatmul.mubr.f32.gmra.mrb[0].mxu0 %v2888
        %v4023 = vpop.f32.mrb[0].mxu0
        %v4024 = vadd.f32 0.0, %v4023
        %v4025 = vpop.f32.mrb[0].mxu0
        %v4026 = vadd.f32 0.0, %v4025
        %4027 = vmatprep.mubr.f32.mxu0 0.0
        %4028 = vmatmul.mubr.f32.gmra.mrb[0].mxu0 %v2891
        %v4029 = vpop.f32.mrb[0].mxu0
        %v4030 = vadd.f32 0.0, %v4029
        %v4031 = vpop.f32.mrb[0].mxu0
        %v4032 = vadd.f32 0.0, %v4031
        %4033 = vmatprep.mubr.f32.mxu0 0.0
        %4034 = vmatmul.mubr.f32.gmra.mrb[0].mxu0 %v2894
        %v4035 = vpop.f32.mrb[0].mxu0
        %v4036 = vadd.f32 0.0, %v4035
        %v4037 = vpop.f32.mrb[0].mxu0
        %v4038 = vadd.f32 0.0, %v4037
        %4039 = vmatprep.mubr.f32.mxu0 0.0
        %4040 = vmatmul.mubr.f32.gmra.mrb[0].mxu0 %v2897
        %v4041 = vpop.f32.mrb[0].mxu0
        %v4042 = vadd.f32 0.0, %v4041
        %v4043 = vpop.f32.mrb[0].mxu0
        %v4044 = vadd.f32 0.0, %v4043
        %4045 = vmatprep.mubr.f32.mxu0 0.0
        %4046 = vmatmul.mubr.f32.gmra.mrb[0].mxu0 %v2900
        %v4047 = vpop.f32.mrb[0].mxu0
        %v4048 = vadd.f32 0.0, %v4047
        %v4049 = vpop.f32.mrb[0].mxu0
        %v4050 = vadd.f32 0.0, %v4049
        %4051 = vdwg.mxu0
        %s4052 = scalar_lea.vmem %s514, 896 [#allocation2]
        %4053 = vst [vmem:[%s4052] sm:$0xff] %v3886
        %4054 = vst.msk [vmem:[%s4052 + $0x8] sm:$0xff] %vm717, %v3888
        %4055 = vst [vmem:[%s4052 + $0x10] sm:$0xff] %v3892
        %4056 = vst.msk [vmem:[%s4052 + $0x18] sm:$0xff] %vm717, %v3894
        %4057 = vst [vmem:[%s4052 + $0x20] sm:$0xff] %v3898
        %4058 = vst.msk [vmem:[%s4052 + $0x28] sm:$0xff] %vm717, %v3900
        %4059 = vst [vmem:[%s4052 + $0x30] sm:$0xff] %v3904
        %4060 = vst.msk [vmem:[%s4052 + $0x38] sm:$0xff] %vm717, %v3906
        %4061 = vst [vmem:[%s4052 + $0x40] sm:$0xff] %v3910
        %4062 = vst.msk [vmem:[%s4052 + $0x48] sm:$0xff] %vm717, %v3912
        %4063 = vst [vmem:[%s4052 + $0x50] sm:$0xff] %v3916
        %4064 = vst.msk [vmem:[%s4052 + $0x58] sm:$0xff] %vm717, %v3918
        %4065 = vst [vmem:[%s4052 + $0x60] sm:$0xff] %v3922
        %4066 = vst.msk [vmem:[%s4052 + $0x68] sm:$0xff] %vm717, %v3924
        %4067 = vst [vmem:[%s4052 + $0x70] sm:$0xff] %v3928
        %4068 = vst.msk [vmem:[%s4052 + $0x78] sm:$0xff] %vm717, %v3930
        %4069 = vst [vmem:[%s4052 + $0x80] sm:$0xff] %v3934
        %4070 = vst.msk [vmem:[%s4052 + $0x88] sm:$0xff] %vm717, %v3936
        %4071 = vst [vmem:[%s4052 + $0x90] sm:$0xff] %v3940
        %4072 = vst.msk [vmem:[%s4052 + $0x98] sm:$0xff] %vm717, %v3942
        %4073 = vst [vmem:[%s4052 + $0xa0] sm:$0xff] %v3946
        %4074 = vst.msk [vmem:[%s4052 + $0xa8] sm:$0xff] %vm717, %v3948
        %4075 = vst [vmem:[%s4052 + $0xb0] sm:$0xff] %v3952
        %4076 = vst.msk [vmem:[%s4052 + $0xb8] sm:$0xff] %vm717, %v3954
        %4077 = vst [vmem:[%s4052 + $0xc0] sm:$0xff] %v3958
        %4078 = vst.msk [vmem:[%s4052 + $0xc8] sm:$0xff] %vm717, %v3960
        %4079 = vst [vmem:[%s4052 + $0xd0] sm:$0xff] %v3964
        %4080 = vst.msk [vmem:[%s4052 + $0xd8] sm:$0xff] %vm717, %v3966
        %4081 = vst [vmem:[%s4052 + $0xe0] sm:$0xff] %v3970
        %4082 = vst.msk [vmem:[%s4052 + $0xe8] sm:$0xff] %vm717, %v3972
        %4083 = vst [vmem:[%s4052 + $0xf0] sm:$0xff] %v3976
        %4084 = vst.msk [vmem:[%s4052 + $0xf8] sm:$0xff] %vm717, %v3978
        %4085 = vst [vmem:[%s4052 + $0x100] sm:$0xff] %v3982
        %4086 = vst.msk [vmem:[%s4052 + $0x108] sm:$0xff] %vm717, %v3984
        %4087 = vst [vmem:[%s4052 + $0x110] sm:$0xff] %v3988
        %4088 = vst.msk [vmem:[%s4052 + $0x118] sm:$0xff] %vm717, %v3990
        %4089 = vst [vmem:[%s4052 + $0x120] sm:$0xff] %v3994
        %4090 = vst.msk [vmem:[%s4052 + $0x128] sm:$0xff] %vm717, %v3996
        %4091 = vst [vmem:[%s4052 + $0x130] sm:$0xff] %v4000
        %4092 = vst.msk [vmem:[%s4052 + $0x138] sm:$0xff] %vm717, %v4002
        %4093 = vst [vmem:[%s4052 + $0x140] sm:$0xff] %v4006
        %4094 = vst.msk [vmem:[%s4052 + $0x148] sm:$0xff] %vm717, %v4008
        %4095 = vst [vmem:[%s4052 + $0x150] sm:$0xff] %v4012
        %4096 = vst.msk [vmem:[%s4052 + $0x158] sm:$0xff] %vm717, %v4014
        %4097 = vst [vmem:[%s4052 + $0x160] sm:$0xff] %v4018
        %4098 = vst.msk [vmem:[%s4052 + $0x168] sm:$0xff] %vm717, %v4020
        %4099 = vst [vmem:[%s4052 + $0x170] sm:$0xff] %v4024
        %4100 = vst.msk [vmem:[%s4052 + $0x178] sm:$0xff] %vm717, %v4026
        %4101 = vst [vmem:[%s4052 + $0x180] sm:$0xff] %v4030
        %4102 = vst.msk [vmem:[%s4052 + $0x188] sm:$0xff] %vm717, %v4032
        %4103 = vst [vmem:[%s4052 + $0x190] sm:$0xff] %v4036
        %4104 = vst.msk [vmem:[%s4052 + $0x198] sm:$0xff] %vm717, %v4038
        %4105 = vst [vmem:[%s4052 + $0x1a0] sm:$0xff] %v4042
        %4106 = vst.msk [vmem:[%s4052 + $0x1a8] sm:$0xff] %vm717, %v4044
        %4107 = vst [vmem:[%s4052 + $0x1b0] sm:$0xff] %v4048
        %4108 = vst.msk [vmem:[%s4052 + $0x1b8] sm:$0xff] %vm717, %v4050
        %s4109 = scalar_lea.vmem %s12, 384
        %v4110 = vld [vmem:[%s4109] sm:$0xff]
        %v4111 = vld [vmem:[%s4109 + $0x8] sm:$0xff]
        %v4112 = vld [vmem:[%s4109 + $0x10] sm:$0xff]
        %v4113 = vld [vmem:[%s4109 + $0x18] sm:$0xff]
        %v4114 = vld [vmem:[%s4109 + $0x20] sm:$0xff]
        %v4115 = vld [vmem:[%s4109 + $0x28] sm:$0xff]
        %v4116 = vld [vmem:[%s4109 + $0x30] sm:$0xff]
        %v4117 = vld [vmem:[%s4109 + $0x38] sm:$0xff]
        %v4118 = vld [vmem:[%s4109 + $0x40] sm:$0xff]
        %v4119 = vld [vmem:[%s4109 + $0x48] sm:$0xff]
        %v4120 = vld [vmem:[%s4109 + $0x50] sm:$0xff]
        %v4121 = vld [vmem:[%s4109 + $0x58] sm:$0xff]
        %v4122 = vld [vmem:[%s4109 + $0x60] sm:$0xff]
        %v4123 = vld [vmem:[%s4109 + $0x68] sm:$0xff]
        %v4124 = vld [vmem:[%s4109 + $0x70] sm:$0xff]
        %v4125 = vld [vmem:[%s4109 + $0x78] sm:$0xff]
        %s4126 = scalar_lea.vmem %s13, 3
        %v4127 = vld [vmem:[%s4126] sm:$0x1]
        %v4129 = vlaneseq
        %v4130 = vshrl.u32 %v4129, 7
        %v4131 = vsub.s32 0, %v4130
        %v4132 = vrot.slane %v4127, %v4131
        %4134 = vmatprep.subr.mxu0 0.0
        %4135 = vmatpush1.msra.mxu0 %v4110
        %4136 = vmatprep.subr.mxu0 0.0
        %4137 = vmatpush1.msra.mxu0 %v4111
        %4138 = vmatprep.subr.mxu0 0.0
        %4139 = vmatpush1.msra.mxu0 %v4112
        %4140 = vmatprep.subr.mxu0 0.0
        %4141 = vmatpush1.msra.mxu0 %v4113
        %4142 = vmatprep.subr.mxu0 0.0
        %4143 = vmatpush1.msra.mxu0 %v4114
        %4144 = vmatprep.subr.mxu0 0.0
        %4145 = vmatpush1.msra.mxu0 %v4115
        %4146 = vmatprep.subr.mxu0 0.0
        %4147 = vmatpush1.msra.mxu0 %v4116
        %4148 = vmatprep.subr.mxu0 0.0
        %4149 = vmatpush1.msra.mxu0 %v4117
        %4150 = vmatprep.subr.mxu0 0.0
        %4151 = vmatpush1.msra.mxu0 %v4118
        %4152 = vmatprep.subr.mxu0 0.0
        %4153 = vmatpush1.msra.mxu0 %v4119
        %4154 = vmatprep.subr.mxu0 0.0
        %4155 = vmatpush1.msra.mxu0 %v4120
        %4156 = vmatprep.subr.mxu0 0.0
        %4157 = vmatpush1.msra.mxu0 %v4121
        %4158 = vmatprep.subr.mxu0 0.0
        %4159 = vmatpush1.msra.mxu0 %v4122
        %4160 = vmatprep.subr.mxu0 0.0
        %4161 = vmatpush1.msra.mxu0 %v4123
        %4162 = vmatprep.subr.mxu0 0.0
        %4163 = vmatpush1.msra.mxu0 %v4124
        %4164 = vmatprep.subr.mxu0 0.0
        %4165 = vmatpush1.msra.mxu0 %v4125
        %4166 = vmatprep.subr.mxu0 0.0
        %4167 = vmatpush1.msra.mxu0 0.0
        %4168 = vmatprep.subr.mxu0 0.0
        %4169 = vmatpush1.msra.mxu0 0.0
        %4170 = vmatprep.subr.mxu0 0.0
        %4171 = vmatpush1.msra.mxu0 0.0
        %4172 = vmatprep.subr.mxu0 0.0
        %4173 = vmatpush1.msra.mxu0 0.0
        %4174 = vmatprep.subr.mxu0 0.0
        %4175 = vmatpush1.msra.mxu0 0.0
        %4176 = vmatprep.subr.mxu0 0.0
        %4177 = vmatpush1.msra.mxu0 0.0
        %4178 = vmatprep.subr.mxu0 0.0
        %4179 = vmatpush1.msra.mxu0 0.0
        %4180 = vmatprep.subr.mxu0 0.0
        %4181 = vmatpush1.msra.mxu0 0.0
        %4182 = vmatprep.subr.mxu0 0.0
        %4183 = vmatpush1.msra.mxu0 0.0
        %4184 = vmatprep.subr.mxu0 0.0
        %4185 = vmatpush1.msra.mxu0 0.0
        %4186 = vmatprep.subr.mxu0 0.0
        %4187 = vmatpush1.msra.mxu0 0.0
        %4188 = vmatprep.subr.mxu0 0.0
        %4189 = vmatpush1.msra.mxu0 0.0
        %4190 = vmatprep.subr.mxu0 0.0
        %4191 = vmatpush1.msra.mxu0 0.0
        %4192 = vmatprep.subr.mxu0 0.0
        %4193 = vmatpush1.msra.mxu0 0.0
        %4194 = vmatprep.subr.mxu0 0.0
        %4195 = vmatpush1.msra.mxu0 0.0
        %4196 = vmatprep.subr.mxu0 0.0
        %4197 = vmatpush1.msra.mxu0 0.0
        %4198 = vmatprep.mubr.f32.mxu0 0.0
        %4199 = vmatmul.mubr.f32.gmra.mrb[0].mxu0 %v2619
        %v4200 = vpop.f32.mrb[0].mxu0
        %v4201 = vadd.f32 %v4132, %v4200
        %v4202 = vpop.f32.mrb[0].mxu0
        %4203 = vdwg.mxu0
        %v4205 = vsel %vm2743, %v4201, 0
        %4207 = vmatprep.subr.mxu0 %v2621
        %4208 = vmatpush1.msra.mxu0 %v2620
        %4209 = vmatprep.subr.mxu0 0.0
        %4210 = vmatpush1.msra.mxu0 0.0
        %4211 = vmatprep.subr.mxu0 0.0
        %4212 = vmatpush1.msra.mxu0 0.0
        %4213 = vmatprep.subr.mxu0 0.0
        %4214 = vmatpush1.msra.mxu0 0.0
        %4215 = vmatprep.subr.mxu0 0.0
        %4216 = vmatpush1.msra.mxu0 0.0
        %4217 = vmatprep.subr.mxu0 0.0
        %4218 = vmatpush1.msra.mxu0 0.0
        %4219 = vmatprep.subr.mxu0 0.0
        %4220 = vmatpush1.msra.mxu0 0.0
        %4221 = vmatprep.subr.mxu0 0.0
        %4222 = vmatpush1.msra.mxu0 0.0
        %4223 = vmatprep.subr.mxu0 0.0
        %4224 = vmatpush1.msra.mxu0 0.0
        %4225 = vmatprep.subr.mxu0 0.0
        %4226 = vmatpush1.msra.mxu0 0.0
        %4227 = vmatprep.subr.mxu0 0.0
        %4228 = vmatpush1.msra.mxu0 0.0
        %4229 = vmatprep.subr.mxu0 0.0
        %4230 = vmatpush1.msra.mxu0 0.0
        %4231 = vmatprep.subr.mxu0 0.0
        %4232 = vmatpush1.msra.mxu0 0.0
        %4233 = vmatprep.subr.mxu0 0.0
        %4234 = vmatpush1.msra.mxu0 0.0
        %4235 = vmatprep.subr.mxu0 0.0
        %4236 = vmatpush1.msra.mxu0 0.0
        %4237 = vmatprep.subr.mxu0 0.0
        %4238 = vmatpush1.msra.mxu0 0.0
        %4239 = vmatprep.subr.mxu0 0.0
        %4240 = vmatpush1.msra.mxu0 0.0
        %4241 = vmatprep.subr.mxu0 0.0
        %4242 = vmatpush1.msra.mxu0 0.0
        %4243 = vmatprep.subr.mxu0 0.0
        %4244 = vmatpush1.msra.mxu0 0.0
        %4245 = vmatprep.subr.mxu0 0.0
        %4246 = vmatpush1.msra.mxu0 0.0
        %4247 = vmatprep.subr.mxu0 0.0
        %4248 = vmatpush1.msra.mxu0 0.0
        %4249 = vmatprep.subr.mxu0 0.0
        %4250 = vmatpush1.msra.mxu0 0.0
        %4251 = vmatprep.subr.mxu0 0.0
        %4252 = vmatpush1.msra.mxu0 0.0
        %4253 = vmatprep.subr.mxu0 0.0
        %4254 = vmatpush1.msra.mxu0 0.0
        %4255 = vmatprep.subr.mxu0 0.0
        %4256 = vmatpush1.msra.mxu0 0.0
        %4257 = vmatprep.subr.mxu0 0.0
        %4258 = vmatpush1.msra.mxu0 0.0
        %4259 = vmatprep.subr.mxu0 0.0
        %4260 = vmatpush1.msra.mxu0 0.0
        %4261 = vmatprep.subr.mxu0 0.0
        %4262 = vmatpush1.msra.mxu0 0.0
        %4263 = vmatprep.subr.mxu0 0.0
        %4264 = vmatpush1.msra.mxu0 0.0
        %4265 = vmatprep.subr.mxu0 0.0
        %4266 = vmatpush1.msra.mxu0 0.0
        %4267 = vmatprep.subr.mxu0 0.0
        %4268 = vmatpush1.msra.mxu0 0.0
        %4269 = vmatprep.subr.mxu0 0.0
        %4270 = vmatpush1.msra.mxu0 0.0
        %4271 = vmatprep.mubr.f32.mxu0 0.0
        %4272 = vmatmul.mubr.f32.gmra.mrb[0].mxu0 %v4205
        %v4273 = vpop.f32.mrb[0].mxu0
        %v4274 = vadd.f32 0.0, %v4273
        %v4275 = vpop.f32.mrb[0].mxu0
        %v4276 = vadd.f32 0.0, %v4275
        %4277 = vdwg.mxu0
        %4278 = vmatprep.subr.mxu0 %v4276
        %4279 = vmatpush1.msra.mxu0 %v4274
        %4280 = vmatprep.subr.mxu0 0.0
        %4281 = vmatpush1.msra.mxu0 0.0
        %4282 = vmatprep.subr.mxu0 0.0
        %4283 = vmatpush1.msra.mxu0 0.0
        %4284 = vmatprep.subr.mxu0 0.0
        %4285 = vmatpush1.msra.mxu0 0.0
        %4286 = vmatprep.subr.mxu0 0.0
        %4287 = vmatpush1.msra.mxu0 0.0
        %4288 = vmatprep.subr.mxu0 0.0
        %4289 = vmatpush1.msra.mxu0 0.0
        %4290 = vmatprep.subr.mxu0 0.0
        %4291 = vmatpush1.msra.mxu0 0.0
        %4292 = vmatprep.subr.mxu0 0.0
        %4293 = vmatpush1.msra.mxu0 0.0
        %4294 = vmatprep.subr.mxu0 0.0
        %4295 = vmatpush1.msra.mxu0 0.0
        %4296 = vmatprep.subr.mxu0 0.0
        %4297 = vmatpush1.msra.mxu0 0.0
        %4298 = vmatprep.subr.mxu0 0.0
        %4299 = vmatpush1.msra.mxu0 0.0
        %4300 = vmatprep.subr.mxu0 0.0
        %4301 = vmatpush1.msra.mxu0 0.0
        %4302 = vmatprep.subr.mxu0 0.0
        %4303 = vmatpush1.msra.mxu0 0.0
        %4304 = vmatprep.subr.mxu0 0.0
        %4305 = vmatpush1.msra.mxu0 0.0
        %4306 = vmatprep.subr.mxu0 0.0
        %4307 = vmatpush1.msra.mxu0 0.0
        %4308 = vmatprep.subr.mxu0 0.0
        %4309 = vmatpush1.msra.mxu0 0.0
        %4310 = vmatprep.subr.mxu0 0.0
        %4311 = vmatpush1.msra.mxu0 0.0
        %4312 = vmatprep.subr.mxu0 0.0
        %4313 = vmatpush1.msra.mxu0 0.0
        %4314 = vmatprep.subr.mxu0 0.0
        %4315 = vmatpush1.msra.mxu0 0.0
        %4316 = vmatprep.subr.mxu0 0.0
        %4317 = vmatpush1.msra.mxu0 0.0
        %4318 = vmatprep.subr.mxu0 0.0
        %4319 = vmatpush1.msra.mxu0 0.0
        %4320 = vmatprep.subr.mxu0 0.0
        %4321 = vmatpush1.msra.mxu0 0.0
        %4322 = vmatprep.subr.mxu0 0.0
        %4323 = vmatpush1.msra.mxu0 0.0
        %4324 = vmatprep.subr.mxu0 0.0
        %4325 = vmatpush1.msra.mxu0 0.0
        %4326 = vmatprep.subr.mxu0 0.0
        %4327 = vmatpush1.msra.mxu0 0.0
        %4328 = vmatprep.subr.mxu0 0.0
        %4329 = vmatpush1.msra.mxu0 0.0
        %4330 = vmatprep.subr.mxu0 0.0
        %4331 = vmatpush1.msra.mxu0 0.0
        %4332 = vmatprep.subr.mxu0 0.0
        %4333 = vmatpush1.msra.mxu0 0.0
        %4334 = vmatprep.subr.mxu0 0.0
        %4335 = vmatpush1.msra.mxu0 0.0
        %4336 = vmatprep.subr.mxu0 0.0
        %4337 = vmatpush1.msra.mxu0 0.0
        %4338 = vmatprep.subr.mxu0 0.0
        %4339 = vmatpush1.msra.mxu0 0.0
        %4340 = vmatprep.subr.mxu0 0.0
        %4341 = vmatpush1.msra.mxu0 0.0
        %4342 = vmatprep.mubr.f32.mxu0 0.0
        %4343 = vmatmul.mubr.f32.gmra.mrb[0].mxu0 %v2819
        %v4344 = vpop.f32.mrb[0].mxu0
        %v4345 = vadd.f32 0.0, %v4344
        %v4346 = vpop.f32.mrb[0].mxu0
        %v4347 = vadd.f32 0.0, %v4346
        %4348 = vmatprep.mubr.f32.mxu0 0.0
        %4349 = vmatmul.mubr.f32.gmra.mrb[0].mxu0 %v2822
        %v4350 = vpop.f32.mrb[0].mxu0
        %v4351 = vadd.f32 0.0, %v4350
        %v4352 = vpop.f32.mrb[0].mxu0
        %v4353 = vadd.f32 0.0, %v4352
        %4354 = vmatprep.mubr.f32.mxu0 0.0
        %4355 = vmatmul.mubr.f32.gmra.mrb[0].mxu0 %v2825
        %v4356 = vpop.f32.mrb[0].mxu0
        %v4357 = vadd.f32 0.0, %v4356
        %v4358 = vpop.f32.mrb[0].mxu0
        %v4359 = vadd.f32 0.0, %v4358
        %4360 = vmatprep.mubr.f32.mxu0 0.0
        %4361 = vmatmul.mubr.f32.gmra.mrb[0].mxu0 %v2828
        %v4362 = vpop.f32.mrb[0].mxu0
        %v4363 = vadd.f32 0.0, %v4362
        %v4364 = vpop.f32.mrb[0].mxu0
        %v4365 = vadd.f32 0.0, %v4364
        %4366 = vmatprep.mubr.f32.mxu0 0.0
        %4367 = vmatmul.mubr.f32.gmra.mrb[0].mxu0 %v2831
        %v4368 = vpop.f32.mrb[0].mxu0
        %v4369 = vadd.f32 0.0, %v4368
        %v4370 = vpop.f32.mrb[0].mxu0
        %v4371 = vadd.f32 0.0, %v4370
        %4372 = vmatprep.mubr.f32.mxu0 0.0
        %4373 = vmatmul.mubr.f32.gmra.mrb[0].mxu0 %v2834
        %v4374 = vpop.f32.mrb[0].mxu0
        %v4375 = vadd.f32 0.0, %v4374
        %v4376 = vpop.f32.mrb[0].mxu0
        %v4377 = vadd.f32 0.0, %v4376
        %4378 = vmatprep.mubr.f32.mxu0 0.0
        %4379 = vmatmul.mubr.f32.gmra.mrb[0].mxu0 %v2837
        %v4380 = vpop.f32.mrb[0].mxu0
        %v4381 = vadd.f32 0.0, %v4380
        %v4382 = vpop.f32.mrb[0].mxu0
        %v4383 = vadd.f32 0.0, %v4382
        %4384 = vmatprep.mubr.f32.mxu0 0.0
        %4385 = vmatmul.mubr.f32.gmra.mrb[0].mxu0 %v2840
        %v4386 = vpop.f32.mrb[0].mxu0
        %v4387 = vadd.f32 0.0, %v4386
        %v4388 = vpop.f32.mrb[0].mxu0
        %v4389 = vadd.f32 0.0, %v4388
        %4390 = vmatprep.mubr.f32.mxu0 0.0
        %4391 = vmatmul.mubr.f32.gmra.mrb[0].mxu0 %v2843
        %v4392 = vpop.f32.mrb[0].mxu0
        %v4393 = vadd.f32 0.0, %v4392
        %v4394 = vpop.f32.mrb[0].mxu0
        %v4395 = vadd.f32 0.0, %v4394
        %4396 = vmatprep.mubr.f32.mxu0 0.0
        %4397 = vmatmul.mubr.f32.gmra.mrb[0].mxu0 %v2846
        %v4398 = vpop.f32.mrb[0].mxu0
        %v4399 = vadd.f32 0.0, %v4398
        %v4400 = vpop.f32.mrb[0].mxu0
        %v4401 = vadd.f32 0.0, %v4400
        %4402 = vmatprep.mubr.f32.mxu0 0.0
        %4403 = vmatmul.mubr.f32.gmra.mrb[0].mxu0 %v2849
        %v4404 = vpop.f32.mrb[0].mxu0
        %v4405 = vadd.f32 0.0, %v4404
        %v4406 = vpop.f32.mrb[0].mxu0
        %v4407 = vadd.f32 0.0, %v4406
        %4408 = vmatprep.mubr.f32.mxu0 0.0
        %4409 = vmatmul.mubr.f32.gmra.mrb[0].mxu0 %v2852
        %v4410 = vpop.f32.mrb[0].mxu0
        %v4411 = vadd.f32 0.0, %v4410
        %v4412 = vpop.f32.mrb[0].mxu0
        %v4413 = vadd.f32 0.0, %v4412
        %4414 = vmatprep.mubr.f32.mxu0 0.0
        %4415 = vmatmul.mubr.f32.gmra.mrb[0].mxu0 %v2855
        %v4416 = vpop.f32.mrb[0].mxu0
        %v4417 = vadd.f32 0.0, %v4416
        %v4418 = vpop.f32.mrb[0].mxu0
        %v4419 = vadd.f32 0.0, %v4418
        %4420 = vmatprep.mubr.f32.mxu0 0.0
        %4421 = vmatmul.mubr.f32.gmra.mrb[0].mxu0 %v2858
        %v4422 = vpop.f32.mrb[0].mxu0
        %v4423 = vadd.f32 0.0, %v4422
        %v4424 = vpop.f32.mrb[0].mxu0
        %v4425 = vadd.f32 0.0, %v4424
        %4426 = vmatprep.mubr.f32.mxu0 0.0
        %4427 = vmatmul.mubr.f32.gmra.mrb[0].mxu0 %v2861
        %v4428 = vpop.f32.mrb[0].mxu0
        %v4429 = vadd.f32 0.0, %v4428
        %v4430 = vpop.f32.mrb[0].mxu0
        %v4431 = vadd.f32 0.0, %v4430
        %4432 = vmatprep.mubr.f32.mxu0 0.0
        %4433 = vmatmul.mubr.f32.gmra.mrb[0].mxu0 %v2864
        %v4434 = vpop.f32.mrb[0].mxu0
        %v4435 = vadd.f32 0.0, %v4434
        %v4436 = vpop.f32.mrb[0].mxu0
        %v4437 = vadd.f32 0.0, %v4436
        %4438 = vmatprep.mubr.f32.mxu0 0.0
        %4439 = vmatmul.mubr.f32.gmra.mrb[0].mxu0 %v2867
        %v4440 = vpop.f32.mrb[0].mxu0
        %v4441 = vadd.f32 0.0, %v4440
        %v4442 = vpop.f32.mrb[0].mxu0
        %v4443 = vadd.f32 0.0, %v4442
        %4444 = vmatprep.mubr.f32.mxu0 0.0
        %4445 = vmatmul.mubr.f32.gmra.mrb[0].mxu0 %v2870
        %v4446 = vpop.f32.mrb[0].mxu0
        %v4447 = vadd.f32 0.0, %v4446
        %v4448 = vpop.f32.mrb[0].mxu0
        %v4449 = vadd.f32 0.0, %v4448
        %4450 = vmatprep.mubr.f32.mxu0 0.0
        %4451 = vmatmul.mubr.f32.gmra.mrb[0].mxu0 %v2873
        %v4452 = vpop.f32.mrb[0].mxu0
        %v4453 = vadd.f32 0.0, %v4452
        %v4454 = vpop.f32.mrb[0].mxu0
        %v4455 = vadd.f32 0.0, %v4454
        %4456 = vmatprep.mubr.f32.mxu0 0.0
        %4457 = vmatmul.mubr.f32.gmra.mrb[0].mxu0 %v2876
        %v4458 = vpop.f32.mrb[0].mxu0
        %v4459 = vadd.f32 0.0, %v4458
        %v4460 = vpop.f32.mrb[0].mxu0
        %v4461 = vadd.f32 0.0, %v4460
        %4462 = vmatprep.mubr.f32.mxu0 0.0
        %4463 = vmatmul.mubr.f32.gmra.mrb[0].mxu0 %v2879
        %v4464 = vpop.f32.mrb[0].mxu0
        %v4465 = vadd.f32 0.0, %v4464
        %v4466 = vpop.f32.mrb[0].mxu0
        %v4467 = vadd.f32 0.0, %v4466
        %4468 = vmatprep.mubr.f32.mxu0 0.0
        %4469 = vmatmul.mubr.f32.gmra.mrb[0].mxu0 %v2882
        %v4470 = vpop.f32.mrb[0].mxu0
        %v4471 = vadd.f32 0.0, %v4470
        %v4472 = vpop.f32.mrb[0].mxu0
        %v4473 = vadd.f32 0.0, %v4472
        %4474 = vmatprep.mubr.f32.mxu0 0.0
        %4475 = vmatmul.mubr.f32.gmra.mrb[0].mxu0 %v2885
        %v4476 = vpop.f32.mrb[0].mxu0
        %v4477 = vadd.f32 0.0, %v4476
        %v4478 = vpop.f32.mrb[0].mxu0
        %v4479 = vadd.f32 0.0, %v4478
        %4480 = vmatprep.mubr.f32.mxu0 0.0
        %4481 = vmatmul.mubr.f32.gmra.mrb[0].mxu0 %v2888
        %v4482 = vpop.f32.mrb[0].mxu0
        %v4483 = vadd.f32 0.0, %v4482
        %v4484 = vpop.f32.mrb[0].mxu0
        %v4485 = vadd.f32 0.0, %v4484
        %4486 = vmatprep.mubr.f32.mxu0 0.0
        %4487 = vmatmul.mubr.f32.gmra.mrb[0].mxu0 %v2891
        %v4488 = vpop.f32.mrb[0].mxu0
        %v4489 = vadd.f32 0.0, %v4488
        %v4490 = vpop.f32.mrb[0].mxu0
        %v4491 = vadd.f32 0.0, %v4490
        %4492 = vmatprep.mubr.f32.mxu0 0.0
        %4493 = vmatmul.mubr.f32.gmra.mrb[0].mxu0 %v2894
        %v4494 = vpop.f32.mrb[0].mxu0
        %v4495 = vadd.f32 0.0, %v4494
        %v4496 = vpop.f32.mrb[0].mxu0
        %v4497 = vadd.f32 0.0, %v4496
        %4498 = vmatprep.mubr.f32.mxu0 0.0
        %4499 = vmatmul.mubr.f32.gmra.mrb[0].mxu0 %v2897
        %v4500 = vpop.f32.mrb[0].mxu0
        %v4501 = vadd.f32 0.0, %v4500
        %v4502 = vpop.f32.mrb[0].mxu0
        %v4503 = vadd.f32 0.0, %v4502
        %4504 = vmatprep.mubr.f32.mxu0 0.0
        %4505 = vmatmul.mubr.f32.gmra.mrb[0].mxu0 %v2900
        %v4506 = vpop.f32.mrb[0].mxu0
        %v4507 = vadd.f32 0.0, %v4506
        %v4508 = vpop.f32.mrb[0].mxu0
        %v4509 = vadd.f32 0.0, %v4508
        %4510 = vdwg.mxu0
        %s4511 = scalar_lea.vmem %s514, 1344 [#allocation2]
        %4512 = vst [vmem:[%s4511] sm:$0xff] %v4345
        %4513 = vst.msk [vmem:[%s4511 + $0x8] sm:$0xff] %vm717, %v4347
        %4514 = vst [vmem:[%s4511 + $0x10] sm:$0xff] %v4351
        %4515 = vst.msk [vmem:[%s4511 + $0x18] sm:$0xff] %vm717, %v4353
        %4516 = vst [vmem:[%s4511 + $0x20] sm:$0xff] %v4357
        %4517 = vst.msk [vmem:[%s4511 + $0x28] sm:$0xff] %vm717, %v4359
        %4518 = vst [vmem:[%s4511 + $0x30] sm:$0xff] %v4363
        %4519 = vst.msk [vmem:[%s4511 + $0x38] sm:$0xff] %vm717, %v4365
        %4520 = vst [vmem:[%s4511 + $0x40] sm:$0xff] %v4369
        %4521 = vst.msk [vmem:[%s4511 + $0x48] sm:$0xff] %vm717, %v4371
        %4522 = vst [vmem:[%s4511 + $0x50] sm:$0xff] %v4375
        %4523 = vst.msk [vmem:[%s4511 + $0x58] sm:$0xff] %vm717, %v4377
        %4524 = vst [vmem:[%s4511 + $0x60] sm:$0xff] %v4381
        %4525 = vst.msk [vmem:[%s4511 + $0x68] sm:$0xff] %vm717, %v4383
        %4526 = vst [vmem:[%s4511 + $0x70] sm:$0xff] %v4387
        %4527 = vst.msk [vmem:[%s4511 + $0x78] sm:$0xff] %vm717, %v4389
        %4528 = vst [vmem:[%s4511 + $0x80] sm:$0xff] %v4393
        %4529 = vst.msk [vmem:[%s4511 + $0x88] sm:$0xff] %vm717, %v4395
        %4530 = vst [vmem:[%s4511 + $0x90] sm:$0xff] %v4399
        %4531 = vst.msk [vmem:[%s4511 + $0x98] sm:$0xff] %vm717, %v4401
        %4532 = vst [vmem:[%s4511 + $0xa0] sm:$0xff] %v4405
        %4533 = vst.msk [vmem:[%s4511 + $0xa8] sm:$0xff] %vm717, %v4407
        %4534 = vst [vmem:[%s4511 + $0xb0] sm:$0xff] %v4411
        %4535 = vst.msk [vmem:[%s4511 + $0xb8] sm:$0xff] %vm717, %v4413
        %4536 = vst [vmem:[%s4511 + $0xc0] sm:$0xff] %v4417
        %4537 = vst.msk [vmem:[%s4511 + $0xc8] sm:$0xff] %vm717, %v4419
        %4538 = vst [vmem:[%s4511 + $0xd0] sm:$0xff] %v4423
        %4539 = vst.msk [vmem:[%s4511 + $0xd8] sm:$0xff] %vm717, %v4425
        %4540 = vst [vmem:[%s4511 + $0xe0] sm:$0xff] %v4429
        %4541 = vst.msk [vmem:[%s4511 + $0xe8] sm:$0xff] %vm717, %v4431
        %4542 = vst [vmem:[%s4511 + $0xf0] sm:$0xff] %v4435
        %4543 = vst.msk [vmem:[%s4511 + $0xf8] sm:$0xff] %vm717, %v4437
        %4544 = vst [vmem:[%s4511 + $0x100] sm:$0xff] %v4441
        %4545 = vst.msk [vmem:[%s4511 + $0x108] sm:$0xff] %vm717, %v4443
        %4546 = vst [vmem:[%s4511 + $0x110] sm:$0xff] %v4447
        %4547 = vst.msk [vmem:[%s4511 + $0x118] sm:$0xff] %vm717, %v4449
        %4548 = vst [vmem:[%s4511 + $0x120] sm:$0xff] %v4453
        %4549 = vst.msk [vmem:[%s4511 + $0x128] sm:$0xff] %vm717, %v4455
        %4550 = vst [vmem:[%s4511 + $0x130] sm:$0xff] %v4459
        %4551 = vst.msk [vmem:[%s4511 + $0x138] sm:$0xff] %vm717, %v4461
        %4552 = vst [vmem:[%s4511 + $0x140] sm:$0xff] %v4465
        %4553 = vst.msk [vmem:[%s4511 + $0x148] sm:$0xff] %vm717, %v4467
        %4554 = vst [vmem:[%s4511 + $0x150] sm:$0xff] %v4471
        %4555 = vst.msk [vmem:[%s4511 + $0x158] sm:$0xff] %vm717, %v4473
        %4556 = vst [vmem:[%s4511 + $0x160] sm:$0xff] %v4477
        %4557 = vst.msk [vmem:[%s4511 + $0x168] sm:$0xff] %vm717, %v4479
        %4558 = vst [vmem:[%s4511 + $0x170] sm:$0xff] %v4483
        %4559 = vst.msk [vmem:[%s4511 + $0x178] sm:$0xff] %vm717, %v4485
        %4560 = vst [vmem:[%s4511 + $0x180] sm:$0xff] %v4489
        %4561 = vst.msk [vmem:[%s4511 + $0x188] sm:$0xff] %vm717, %v4491
        %4562 = vst [vmem:[%s4511 + $0x190] sm:$0xff] %v4495
        %4563 = vst.msk [vmem:[%s4511 + $0x198] sm:$0xff] %vm717, %v4497
        %4564 = vst [vmem:[%s4511 + $0x1a0] sm:$0xff] %v4501
        %4565 = vst.msk [vmem:[%s4511 + $0x1a8] sm:$0xff] %vm717, %v4503
        %4566 = vst [vmem:[%s4511 + $0x1b0] sm:$0xff] %v4507
        %4567 = vst.msk [vmem:[%s4511 + $0x1b8] sm:$0xff] %vm717, %v4509
        %s4568 = sand.u32 %s379, 1
        %s4569 = scalar_lea.sflag [#allocation3], %s4568
        %s4570 = sand.u32 %s379, 1
        %s4571 = smul.addr %s4570, 1792
        %s4572 = scalar_lea.vmem [#allocation2], %s4571
        // Predicated region
        $region85: #{resnet_seghead_forward.1} parent=83 // pred_check
          %p4573 = pneg %p389
        $region86: #{resnet_seghead_forward.1} parent=83 // pred_check_branch
          %4575 = sbr.rel (%p4573) target = $region88
        $region87: #{resnet_seghead_forward.1} parent=83 // pred_region
          %s4577 = ssub.s32 28672, 28672
          %4578 = vsyncadd %s4569, %s4577
          %s4579 = smul.addr %s30, 224
          %s4580 = smul.addr %s4579, 128
          %s4581 = scalar_lea.hbm %s16, %s4580
          %s4582 = sshll.u32 %s4572, 4
          %s4583 = int_to_ptr.vmem [resolvable:$true] %s4582
          %4588 = dma.vmem_to_hbm [thread:$0]  %s4583, 28672, %s4581, %s4569, 256, 256, 16
        $region88: #{resnet_seghead_forward.1} parent=83 // pred_fallthru
          _
      $region84: #{resnet_seghead_forward.1} parent=5 // pred_fallthru
        _
      %p4589 = scmp.le.s32.totalorder 2, %s25
      // Predicated region
      $region89: #{resnet_seghead_forward.1} parent=5 // pred_check
        %p4590 = pneg %p4589
      $region90: #{resnet_seghead_forward.1} parent=5 // pred_check_branch
        %4592 = sbr.rel (%p4590) target = $region92
      $region91: #{resnet_seghead_forward.1} parent=5 // pred_region
        %s4593 = ssub.s32 %s25, 2
        // Predicated region
        $region93: #{resnet_seghead_forward.1} parent=91 // pred_check
          %p4594 = pneg %p395
        $region94: #{resnet_seghead_forward.1} parent=91 // pred_check_branch
          %4596 = sbr.rel (%p4594) target = $region96
        $region95: #{resnet_seghead_forward.1} parent=91 // pred_region
          %s4597 = sand.u32 %s380, 1
          %s4598 = scalar_lea.sflag [#allocation3], %s4597
          %s4599 = sand.u32 %s380, 1
          %s4600 = smul.addr %s4599, 1792
          %s4601 = scalar_lea.vmem [#allocation2], %s4600
          %4602 = dma.done %s4598, 28672
        $region96: #{resnet_seghead_forward.1} parent=91 // pred_fallthru
          _
      $region92: #{resnet_seghead_forward.1} parent=5 // pred_fallthru
        _
    $region6: #{resnet_seghead_forward.1} parent=1 // loop_footer
      %s29 = sadd.s32 1, %s25
    $region7: #{resnet_seghead_forward.1} parent=1 // loop_footer_branch
      %24 = sbr.rel target = $region3
    $region8: #{resnet_seghead_forward.1} parent=1 // loop_exit
      _
    %4603 = vsyncpa [#allocation3], 1
    %s4604 = scalar_lea.sflag [#allocation3], 1
    %4605 = vsyncpa %s4604, 1

</llo_original>
